<compile_context>
chip_gen: v7x
topology: tpu7x:2x2x1
jax: 0.10.0
libtpu: 0.0.40
codegen_flags: <defaults>
</compile_context>

<pallas_src>
import functools

import jax
import jax.numpy as jnp
from jax import lax
from jax.experimental import pallas as pl
from jax.experimental.pallas import tpu as pltpu


# ---------------------------------------------------------------------------
# Kernel 1: conv1 + ReLU + conv2 + bias + maxpool(2,2) + ReLU
#           (G images per grid step, stride-32 flat spatial grid)
# ---------------------------------------------------------------------------
def _conv_pool_kernel(p_ref, w1_ref, b1_ref, w2_ref, b2p_ref, selA_ref, selB_ref,
                      out_ref, a2_ref, mh_ref, *, G, NR, CH):
    f32 = jnp.float32
    total = G * NR

    # --- conv1(+bias,ReLU) and conv2 as two dense matmuls per row chunk.
    # a1p[r, 96i+32j+c] = ReLU(conv1(x) at flat position r + 32i + j, channel c)
    # so conv2 at row r reads ONLY a1p row r (all 9 taps live in the lane dim).
    def conv_chunk(c, carry):
        r0 = pl.multiple_of(c * CH, CH)
        a1p = jnp.maximum(
            jnp.dot(p_ref[pl.ds(r0, CH), :], w1_ref[...],
                    preferred_element_type=f32) + b1_ref[...], 0.0)
        a2_ref[pl.ds(r0, CH), :] = jnp.dot(a1p, w2_ref[...],
                                           preferred_element_type=f32)
        return carry

    lax.fori_loop(0, total // CH, conv_chunk, 0)

    # --- 2x2/stride-2 max-pool, one image at a time.
    # Step 1: per output row-pair po, the 2x2 window max of a 32-wide slab
    #         (aligned 32-row slices; only 2 of the 4 reads are +1-shifted).
    # Step 2: one 0/1 selection matmul per lane-half picks the stride-2 columns
    #         and the two results are lane-packed into a dense 128-lane row.
    def pool_img(g, carry):
        a2_base = pl.multiple_of(g * NR, 128)

        def slab(po, inner):
            b0 = pl.multiple_of(a2_base + 64 * po, 32)
            s0 = a2_ref[pl.ds(b0, 32), :]
            s1 = a2_ref[pl.ds(b0 + 1, 32), :]
            s2 = a2_ref[pl.ds(b0 + 32, 32), :]
            s3 = a2_ref[pl.ds(b0 + 33, 32), :]
            dst = pl.multiple_of(32 * po, 32)
            mh_ref[pl.ds(dst, 32), :] = jnp.maximum(jnp.maximum(s0, s1),
                                                    jnp.maximum(s2, s3))
            return inner

        lax.fori_loop(0, 12, slab, 0)

        m = mh_ref[...]                                           # (384, 64)
        evn = jnp.dot(selA_ref[...], m, preferred_element_type=f32)   # (72, 64)
        odd = jnp.dot(selB_ref[...], m, preferred_element_type=f32)   # (72, 64)
        packed = jnp.concatenate([evn, odd], axis=1)              # (72, 128)
        dst = pl.multiple_of(g * 72, 8)
        out_ref[pl.ds(dst, 72), :] = jnp.maximum(packed + b2p_ref[...], 0.0)
        return carry

    lax.fori_loop(0, G, pool_img, 0)


def conv_pool_pallas(patches, w1big, b1rep, w2e, b2pack, selA, selB, *, B, G, NR):
    """Fused conv stage.  Returns (B*72, 128): rows=(b, po, qo//2), lanes=(qo%2, c)."""
    CH = 128
    total = G * NR
    assert total % CH == 0 and B % G == 0

    kernel = functools.partial(_conv_pool_kernel, G=G, NR=NR, CH=CH)
    return pl.pallas_call(
        kernel,
        out_shape=jax.ShapeDtypeStruct((B * 72, 128), jnp.float32),
        grid_spec=pltpu.PrefetchScalarGridSpec(
            num_scalar_prefetch=0,
            grid=(B // G,),
            in_specs=[
                pl.BlockSpec((total, 32), lambda s: (s, 0)),      # 5x5-window patches
                pl.BlockSpec(w1big.shape, lambda s: (0, 0)),      # resident weights
                pl.BlockSpec(b1rep.shape, lambda s: (0, 0)),
                pl.BlockSpec(w2e.shape, lambda s: (0, 0)),
                pl.BlockSpec(b2pack.shape, lambda s: (0, 0)),
                pl.BlockSpec(selA.shape, lambda s: (0, 0)),
                pl.BlockSpec(selB.shape, lambda s: (0, 0)),
            ],
            out_specs=pl.BlockSpec((G * 72, 128), lambda s: (s, 0)),
            scratch_shapes=[
                pltpu.VMEM((total, 64), jnp.float32),             # conv2 pre-pool
                pltpu.VMEM((384, 64), jnp.float32),               # per-image slab max
            ],
        ),
        compiler_params=pltpu.CompilerParams(
            dimension_semantics=("parallel",)),
    )(patches, w1big, b1rep, w2e, b2pack, selA, selB)


# ---------------------------------------------------------------------------
# Kernel 2: fc1 + ReLU + fc2, K-chunked fc1 weight (pipelined DMA), fused fc2
# ---------------------------------------------------------------------------
def _fc_fused_kernel(x_ref, w1_ref, b1_ref, w2_ref, b2_ref, o_ref, acc_ref):
    k = pl.program_id(0)

    @pl.when(k == 0)
    def _():
        acc_ref[...] = jnp.zeros_like(acc_ref)

    acc_ref[...] += jnp.dot(x_ref[...], w1_ref[...],
                            preferred_element_type=jnp.float32)

    @pl.when(k == pl.num_programs(0) - 1)
    def _():
        h = jnp.maximum(acc_ref[...] + b1_ref[...], 0.0)
        o_ref[...] = jnp.dot(h, w2_ref[...],
                             preferred_element_type=jnp.float32) + b2_ref[...]


def fc_fused_pallas(xf, w_fc1, b_fc1, w_fc2, b_fc2, *, tk=1152):
    M, K = xf.shape
    N1 = w_fc1.shape[1]
    N2 = w_fc2.shape[1]
    assert K % tk == 0
    return pl.pallas_call(
        _fc_fused_kernel,
        out_shape=jax.ShapeDtypeStruct((M, N2), jnp.float32),
        grid_spec=pltpu.PrefetchScalarGridSpec(
            num_scalar_prefetch=0,
            grid=(K // tk,),
            in_specs=[
                pl.BlockSpec((M, tk), lambda k: (0, k)),
                pl.BlockSpec((tk, N1), lambda k: (k, 0)),
                pl.BlockSpec((1, N1), lambda k: (0, 0)),
                pl.BlockSpec((N1, N2), lambda k: (0, 0)),
                pl.BlockSpec((1, N2), lambda k: (0, 0)),
            ],
            out_specs=pl.BlockSpec((M, N2), lambda k: (0, 0)),
            scratch_shapes=[pltpu.VMEM((M, N1), jnp.float32)],
        ),
        compiler_params=pltpu.CompilerParams(
            dimension_semantics=("arbitrary",)),
    )(xf, w_fc1, b_fc1, w_fc2, b_fc2)


# ---------------------------------------------------------------------------
# Parameters (PyTorch layout) and one-time matmul-form re-layout
# ---------------------------------------------------------------------------
def init_params(num_classes=8):
    key = jax.random.PRNGKey(0)
    ks = jax.random.split(key, 8)
    s = 0.05
    return {
        "conv1_w": jax.random.normal(ks[0], (32, 1, 3, 3), jnp.float32) * s,
        "conv1_b": jax.random.normal(ks[1], (32,), jnp.float32) * s,
        "conv2_w": jax.random.normal(ks[2], (64, 32, 3, 3), jnp.float32) * s,
        "conv2_b": jax.random.normal(ks[3], (64,), jnp.float32) * s,
        "fc1_w": jax.random.normal(ks[4], (128, 9216), jnp.float32) * s * 0.1,
        "fc1_b": jax.random.normal(ks[5], (128,), jnp.float32) * s,
        "fc2_w": jax.random.normal(ks[6], (num_classes, 128), jnp.float32) * s,
        "fc2_b": jax.random.normal(ks[7], (num_classes,), jnp.float32) * s,
    }


def prepare_params(params):
    """One-time re-layout of PyTorch-format weights into the kernels' matmul form."""
    f32 = jnp.float32
    w1 = params["conv1_w"]                                 # (32, 1, 3, 3)
    w2 = params["conv2_w"]                                 # (64, 32, 3, 3)

    # conv1 folded 9 ways: a1p column 96i+32j+c = conv1 output at spatial shift
    # (i, j), channel c; it is produced from the 5x5 input window (patch k=5r+s).
    w1big = jnp.zeros((32, 288), f32)
    for i in range(3):
        for j in range(3):
            for di in range(3):
                for dj in range(3):
                    k = 5 * (i + di) + (j + dj)
                    col = 96 * i + 32 * j
                    w1big = w1big.at[k, col:col + 32].set(w1[:, 0, di, dj])
    b1rep = jnp.tile(params["conv1_b"], 9).reshape(1, 288)

    # conv2 weight in (i, j, c) x d matmul form, matching a1p's column layout.
    w2e = jnp.transpose(w2, (2, 3, 1, 0)).reshape(288, 64)
    b2pack = jnp.concatenate([params["conv2_b"], params["conv2_b"]]).reshape(1, 128)

    # 0/1 stride-2 column selection for the pool (even / odd pooled columns).
    p_idx = jnp.arange(72)
    po, qo2 = p_idx // 6, p_idx % 6
    colA = 32 * po + 4 * qo2
    cols384 = jnp.arange(384)
    selA = (cols384[None, :] == colA[:, None]).astype(f32)
    selB = (cols384[None, :] == (colA + 2)[:, None]).astype(f32)

    # fc1 consumes the kernel's packed (po, qo//2, qo%2, c) layout; permute its
    # input axis once so torch.flatten's (c, po, qo) semantics are preserved.
    poA = jnp.arange(12).reshape(12, 1, 1, 1)
    qoA = jnp.arange(6).reshape(1, 6, 1, 1)
    eA = jnp.arange(2).reshape(1, 1, 2, 1)
    cA = jnp.arange(64).reshape(1, 1, 1, 64)
    perm = (cA * 144 + poA * 12 + 2 * qoA + eA).reshape(-1)     # (9216,)
    w_fc1 = params["fc1_w"][:, perm].T                           # (9216, 128)
    b_fc1 = params["fc1_b"].reshape(1, -1)

    nc = params["fc2_w"].shape[0]
    w_fc2 = jnp.zeros((128, 128), f32).at[:, :nc].set(params["fc2_w"].T)
    b_fc2 = jnp.zeros((1, 128), f32).at[0, :nc].set(params["fc2_b"])

    return {"w1big": w1big, "b1rep": b1rep, "w2e": w2e, "b2pack": b2pack,
            "selA": selA, "selB": selB,
            "w_fc1": w_fc1, "b_fc1": b_fc1, "w_fc2": w_fc2, "b_fc2": b_fc2}


# ---------------------------------------------------------------------------
# Forward pass (matches ClassifierNet(mnist=True).forward)
# ---------------------------------------------------------------------------
def classifier_net_forward(prepared, x_nchw, *, num_classes, imgs_per_step=4):
    B, Cin, H, W = x_nchw.shape
    assert (Cin, H, W) == (1, 28, 28), "MNIST configuration (1x28x28) expected"
    WS = 32                      # padded row stride of the flat spatial grid
    NR = H * WS                  # 896 flat-grid rows per image
    G = min(imgs_per_step, B)
    assert B % G == 0

    # 5x5-window patches on the stride-32 flat grid (zero halo); this single
    # im2col covers conv1 AND all nine conv2 taps at once.
    # TODO(synk): the 5x5-window im2col is still built by XLA in the wrapper;
    # fold it into kernel 1 via shifted VMEM reads if input HBM traffic matters.
    x2 = x_nchw[:, 0]
    xp = jnp.pad(x2, ((0, 0), (0, 4), (0, WS - W + 4)))          # (B, 32, 36)
    cols = [xp[:, i:i + H, j:j + WS] for i in range(5) for j in range(5)]
    patches = jnp.stack(cols, axis=-1).reshape(B * NR, 25)
    patches = jnp.pad(patches, ((0, 0), (0, 7)))                 # K: 25 -> 32

    pooled = conv_pool_pallas(patches, prepared["w1big"], prepared["b1rep"],
                              prepared["w2e"], prepared["b2pack"],
                              prepared["selA"], prepared["selB"],
                              B=B, G=G, NR=NR)                   # (B*72, 128)

    xf = pooled.reshape(B, 72 * 128)                             # (B, 9216)
    Mp = ((B + 7) // 8) * 8                                      # sublane minimum
    if Mp != B:
        xf = jnp.pad(xf, ((0, Mp - B), (0, 0)))
    logits = fc_fused_pallas(xf, prepared["w_fc1"], prepared["b_fc1"],
                             prepared["w_fc2"], prepared["b_fc2"])
    return logits[:B, :num_classes]


def reference_forward(params, x_nchw):
    """Plain-JAX reference of the PyTorch module (for correctness check)."""
    hi = lax.Precision.HIGHEST
    dn = ("NCHW", "OIHW", "NCHW")
    x = lax.conv_general_dilated(x_nchw, params["conv1_w"], (1, 1), "VALID",
                                 dimension_numbers=dn, precision=hi)
    x = jax.nn.relu(x + params["conv1_b"][None, :, None, None])
    x = lax.conv_general_dilated(x, params["conv2_w"], (1, 1), "VALID",
                                 dimension_numbers=dn, precision=hi)
    x = jax.nn.relu(x + params["conv2_b"][None, :, None, None])
    x = lax.reduce_window(x, -jnp.inf, lax.max, (1, 1, 2, 2), (1, 1, 2, 2), "VALID")
    x = x.reshape(x.shape[0], -1)
    x = jax.nn.relu(jnp.dot(x, params["fc1_w"].T, precision=hi) + params["fc1_b"])
    return jnp.dot(x, params["fc2_w"].T, precision=hi) + params["fc2_b"]


if __name__ == "__main__":
    num_classes = 8
    params = init_params(num_classes=num_classes)
    prepared = prepare_params(params)

    # MNIST-shaped input (28x28 required by mid_channels=9216); batch of 8 so
    # kernel 1 runs 2 grid steps of 4 images each ("parallel" -> both v7x TCs).
    x = jax.random.uniform(jax.random.PRNGKey(0), (8, 1, 28, 28), jnp.float32)

    fwd = jax.jit(lambda p, xx: classifier_net_forward(p, xx,
                                                       num_classes=num_classes,
                                                       imgs_per_step=4))
    out = jax.block_until_ready(fwd(prepared, x))

    assert out.shape == (8, num_classes), out.shape
    assert bool(jnp.all(jnp.isfinite(out)))
    ref = reference_forward(params, x)
    assert bool(jnp.allclose(out, ref, atol=5e-3, rtol=5e-3)), (
        float(jnp.max(jnp.abs(out - ref))))
    print("KERNEL_OK")
</pallas_src>

<mosaic_0001>
module attributes {stable_mosaic.version = 11 : i64} {
  func.func @_conv_pool_kernel(%arg0: i32, %arg1: memref<3584x32xf32, #tpu.memory_space<vmem>>, %arg2: memref<32x288xf32, #tpu.memory_space<vmem>>, %arg3: memref<1x288xf32, #tpu.memory_space<vmem>>, %arg4: memref<288x64xf32, #tpu.memory_space<vmem>>, %arg5: memref<1x128xf32, #tpu.memory_space<vmem>>, %arg6: memref<72x384xf32, #tpu.memory_space<vmem>>, %arg7: memref<72x384xf32, #tpu.memory_space<vmem>>, %arg8: memref<288x128xf32, #tpu.memory_space<vmem>>, %arg9: memref<3584x64xf32, #tpu.memory_space<vmem>>, %arg10: memref<384x64xf32, #tpu.memory_space<vmem>>) attributes {dimension_semantics = [#tpu.dimension_semantics<parallel>], iteration_bounds = array<i64: 2>, scalar_prefetch = 0 : i64, scratch_operands = 2 : i64, tpu.core_type = #tpu.core_type<tc>, window_params = [{transform_indices = @transform_0, window_bounds = array<i64: 3584, 32>}, {pipeline_mode = #tpu.pipeline_mode<synchronous>, transform_indices = @transform_1, window_bounds = array<i64: 32, 288>}, {pipeline_mode = #tpu.pipeline_mode<synchronous>, transform_indices = @transform_2, window_bounds = array<i64: 1, 288>}, {pipeline_mode = #tpu.pipeline_mode<synchronous>, transform_indices = @transform_3, window_bounds = array<i64: 288, 64>}, {pipeline_mode = #tpu.pipeline_mode<synchronous>, transform_indices = @transform_4, window_bounds = array<i64: 1, 128>}, {pipeline_mode = #tpu.pipeline_mode<synchronous>, transform_indices = @transform_5, window_bounds = array<i64: 72, 384>}, {pipeline_mode = #tpu.pipeline_mode<synchronous>, transform_indices = @transform_6, window_bounds = array<i64: 72, 384>}, {transform_indices = @transform_7, window_bounds = array<i64: 288, 128>}]} {
    %c0_i32 = arith.constant 0 : i32
    %c28_i32 = arith.constant 28 : i32
    %0 = arith.addi %c0_i32, %c28_i32 : i32
    %c1_i32 = arith.constant 1 : i32
    scf.for %arg11 = %c0_i32 to %0 step %c1_i32  : i32 {
      %c128_i32 = arith.constant 128 : i32
      %2 = arith.muli %arg11, %c128_i32 : i32
      %3 = tpu.assume_multiple %2, 128 : i32
      %4 = arith.index_cast %3 : i32 to index
      %c0 = arith.constant 0 : index
      %5 = vector.load %arg1[%4, %c0] : memref<3584x32xf32, #tpu.memory_space<vmem>>, vector<128x32xf32>
      %c0_4 = arith.constant 0 : index
      %c0_5 = arith.constant 0 : index
      %6 = vector.load %arg2[%c0_4, %c0_5] : memref<32x288xf32, #tpu.memory_space<vmem>>, vector<32x288xf32>
      %cst = arith.constant dense<0.000000e+00> : vector<128x288xf32>
      %7 = tpu.matmul %5, %6, %cst {dimension_numbers = #tpu.dot_dimension_numbers<[1], [0], [0], [1], [0, 0, 1, 1], [], []>} : vector<128x32xf32>, vector<32x288xf32>, vector<128x288xf32> -> vector<128x288xf32>
      %c0_6 = arith.constant 0 : index
      %c0_7 = arith.constant 0 : index
      %8 = vector.load %arg3[%c0_6, %c0_7] : memref<1x288xf32, #tpu.memory_space<vmem>>, vector<1x288xf32>
      %9 = vector.broadcast %8 : vector<1x288xf32> to vector<128x288xf32>
      %10 = arith.addf %7, %9 : vector<128x288xf32>
      %cst_8 = arith.constant 0.000000e+00 : f32
      %11 = vector.broadcast %cst_8 : f32 to vector<128x288xf32>
      %12 = arith.maximumf %10, %11 : vector<128x288xf32>
      %c0_9 = arith.constant 0 : index
      %c0_10 = arith.constant 0 : index
      %13 = vector.load %arg4[%c0_9, %c0_10] : memref<288x64xf32, #tpu.memory_space<vmem>>, vector<288x64xf32>
      %cst_11 = arith.constant dense<0.000000e+00> : vector<128x64xf32>
      %14 = tpu.matmul %12, %13, %cst_11 {dimension_numbers = #tpu.dot_dimension_numbers<[1], [0], [0], [1], [0, 0, 1, 1], [], []>} : vector<128x288xf32>, vector<288x64xf32>, vector<128x64xf32> -> vector<128x64xf32>
      %15 = arith.index_cast %3 : i32 to index
      %c0_12 = arith.constant 0 : index
      %16 = vector.load %arg9[%15, %c0_12] : memref<3584x64xf32, #tpu.memory_space<vmem>>, vector<128x64xf32>
      tpu.vector_store %arg9[%15, %c0_12], %14 {strides = array<i32>} : memref<3584x64xf32, #tpu.memory_space<vmem>>, vector<128x64xf32>,
    }
    %c28_i32_0 = arith.constant 28 : i32
    %c0_i32_1 = arith.constant 0 : i32
    %c4_i32 = arith.constant 4 : i32
    %1 = arith.addi %c0_i32_1, %c4_i32 : i32
    %c1_i32_2 = arith.constant 1 : i32
    scf.for %arg11 = %c0_i32_1 to %1 step %c1_i32_2  : i32 {
      %c896_i32 = arith.constant 896 : i32
      %2 = arith.muli %arg11, %c896_i32 : i32
      %3 = tpu.assume_multiple %2, 128 : i32
      %c0_i32_4 = arith.constant 0 : i32
      %c12_i32 = arith.constant 12 : i32
      %4 = arith.addi %c0_i32_4, %c12_i32 : i32
      %c1_i32_5 = arith.constant 1 : i32
      scf.for %arg12 = %c0_i32_4 to %4 step %c1_i32_5  : i32 {
        %c64_i32 = arith.constant 64 : i32
        %20 = arith.muli %c64_i32, %arg12 : i32
        %21 = arith.addi %3, %20 : i32
        %22 = tpu.assume_multiple %21, 32 : i32
        %23 = arith.index_cast %22 : i32 to index
        %c0_17 = arith.constant 0 : index
        %24 = vector.load %arg9[%23, %c0_17] : memref<3584x64xf32, #tpu.memory_space<vmem>>, vector<32x64xf32>
        %c1_i32_18 = arith.constant 1 : i32
        %25 = arith.addi %22, %c1_i32_18 : i32
        %26 = arith.index_cast %25 : i32 to index
        %c0_19 = arith.constant 0 : index
        %27 = vector.load %arg9[%26, %c0_19] : memref<3584x64xf32, #tpu.memory_space<vmem>>, vector<32x64xf32>
        %c32_i32 = arith.constant 32 : i32
        %28 = arith.addi %22, %c32_i32 : i32
        %29 = arith.index_cast %28 : i32 to index
        %c0_20 = arith.constant 0 : index
        %30 = vector.load %arg9[%29, %c0_20] : memref<3584x64xf32, #tpu.memory_space<vmem>>, vector<32x64xf32>
        %c33_i32 = arith.constant 33 : i32
        %31 = arith.addi %22, %c33_i32 : i32
        %32 = arith.index_cast %31 : i32 to index
        %c0_21 = arith.constant 0 : index
        %33 = vector.load %arg9[%32, %c0_21] : memref<3584x64xf32, #tpu.memory_space<vmem>>, vector<32x64xf32>
        %c32_i32_22 = arith.constant 32 : i32
        %34 = arith.muli %c32_i32_22, %arg12 : i32
        %35 = tpu.assume_multiple %34, 32 : i32
        %36 = arith.maximumf %24, %27 : vector<32x64xf32>
        %37 = arith.maximumf %30, %33 : vector<32x64xf32>
        %38 = arith.maximumf %36, %37 : vector<32x64xf32>
        %39 = arith.index_cast %35 : i32 to index
        %c0_23 = arith.constant 0 : index
        %40 = vector.load %arg10[%39, %c0_23] : memref<384x64xf32, #tpu.memory_space<vmem>>, vector<32x64xf32>
        tpu.vector_store %arg10[%39, %c0_23], %38 {strides = array<i32>} : memref<384x64xf32, #tpu.memory_space<vmem>>, vector<32x64xf32>,
      }
      %c12_i32_6 = arith.constant 12 : i32
      %c0 = arith.constant 0 : index
      %c0_7 = arith.constant 0 : index
      %5 = vector.load %arg10[%c0, %c0_7] : memref<384x64xf32, #tpu.memory_space<vmem>>, vector<384x64xf32>
      %c0_8 = arith.constant 0 : index
      %c0_9 = arith.constant 0 : index
      %6 = vector.load %arg6[%c0_8, %c0_9] : memref<72x384xf32, #tpu.memory_space<vmem>>, vector<72x384xf32>
      %cst = arith.constant dense<0.000000e+00> : vector<72x64xf32>
      %7 = tpu.matmul %6, %5, %cst {dimension_numbers = #tpu.dot_dimension_numbers<[1], [0], [0], [1], [0, 0, 1, 1], [], []>} : vector<72x384xf32>, vector<384x64xf32>, vector<72x64xf32> -> vector<72x64xf32>
      %c0_10 = arith.constant 0 : index
      %c0_11 = arith.constant 0 : index
      %8 = vector.load %arg7[%c0_10, %c0_11] : memref<72x384xf32, #tpu.memory_space<vmem>>, vector<72x384xf32>
      %cst_12 = arith.constant dense<0.000000e+00> : vector<72x64xf32>
      %9 = tpu.matmul %8, %5, %cst_12 {dimension_numbers = #tpu.dot_dimension_numbers<[1], [0], [0], [1], [0, 0, 1, 1], [], []>} : vector<72x384xf32>, vector<384x64xf32>, vector<72x64xf32> -> vector<72x64xf32>
      %10 = tpu.concatenate %7, %9 in 1 : vector<72x64xf32>, vector<72x64xf32> -> vector<72x128xf32>
      %c72_i32 = arith.constant 72 : i32
      %11 = arith.muli %arg11, %c72_i32 : i32
      %12 = tpu.assume_multiple %11, 8 : i32
      %c0_13 = arith.constant 0 : index
      %c0_14 = arith.constant 0 : index
      %13 = vector.load %arg5[%c0_13, %c0_14] : memref<1x128xf32, #tpu.memory_space<vmem>>, vector<1x128xf32>
      %14 = vector.broadcast %13 : vector<1x128xf32> to vector<72x128xf32>
      %15 = arith.addf %10, %14 : vector<72x128xf32>
      %cst_15 = arith.constant 0.000000e+00 : f32
      %16 = vector.broadcast %cst_15 : f32 to vector<72x128xf32>
      %17 = arith.maximumf %15, %16 : vector<72x128xf32>
      %18 = arith.index_cast %12 : i32 to index
      %c0_16 = arith.constant 0 : index
      %19 = vector.load %arg8[%18, %c0_16] : memref<288x128xf32, #tpu.memory_space<vmem>>, vector<72x128xf32>
      tpu.vector_store %arg8[%18, %c0_16], %17 {strides = array<i32>} : memref<288x128xf32, #tpu.memory_space<vmem>>, vector<72x128xf32>,
    }
    %c4_i32_3 = arith.constant 4 : i32
    return
  }
  func.func @transform_0(%arg0: i32) -> (i32, i32) {
    %c0_i32 = arith.constant 0 : i32
    %c0_i32_0 = arith.constant 0 : i32
    return %arg0, %c0_i32 : i32, i32
  }
  func.func @transform_1(%arg0: i32) -> (i32, i32) {
    %c0_i32 = arith.constant 0 : i32
    %c0_i32_0 = arith.constant 0 : i32
    %c0_i32_1 = arith.constant 0 : i32
    return %c0_i32, %c0_i32_0 : i32, i32
  }
  func.func @transform_2(%arg0: i32) -> (i32, i32) {
    %c0_i32 = arith.constant 0 : i32
    %c0_i32_0 = arith.constant 0 : i32
    %c0_i32_1 = arith.constant 0 : i32
    return %c0_i32, %c0_i32_0 : i32, i32
  }
  func.func @transform_3(%arg0: i32) -> (i32, i32) {
    %c0_i32 = arith.constant 0 : i32
    %c0_i32_0 = arith.constant 0 : i32
    %c0_i32_1 = arith.constant 0 : i32
    return %c0_i32, %c0_i32_0 : i32, i32
  }
  func.func @transform_4(%arg0: i32) -> (i32, i32) {
    %c0_i32 = arith.constant 0 : i32
    %c0_i32_0 = arith.constant 0 : i32
    %c0_i32_1 = arith.constant 0 : i32
    return %c0_i32, %c0_i32_0 : i32, i32
  }
  func.func @transform_5(%arg0: i32) -> (i32, i32) {
    %c0_i32 = arith.constant 0 : i32
    %c0_i32_0 = arith.constant 0 : i32
    %c0_i32_1 = arith.constant 0 : i32
    return %c0_i32, %c0_i32_0 : i32, i32
  }
  func.func @transform_6(%arg0: i32) -> (i32, i32) {
    %c0_i32 = arith.constant 0 : i32
    %c0_i32_0 = arith.constant 0 : i32
    %c0_i32_1 = arith.constant 0 : i32
    return %c0_i32, %c0_i32_0 : i32, i32
  }
  func.func @transform_7(%arg0: i32) -> (i32, i32) {
    %c0_i32 = arith.constant 0 : i32
    %c0_i32_0 = arith.constant 0 : i32
    return %arg0, %c0_i32 : i32, i32
  }
}

module attributes {stable_mosaic.version = 11 : i64} {
  func.func @_fc_fused_kernel(%arg0: i32, %arg1: memref<8x1152xf32, #tpu.memory_space<vmem>>, %arg2: memref<1152x128xf32, #tpu.memory_space<vmem>>, %arg3: memref<1x128xf32, #tpu.memory_space<vmem>>, %arg4: memref<128x128xf32, #tpu.memory_space<vmem>>, %arg5: memref<1x128xf32, #tpu.memory_space<vmem>>, %arg6: memref<8x128xf32, #tpu.memory_space<vmem>>, %arg7: memref<8x128xf32, #tpu.memory_space<vmem>>) attributes {dimension_semantics = [#tpu.dimension_semantics<arbitrary>], iteration_bounds = array<i64: 8>, scalar_prefetch = 0 : i64, scratch_operands = 1 : i64, tpu.core_type = #tpu.core_type<tc>, window_params = [{transform_indices = @transform_0, window_bounds = array<i64: 8, 1152>}, {transform_indices = @transform_1, window_bounds = array<i64: 1152, 128>}, {pipeline_mode = #tpu.pipeline_mode<synchronous>, transform_indices = @transform_2, window_bounds = array<i64: 1, 128>}, {pipeline_mode = #tpu.pipeline_mode<synchronous>, transform_indices = @transform_3, window_bounds = array<i64: 128, 128>}, {pipeline_mode = #tpu.pipeline_mode<synchronous>, transform_indices = @transform_4, window_bounds = array<i64: 1, 128>}, {pipeline_mode = #tpu.pipeline_mode<synchronous>, transform_indices = @transform_5, window_bounds = array<i64: 8, 128>}]} {
    %c0_i32 = arith.constant 0 : i32
    %0 = arith.cmpi eq, %arg0, %c0_i32 : i32
    %1 = arith.extui %0 : i1 to i32
    %c0_i32_0 = arith.constant 0 : i32
    %2 = arith.cmpi ne, %1, %c0_i32_0 : i32
    scf.if %2 {
      %cst_9 = arith.constant 0.000000e+00 : f32
      %12 = vector.broadcast %cst_9 : f32 to vector<8x128xf32>
      %c0_10 = arith.constant 0 : index
      %c0_11 = arith.constant 0 : index
      %13 = vector.load %arg7[%c0_10, %c0_11] : memref<8x128xf32, #tpu.memory_space<vmem>>, vector<8x128xf32>
      tpu.vector_store %arg7[%c0_10, %c0_11], %12 {strides = array<i32>} : memref<8x128xf32, #tpu.memory_space<vmem>>, vector<8x128xf32>,
    } else {
    }
    %c0 = arith.constant 0 : index
    %c0_1 = arith.constant 0 : index
    %3 = vector.load %arg7[%c0, %c0_1] : memref<8x128xf32, #tpu.memory_space<vmem>>, vector<8x128xf32>
    %c0_2 = arith.constant 0 : index
    %c0_3 = arith.constant 0 : index
    %4 = vector.load %arg1[%c0_2, %c0_3] : memref<8x1152xf32, #tpu.memory_space<vmem>>, vector<8x1152xf32>
    %c0_4 = arith.constant 0 : index
    %c0_5 = arith.constant 0 : index
    %5 = vector.load %arg2[%c0_4, %c0_5] : memref<1152x128xf32, #tpu.memory_space<vmem>>, vector<1152x128xf32>
    %cst = arith.constant dense<0.000000e+00> : vector<8x128xf32>
    %6 = tpu.matmul %4, %5, %cst {dimension_numbers = #tpu.dot_dimension_numbers<[1], [0], [0], [1], [0, 0, 1, 1], [], []>} : vector<8x1152xf32>, vector<1152x128xf32>, vector<8x128xf32> -> vector<8x128xf32>
    %7 = arith.addf %3, %6 : vector<8x128xf32>
    %c0_6 = arith.constant 0 : index
    %c0_7 = arith.constant 0 : index
    %8 = vector.load %arg7[%c0_6, %c0_7] : memref<8x128xf32, #tpu.memory_space<vmem>>, vector<8x128xf32>
    tpu.vector_store %arg7[%c0_6, %c0_7], %7 {strides = array<i32>} : memref<8x128xf32, #tpu.memory_space<vmem>>, vector<8x128xf32>,
    %c7_i32 = arith.constant 7 : i32
    %9 = arith.cmpi eq, %arg0, %c7_i32 : i32
    %10 = arith.extui %9 : i1 to i32
    %c0_i32_8 = arith.constant 0 : i32
    %11 = arith.cmpi ne, %10, %c0_i32_8 : i32
    scf.if %11 {
      %c0_9 = arith.constant 0 : index
      %c0_10 = arith.constant 0 : index
      %12 = vector.load %arg7[%c0_9, %c0_10] : memref<8x128xf32, #tpu.memory_space<vmem>>, vector<8x128xf32>
      %c0_11 = arith.constant 0 : index
      %c0_12 = arith.constant 0 : index
      %13 = vector.load %arg3[%c0_11, %c0_12] : memref<1x128xf32, #tpu.memory_space<vmem>>, vector<1x128xf32>
      %14 = vector.broadcast %13 : vector<1x128xf32> to vector<8x128xf32>
      %15 = arith.addf %12, %14 : vector<8x128xf32>
      %cst_13 = arith.constant 0.000000e+00 : f32
      %16 = vector.broadcast %cst_13 : f32 to vector<8x128xf32>
      %17 = arith.maximumf %15, %16 : vector<8x128xf32>
      %c0_14 = arith.constant 0 : index
      %c0_15 = arith.constant 0 : index
      %18 = vector.load %arg4[%c0_14, %c0_15] : memref<128x128xf32, #tpu.memory_space<vmem>>, vector<128x128xf32>
      %cst_16 = arith.constant dense<0.000000e+00> : vector<8x128xf32>
      %19 = tpu.matmul %17, %18, %cst_16 {dimension_numbers = #tpu.dot_dimension_numbers<[1], [0], [0], [1], [0, 0, 1, 1], [], []>} : vector<8x128xf32>, vector<128x128xf32>, vector<8x128xf32> -> vector<8x128xf32>
      %c0_17 = arith.constant 0 : index
      %c0_18 = arith.constant 0 : index
      %20 = vector.load %arg5[%c0_17, %c0_18] : memref<1x128xf32, #tpu.memory_space<vmem>>, vector<1x128xf32>
      %21 = vector.broadcast %20 : vector<1x128xf32> to vector<8x128xf32>
      %22 = arith.addf %19, %21 : vector<8x128xf32>
      %c0_19 = arith.constant 0 : index
      %c0_20 = arith.constant 0 : index
      %23 = vector.load %arg6[%c0_19, %c0_20] : memref<8x128xf32, #tpu.memory_space<vmem>>, vector<8x128xf32>
      tpu.vector_store %arg6[%c0_19, %c0_20], %22 {strides = array<i32>} : memref<8x128xf32, #tpu.memory_space<vmem>>, vector<8x128xf32>,
    } else {
    }
    return
  }
  func.func @transform_0(%arg0: i32) -> (i32, i32) {
    %c0_i32 = arith.constant 0 : i32
    %c0_i32_0 = arith.constant 0 : i32
    return %c0_i32, %arg0 : i32, i32
  }
  func.func @transform_1(%arg0: i32) -> (i32, i32) {
    %c0_i32 = arith.constant 0 : i32
    %c0_i32_0 = arith.constant 0 : i32
    return %arg0, %c0_i32 : i32, i32
  }
  func.func @transform_2(%arg0: i32) -> (i32, i32) {
    %c0_i32 = arith.constant 0 : i32
    %c0_i32_0 = arith.constant 0 : i32
    %c0_i32_1 = arith.constant 0 : i32
    return %c0_i32, %c0_i32_0 : i32, i32
  }
  func.func @transform_3(%arg0: i32) -> (i32, i32) {
    %c0_i32 = arith.constant 0 : i32
    %c0_i32_0 = arith.constant 0 : i32
    %c0_i32_1 = arith.constant 0 : i32
    return %c0_i32, %c0_i32_0 : i32, i32
  }
  func.func @transform_4(%arg0: i32) -> (i32, i32) {
    %c0_i32 = arith.constant 0 : i32
    %c0_i32_0 = arith.constant 0 : i32
    %c0_i32_1 = arith.constant 0 : i32
    return %c0_i32, %c0_i32_0 : i32, i32
  }
  func.func @transform_5(%arg0: i32) -> (i32, i32) {
    %c0_i32 = arith.constant 0 : i32
    %c0_i32_0 = arith.constant 0 : i32
    %c0_i32_1 = arith.constant 0 : i32
    return %c0_i32, %c0_i32_0 : i32, i32
  }
}

</mosaic_0001>

<llo_original>
// kernel: _lambda_.3
$region0: #{_lambda_.3}
  #allocation0 [shape = 'u32[]', space=smem, size = 0x4, offset = 0x4, fixed_abs, tag = 'smem constant byte address 0x4 - core index']
  #allocation1 [shape = 'u32[144,128]{1,0:T(1,128)}', space=vmem, size = 0x12000, scoped, tag = 'internal scratch']
  #allocation2 [shape = 'f32[8,128]{1,0:T(8,128)}', space=vmem, size = 0x1000, scoped, tag = 'scratch operand']
  %s0 = inlined_call_operand.vmem [shape: f32[8,9216], index: 0, kind: input, shape index: {}]
  %s1 = inlined_call_operand.vmem [shape: f32[9216,128], index: 1, kind: input, shape index: {}]
  %s2 = inlined_call_operand.vmem [shape: f32[1,128], index: 2, kind: input, shape index: {}]
  %s3 = inlined_call_operand.vmem [shape: f32[128,128], index: 3, kind: input, shape index: {}]
  %s4 = inlined_call_operand.vmem [shape: f32[1,128], index: 4, kind: input, shape index: {}]
  %s5 = inlined_call_operand.hbm [shape: f32[8,128], index: 5, kind: output, shape index: {}]
  %s6 = sld [smem:[#allocation0]]
  $region61: #{_lambda_.3} parent=0
    _
  %s8 = ssub.s32 1, %s6
  %s9 = scalar_select 0, %s8, %s6
  $region1: #{_lambda_.3} parent=0
    #allocation3 [shape = 'u8[4096]{0}', space=vmem, size = 0x1000, scoped, tag = 'output window, operand 0, single buffered']
    #allocation4 [shape = 's32[2]{0}', space=sflag, size = 0x8, scoped, tag = 'scoped memory for _lambda_.3']
    %10 = vsyncpa [#allocation4], 0
    loop: start=0, step=1, limit=10
    $region2: #{_lambda_.3} parent=1 // loop_pre_header
      _
    $region3: #{_lambda_.3} parent=1 // loop_header
      %s12 = sphi 0, %s16
      %p13 = scmp.ge.s32.totalorder %s12, 10
      %s22 = sphi 0, %s24
      %s25 = sphi 0, %s22
      %s26 = sphi 0, %s25
      %s42 = sphi 0, %s26
      %s48 = sphi 0, %s50
      %s51 = sphi 0, %s48
      %s52 = sphi 0, %s51
      %s68 = sphi 0, %s52
      %s72 = sphi 0, %s72
      %s74 = sphi 0, %s72
      %s75 = sphi 0, %s74
      %s89 = sphi 0, %s75
      %s93 = sphi 0, %s93
      %s95 = sphi 0, %s93
      %s96 = sphi 0, %s95
      %s110 = sphi 0, %s96
      %s114 = sphi 0, %s114
      %s116 = sphi 0, %s114
      %s117 = sphi 0, %s116
      %s131 = sphi 0, %s117
      %s135 = sphi 0, %s135
      %s137 = sphi 0, %s135
      %s138 = sphi 0, %s137
      %s152 = sphi 0, %s138
    $region4: #{_lambda_.3} parent=1 // loop_header_branch
      %15 = sbr.rel (%p13) target = $region8
    $region5: #{_lambda_.3} parent=1 // loop_body
      %s17 = ssub.s32 %s12, 1
      %s18 = ssub.s32 %s12, 2
      %s19 = sadd.s32 %s12, 1
      %s20 = ssub.s32 %s12, %s19
      %p21 = scmp.eq.s32.totalorder %s20, 0
      %s23 = sadd.s32 %s22, 1
      %s24 = scalar_select %p21, %s22, %s23
      %p27 = pneg %p21
      %p28 = scmp.eq.s32.totalorder %s12, 7
      %p29 = por %p27, %p28
      %p30 = scmp.ne.s32.totalorder %s22, %s25
      %p31 = scmp.eq.s32.totalorder %s12, 0
      %p32 = por %p30, %p31
      %p33 = scmp.ne.s32.totalorder %s22, %s25
      %p34 = scmp.eq.s32.totalorder %s17, 7
      %p35 = por %p33, %p34
      %p36 = scmp.ne.s32.totalorder %s25, %s26
      %p37 = scmp.eq.s32.totalorder %s17, 0
      %p38 = por %p36, %p37
      %p39 = scmp.ne.s32.totalorder %s25, %s26
      %p40 = scmp.eq.s32.totalorder %s18, 7
      %p41 = por %p39, %p40
      %p43 = scmp.ne.s32.totalorder %s26, %s42
      %p44 = scmp.eq.s32.totalorder %s18, 0
      %p45 = por %p43, %p44
      %s46 = ssub.s32 %s12, %s19
      %p47 = scmp.eq.s32.totalorder %s46, 0
      %s49 = sadd.s32 %s48, 1
      %s50 = scalar_select %p47, %s48, %s49
      %p53 = pneg %p47
      %p54 = scmp.eq.s32.totalorder %s12, 7
      %p55 = por %p53, %p54
      %p56 = scmp.ne.s32.totalorder %s48, %s51
      %p57 = scmp.eq.s32.totalorder %s12, 0
      %p58 = por %p56, %p57
      %p59 = scmp.ne.s32.totalorder %s48, %s51
      %p60 = scmp.eq.s32.totalorder %s17, 7
      %p61 = por %p59, %p60
      %p62 = scmp.ne.s32.totalorder %s51, %s52
      %p63 = scmp.eq.s32.totalorder %s17, 0
      %p64 = por %p62, %p63
      %p65 = scmp.ne.s32.totalorder %s51, %s52
      %p66 = scmp.eq.s32.totalorder %s18, 7
      %p67 = por %p65, %p66
      %p69 = scmp.ne.s32.totalorder %s52, %s68
      %p70 = scmp.eq.s32.totalorder %s18, 0
      %p71 = por %p69, %p70
      %s73 = sadd.s32 %s72, 1
      %p76 = scmp.eq.s32.totalorder %s12, 7
      %p77 = scmp.ne.s32.totalorder %s72, %s74
      %p78 = scmp.eq.s32.totalorder %s12, 0
      %p79 = por %p77, %p78
      %p80 = scmp.ne.s32.totalorder %s72, %s74
      %p81 = scmp.eq.s32.totalorder %s17, 7
      %p82 = por %p80, %p81
      %p83 = scmp.ne.s32.totalorder %s74, %s75
      %p84 = scmp.eq.s32.totalorder %s17, 0
      %p85 = por %p83, %p84
      %p86 = scmp.ne.s32.totalorder %s74, %s75
      %p87 = scmp.eq.s32.totalorder %s18, 7
      %p88 = por %p86, %p87
      %p90 = scmp.ne.s32.totalorder %s75, %s89
      %p91 = scmp.eq.s32.totalorder %s18, 0
      %p92 = por %p90, %p91
      %s94 = sadd.s32 %s93, 1
      %p97 = scmp.eq.s32.totalorder %s12, 7
      %p98 = scmp.ne.s32.totalorder %s93, %s95
      %p99 = scmp.eq.s32.totalorder %s12, 0
      %p100 = por %p98, %p99
      %p101 = scmp.ne.s32.totalorder %s93, %s95
      %p102 = scmp.eq.s32.totalorder %s17, 7
      %p103 = por %p101, %p102
      %p104 = scmp.ne.s32.totalorder %s95, %s96
      %p105 = scmp.eq.s32.totalorder %s17, 0
      %p106 = por %p104, %p105
      %p107 = scmp.ne.s32.totalorder %s95, %s96
      %p108 = scmp.eq.s32.totalorder %s18, 7
      %p109 = por %p107, %p108
      %p111 = scmp.ne.s32.totalorder %s96, %s110
      %p112 = scmp.eq.s32.totalorder %s18, 0
      %p113 = por %p111, %p112
      %s115 = sadd.s32 %s114, 1
      %p118 = scmp.eq.s32.totalorder %s12, 7
      %p119 = scmp.ne.s32.totalorder %s114, %s116
      %p120 = scmp.eq.s32.totalorder %s12, 0
      %p121 = por %p119, %p120
      %p122 = scmp.ne.s32.totalorder %s114, %s116
      %p123 = scmp.eq.s32.totalorder %s17, 7
      %p124 = por %p122, %p123
      %p125 = scmp.ne.s32.totalorder %s116, %s117
      %p126 = scmp.eq.s32.totalorder %s17, 0
      %p127 = por %p125, %p126
      %p128 = scmp.ne.s32.totalorder %s116, %s117
      %p129 = scmp.eq.s32.totalorder %s18, 7
      %p130 = por %p128, %p129
      %p132 = scmp.ne.s32.totalorder %s117, %s131
      %p133 = scmp.eq.s32.totalorder %s18, 0
      %p134 = por %p132, %p133
      %s136 = sadd.s32 %s135, 1
      %p139 = scmp.eq.s32.totalorder %s12, 7
      %p140 = scmp.ne.s32.totalorder %s135, %s137
      %p141 = scmp.eq.s32.totalorder %s12, 0
      %p142 = por %p140, %p141
      %p143 = scmp.ne.s32.totalorder %s135, %s137
      %p144 = scmp.eq.s32.totalorder %s17, 7
      %p145 = por %p143, %p144
      %p146 = scmp.ne.s32.totalorder %s137, %s138
      %p147 = scmp.eq.s32.totalorder %s17, 0
      %p148 = por %p146, %p147
      %p149 = scmp.ne.s32.totalorder %s137, %s138
      %p150 = scmp.eq.s32.totalorder %s18, 7
      %p151 = por %p149, %p150
      %p153 = scmp.ne.s32.totalorder %s138, %s152
      %p154 = scmp.eq.s32.totalorder %s18, 0
      %p155 = por %p153, %p154
      %p156 = scmp.le.s32.totalorder 1, %s12
      %p157 = scmp.lt.s32.totalorder %s12, 9
      %p158 = pnand %p156, %p157
      %p159 = pneg %p158
      // Predicated region
      $region9: #{_lambda_.3} parent=5 // pred_check
        _
      $region10: #{_lambda_.3} parent=5 // pred_check_branch
        %161 = sbr.rel (%p158) target = $region12
      $region11: #{_lambda_.3} parent=5 // pred_region
        %s162 = ssub.s32 %s12, 1
        // Predicated region
        $region13: #{_lambda_.3} parent=11 // pred_check
          %p163 = pneg %p85
        $region14: #{_lambda_.3} parent=11 // pred_check_branch
          %165 = sbr.rel (%p163) target = $region16
        $region15: #{_lambda_.3} parent=11 // pred_region
          _
        $region16: #{_lambda_.3} parent=11 // pred_fallthru
          _
        // Predicated region
        $region17: #{_lambda_.3} parent=11 // pred_check
          %p166 = pneg %p106
        $region18: #{_lambda_.3} parent=11 // pred_check_branch
          %168 = sbr.rel (%p166) target = $region20
        $region19: #{_lambda_.3} parent=11 // pred_region
          _
        $region20: #{_lambda_.3} parent=11 // pred_fallthru
          _
        // Predicated region
        $region21: #{_lambda_.3} parent=11 // pred_check
          %p169 = pneg %p127
        $region22: #{_lambda_.3} parent=11 // pred_check_branch
          %171 = sbr.rel (%p169) target = $region24
        $region23: #{_lambda_.3} parent=11 // pred_region
          _
        $region24: #{_lambda_.3} parent=11 // pred_fallthru
          _
      $region12: #{_lambda_.3} parent=5 // pred_fallthru
        _
      %p172 = scmp.lt.s32.totalorder %s12, 8
      // Predicated region
      $region25: #{_lambda_.3} parent=5 // pred_check
        %p173 = pneg %p172
      $region26: #{_lambda_.3} parent=5 // pred_check_branch
        %175 = sbr.rel (%p173) target = $region28
      $region27: #{_lambda_.3} parent=5 // pred_region
        // Predicated region
        $region29: #{_lambda_.3} parent=27 // pred_check
          %p176 = pneg %p32
        $region30: #{_lambda_.3} parent=27 // pred_check_branch
          %178 = sbr.rel (%p176) target = $region32
        $region31: #{_lambda_.3} parent=27 // pred_region
          %s179 = smul.u32 9, %s12
          %p180 = scmp.lt.s32.totalorder %s179, 71
          %s181 = scalar_select %p180, %s179, 71
          %s182 = smul.addr %s181, 8
          %s183 = scalar_lea.vmem %s0, %s182
          %s184 = smul.u32 9, %s12
        $region32: #{_lambda_.3} parent=27 // pred_fallthru
          _
        // Predicated region
        $region33: #{_lambda_.3} parent=27 // pred_check
          %p185 = pneg %p58
        $region34: #{_lambda_.3} parent=27 // pred_check_branch
          %187 = sbr.rel (%p185) target = $region36
        $region35: #{_lambda_.3} parent=27 // pred_region
          %s188 = smul.u32 144, %s12
          %p189 = scmp.lt.s32.totalorder %s188, 1151
          %s190 = scalar_select %p189, %s188, 1151
          %s191 = smul.addr %s190, 8
          %s192 = scalar_lea.vmem %s1, %s191
          %s193 = smul.u32 144, %s12
        $region36: #{_lambda_.3} parent=27 // pred_fallthru
          _
      $region28: #{_lambda_.3} parent=5 // pred_fallthru
        _
      %p194 = scmp.le.s32.totalorder 1, %s12
      %p195 = scmp.lt.s32.totalorder %s12, 9
      %p196 = pnand %p194, %p195
      %p197 = pneg %p196
      // Predicated region
      $region37: #{_lambda_.3} parent=5 // pred_check
        _
      $region38: #{_lambda_.3} parent=5 // pred_check_branch
        %199 = sbr.rel (%p196) target = $region40
      $region39: #{_lambda_.3} parent=5 // pred_region
        %s200 = ssub.s32 %s12, 1
        %s201 = smul.u32 9, %s17
        %p202 = scmp.lt.s32.totalorder %s201, 71
        %s203 = scalar_select %p202, %s201, 71
        %s204 = smul.addr %s203, 8
        %s205 = scalar_lea.vmem %s0, %s204
        %p206 = pneg %p38
        %p207 = pneg %p35
        %s208 = smul.u32 144, %s17
        %p209 = scmp.lt.s32.totalorder %s208, 1151
        %s210 = scalar_select %p209, %s208, 1151
        %s211 = smul.addr %s210, 8
        %s212 = scalar_lea.vmem %s1, %s211
        %p213 = pneg %p64
        %p214 = pneg %p61
        %p215 = pneg %p85
        %p216 = pneg %p82
        %p217 = pneg %p106
        %p218 = pneg %p103
        %p219 = pneg %p127
        %p220 = pneg %p124
        %p221 = pneg %p148
        %p222 = pneg %p145
        %s223 = smul.u32 9, %s17
        %p224 = scmp.lt.s32.totalorder %s223, 71
        %s225 = scalar_select %p224, %s223, 71
        %s226 = smul.addr %s225, 8
        %s227 = scalar_lea.vmem %s0, %s226
        %s228 = smul.u32 9, %s17
        %s229 = smul.u32 144, %s17
        %p230 = scmp.lt.s32.totalorder %s229, 1151
        %s231 = scalar_select %p230, %s229, 1151
        %s232 = smul.addr %s231, 8
        %s233 = scalar_lea.vmem %s1, %s232
        %s234 = smul.u32 144, %s17
        %p235 = scmp.eq.s32.totalorder %s17, 0
        // Predicated region
        $region41: #{_lambda_.3} parent=39 // pred_check
          %p236 = pneg %p235
        $region42: #{_lambda_.3} parent=39 // pred_check_branch
          %238 = sbr.rel (%p236) target = $region44
        $region43: #{_lambda_.3} parent=39 // pred_region
          %239 = vst [vmem:[#allocation2] sm:$0xff] 0.0
        $region44: #{_lambda_.3} parent=39 // pred_fallthru
          _
        %v240 = vld [vmem:[#allocation2] sm:$0xff]
        %v241 = vld [vmem:[%s227] sm:$0xff]
        %v242 = vld [vmem:[%s227 + $0x8] sm:$0xff]
        %v243 = vld [vmem:[%s227 + $0x10] sm:$0xff]
        %v244 = vld [vmem:[%s227 + $0x18] sm:$0xff]
        %v245 = vld [vmem:[%s227 + $0x20] sm:$0xff]
        %v246 = vld [vmem:[%s227 + $0x28] sm:$0xff]
        %v247 = vld [vmem:[%s227 + $0x30] sm:$0xff]
        %v248 = vld [vmem:[%s227 + $0x38] sm:$0xff]
        %v249 = vld [vmem:[%s227 + $0x40] sm:$0xff]
        %v250 = vld [vmem:[%s233] sm:$0xff]
        %v251 = vld [vmem:[%s233 + $0x8] sm:$0xff]
        %v252 = vld [vmem:[%s233 + $0x10] sm:$0xff]
        %v253 = vld [vmem:[%s233 + $0x18] sm:$0xff]
        %v254 = vld [vmem:[%s233 + $0x20] sm:$0xff]
        %v255 = vld [vmem:[%s233 + $0x28] sm:$0xff]
        %v256 = vld [vmem:[%s233 + $0x30] sm:$0xff]
        %v257 = vld [vmem:[%s233 + $0x38] sm:$0xff]
        %v258 = vld [vmem:[%s233 + $0x40] sm:$0xff]
        %v259 = vld [vmem:[%s233 + $0x48] sm:$0xff]
        %v260 = vld [vmem:[%s233 + $0x50] sm:$0xff]
        %v261 = vld [vmem:[%s233 + $0x58] sm:$0xff]
        %v262 = vld [vmem:[%s233 + $0x60] sm:$0xff]
        %v263 = vld [vmem:[%s233 + $0x68] sm:$0xff]
        %v264 = vld [vmem:[%s233 + $0x70] sm:$0xff]
        %v265 = vld [vmem:[%s233 + $0x78] sm:$0xff]
        %v266 = vld [vmem:[%s233 + $0x80] sm:$0xff]
        %v267 = vld [vmem:[%s233 + $0x88] sm:$0xff]
        %v268 = vld [vmem:[%s233 + $0x90] sm:$0xff]
        %v269 = vld [vmem:[%s233 + $0x98] sm:$0xff]
        %v270 = vld [vmem:[%s233 + $0xa0] sm:$0xff]
        %v271 = vld [vmem:[%s233 + $0xa8] sm:$0xff]
        %v272 = vld [vmem:[%s233 + $0xb0] sm:$0xff]
        %v273 = vld [vmem:[%s233 + $0xb8] sm:$0xff]
        %v274 = vld [vmem:[%s233 + $0xc0] sm:$0xff]
        %v275 = vld [vmem:[%s233 + $0xc8] sm:$0xff]
        %v276 = vld [vmem:[%s233 + $0xd0] sm:$0xff]
        %v277 = vld [vmem:[%s233 + $0xd8] sm:$0xff]
        %v278 = vld [vmem:[%s233 + $0xe0] sm:$0xff]
        %v279 = vld [vmem:[%s233 + $0xe8] sm:$0xff]
        %v280 = vld [vmem:[%s233 + $0xf0] sm:$0xff]
        %v281 = vld [vmem:[%s233 + $0xf8] sm:$0xff]
        %v282 = vld [vmem:[%s233 + $0x100] sm:$0xff]
        %v283 = vld [vmem:[%s233 + $0x108] sm:$0xff]
        %v284 = vld [vmem:[%s233 + $0x110] sm:$0xff]
        %v285 = vld [vmem:[%s233 + $0x118] sm:$0xff]
        %v286 = vld [vmem:[%s233 + $0x120] sm:$0xff]
        %v287 = vld [vmem:[%s233 + $0x128] sm:$0xff]
        %v288 = vld [vmem:[%s233 + $0x130] sm:$0xff]
        %v289 = vld [vmem:[%s233 + $0x138] sm:$0xff]
        %v290 = vld [vmem:[%s233 + $0x140] sm:$0xff]
        %v291 = vld [vmem:[%s233 + $0x148] sm:$0xff]
        %v292 = vld [vmem:[%s233 + $0x150] sm:$0xff]
        %v293 = vld [vmem:[%s233 + $0x158] sm:$0xff]
        %v294 = vld [vmem:[%s233 + $0x160] sm:$0xff]
        %v295 = vld [vmem:[%s233 + $0x168] sm:$0xff]
        %v296 = vld [vmem:[%s233 + $0x170] sm:$0xff]
        %v297 = vld [vmem:[%s233 + $0x178] sm:$0xff]
        %v298 = vld [vmem:[%s233 + $0x180] sm:$0xff]
        %v299 = vld [vmem:[%s233 + $0x188] sm:$0xff]
        %v300 = vld [vmem:[%s233 + $0x190] sm:$0xff]
        %v301 = vld [vmem:[%s233 + $0x198] sm:$0xff]
        %v302 = vld [vmem:[%s233 + $0x1a0] sm:$0xff]
        %v303 = vld [vmem:[%s233 + $0x1a8] sm:$0xff]
        %v304 = vld [vmem:[%s233 + $0x1b0] sm:$0xff]
        %v305 = vld [vmem:[%s233 + $0x1b8] sm:$0xff]
        %v306 = vld [vmem:[%s233 + $0x1c0] sm:$0xff]
        %v307 = vld [vmem:[%s233 + $0x1c8] sm:$0xff]
        %v308 = vld [vmem:[%s233 + $0x1d0] sm:$0xff]
        %v309 = vld [vmem:[%s233 + $0x1d8] sm:$0xff]
        %v310 = vld [vmem:[%s233 + $0x1e0] sm:$0xff]
        %v311 = vld [vmem:[%s233 + $0x1e8] sm:$0xff]
        %v312 = vld [vmem:[%s233 + $0x1f0] sm:$0xff]
        %v313 = vld [vmem:[%s233 + $0x1f8] sm:$0xff]
        %v314 = vld [vmem:[%s233 + $0x200] sm:$0xff]
        %v315 = vld [vmem:[%s233 + $0x208] sm:$0xff]
        %v316 = vld [vmem:[%s233 + $0x210] sm:$0xff]
        %v317 = vld [vmem:[%s233 + $0x218] sm:$0xff]
        %v318 = vld [vmem:[%s233 + $0x220] sm:$0xff]
        %v319 = vld [vmem:[%s233 + $0x228] sm:$0xff]
        %v320 = vld [vmem:[%s233 + $0x230] sm:$0xff]
        %v321 = vld [vmem:[%s233 + $0x238] sm:$0xff]
        %v322 = vld [vmem:[%s233 + $0x240] sm:$0xff]
        %v323 = vld [vmem:[%s233 + $0x248] sm:$0xff]
        %v324 = vld [vmem:[%s233 + $0x250] sm:$0xff]
        %v325 = vld [vmem:[%s233 + $0x258] sm:$0xff]
        %v326 = vld [vmem:[%s233 + $0x260] sm:$0xff]
        %v327 = vld [vmem:[%s233 + $0x268] sm:$0xff]
        %v328 = vld [vmem:[%s233 + $0x270] sm:$0xff]
        %v329 = vld [vmem:[%s233 + $0x278] sm:$0xff]
        %v330 = vld [vmem:[%s233 + $0x280] sm:$0xff]
        %v331 = vld [vmem:[%s233 + $0x288] sm:$0xff]
        %v332 = vld [vmem:[%s233 + $0x290] sm:$0xff]
        %v333 = vld [vmem:[%s233 + $0x298] sm:$0xff]
        %v334 = vld [vmem:[%s233 + $0x2a0] sm:$0xff]
        %v335 = vld [vmem:[%s233 + $0x2a8] sm:$0xff]
        %v336 = vld [vmem:[%s233 + $0x2b0] sm:$0xff]
        %v337 = vld [vmem:[%s233 + $0x2b8] sm:$0xff]
        %v338 = vld [vmem:[%s233 + $0x2c0] sm:$0xff]
        %v339 = vld [vmem:[%s233 + $0x2c8] sm:$0xff]
        %v340 = vld [vmem:[%s233 + $0x2d0] sm:$0xff]
        %v341 = vld [vmem:[%s233 + $0x2d8] sm:$0xff]
        %v342 = vld [vmem:[%s233 + $0x2e0] sm:$0xff]
        %v343 = vld [vmem:[%s233 + $0x2e8] sm:$0xff]
        %v344 = vld [vmem:[%s233 + $0x2f0] sm:$0xff]
        %v345 = vld [vmem:[%s233 + $0x2f8] sm:$0xff]
        %v346 = vld [vmem:[%s233 + $0x300] sm:$0xff]
        %v347 = vld [vmem:[%s233 + $0x308] sm:$0xff]
        %v348 = vld [vmem:[%s233 + $0x310] sm:$0xff]
        %v349 = vld [vmem:[%s233 + $0x318] sm:$0xff]
        %v350 = vld [vmem:[%s233 + $0x320] sm:$0xff]
        %v351 = vld [vmem:[%s233 + $0x328] sm:$0xff]
        %v352 = vld [vmem:[%s233 + $0x330] sm:$0xff]
        %v353 = vld [vmem:[%s233 + $0x338] sm:$0xff]
        %v354 = vld [vmem:[%s233 + $0x340] sm:$0xff]
        %v355 = vld [vmem:[%s233 + $0x348] sm:$0xff]
        %v356 = vld [vmem:[%s233 + $0x350] sm:$0xff]
        %v357 = vld [vmem:[%s233 + $0x358] sm:$0xff]
        %v358 = vld [vmem:[%s233 + $0x360] sm:$0xff]
        %v359 = vld [vmem:[%s233 + $0x368] sm:$0xff]
        %v360 = vld [vmem:[%s233 + $0x370] sm:$0xff]
        %v361 = vld [vmem:[%s233 + $0x378] sm:$0xff]
        %v362 = vld [vmem:[%s233 + $0x380] sm:$0xff]
        %v363 = vld [vmem:[%s233 + $0x388] sm:$0xff]
        %v364 = vld [vmem:[%s233 + $0x390] sm:$0xff]
        %v365 = vld [vmem:[%s233 + $0x398] sm:$0xff]
        %v366 = vld [vmem:[%s233 + $0x3a0] sm:$0xff]
        %v367 = vld [vmem:[%s233 + $0x3a8] sm:$0xff]
        %v368 = vld [vmem:[%s233 + $0x3b0] sm:$0xff]
        %v369 = vld [vmem:[%s233 + $0x3b8] sm:$0xff]
        %v370 = vld [vmem:[%s233 + $0x3c0] sm:$0xff]
        %v371 = vld [vmem:[%s233 + $0x3c8] sm:$0xff]
        %v372 = vld [vmem:[%s233 + $0x3d0] sm:$0xff]
        %v373 = vld [vmem:[%s233 + $0x3d8] sm:$0xff]
        %v374 = vld [vmem:[%s233 + $0x3e0] sm:$0xff]
        %v375 = vld [vmem:[%s233 + $0x3e8] sm:$0xff]
        %v376 = vld [vmem:[%s233 + $0x3f0] sm:$0xff]
        %v377 = vld [vmem:[%s233 + $0x3f8] sm:$0xff]
        %v378 = vld [vmem:[%s233 + $0x400] sm:$0xff]
        %v379 = vld [vmem:[%s233 + $0x408] sm:$0xff]
        %v380 = vld [vmem:[%s233 + $0x410] sm:$0xff]
        %v381 = vld [vmem:[%s233 + $0x418] sm:$0xff]
        %v382 = vld [vmem:[%s233 + $0x420] sm:$0xff]
        %v383 = vld [vmem:[%s233 + $0x428] sm:$0xff]
        %v384 = vld [vmem:[%s233 + $0x430] sm:$0xff]
        %v385 = vld [vmem:[%s233 + $0x438] sm:$0xff]
        %v386 = vld [vmem:[%s233 + $0x440] sm:$0xff]
        %v387 = vld [vmem:[%s233 + $0x448] sm:$0xff]
        %v388 = vld [vmem:[%s233 + $0x450] sm:$0xff]
        %v389 = vld [vmem:[%s233 + $0x458] sm:$0xff]
        %v390 = vld [vmem:[%s233 + $0x460] sm:$0xff]
        %v391 = vld [vmem:[%s233 + $0x468] sm:$0xff]
        %v392 = vld [vmem:[%s233 + $0x470] sm:$0xff]
        %v393 = vld [vmem:[%s233 + $0x478] sm:$0xff]
        %394 = vmatprep.subr.mxu0 0.0
        %395 = vmatpush1.msra.mxu0 %v250
        %396 = vmatprep.subr.mxu0 0.0
        %397 = vmatpush1.msra.mxu0 %v251
        %398 = vmatprep.subr.mxu0 0.0
        %399 = vmatpush1.msra.mxu0 %v252
        %400 = vmatprep.subr.mxu0 0.0
        %401 = vmatpush1.msra.mxu0 %v253
        %402 = vmatprep.subr.mxu0 0.0
        %403 = vmatpush1.msra.mxu0 %v254
        %404 = vmatprep.subr.mxu0 0.0
        %405 = vmatpush1.msra.mxu0 %v255
        %406 = vmatprep.subr.mxu0 0.0
        %407 = vmatpush1.msra.mxu0 %v256
        %408 = vmatprep.subr.mxu0 0.0
        %409 = vmatpush1.msra.mxu0 %v257
        %410 = vmatprep.subr.mxu0 0.0
        %411 = vmatpush1.msra.mxu0 %v258
        %412 = vmatprep.subr.mxu0 0.0
        %413 = vmatpush1.msra.mxu0 %v259
        %414 = vmatprep.subr.mxu0 0.0
        %415 = vmatpush1.msra.mxu0 %v260
        %416 = vmatprep.subr.mxu0 0.0
        %417 = vmatpush1.msra.mxu0 %v261
        %418 = vmatprep.subr.mxu0 0.0
        %419 = vmatpush1.msra.mxu0 %v262
        %420 = vmatprep.subr.mxu0 0.0
        %421 = vmatpush1.msra.mxu0 %v263
        %422 = vmatprep.subr.mxu0 0.0
        %423 = vmatpush1.msra.mxu0 %v264
        %424 = vmatprep.subr.mxu0 0.0
        %425 = vmatpush1.msra.mxu0 %v265
        %426 = vmatprep.subr.mxu0 0.0
        %427 = vmatpush1.msra.mxu0 %v266
        %428 = vmatprep.subr.mxu0 0.0
        %429 = vmatpush1.msra.mxu0 %v267
        %430 = vmatprep.subr.mxu0 0.0
        %431 = vmatpush1.msra.mxu0 %v268
        %432 = vmatprep.subr.mxu0 0.0
        %433 = vmatpush1.msra.mxu0 %v269
        %434 = vmatprep.subr.mxu0 0.0
        %435 = vmatpush1.msra.mxu0 %v270
        %436 = vmatprep.subr.mxu0 0.0
        %437 = vmatpush1.msra.mxu0 %v271
        %438 = vmatprep.subr.mxu0 0.0
        %439 = vmatpush1.msra.mxu0 %v272
        %440 = vmatprep.subr.mxu0 0.0
        %441 = vmatpush1.msra.mxu0 %v273
        %442 = vmatprep.subr.mxu0 0.0
        %443 = vmatpush1.msra.mxu0 %v274
        %444 = vmatprep.subr.mxu0 0.0
        %445 = vmatpush1.msra.mxu0 %v275
        %446 = vmatprep.subr.mxu0 0.0
        %447 = vmatpush1.msra.mxu0 %v276
        %448 = vmatprep.subr.mxu0 0.0
        %449 = vmatpush1.msra.mxu0 %v277
        %450 = vmatprep.subr.mxu0 0.0
        %451 = vmatpush1.msra.mxu0 %v278
        %452 = vmatprep.subr.mxu0 0.0
        %453 = vmatpush1.msra.mxu0 %v279
        %454 = vmatprep.subr.mxu0 0.0
        %455 = vmatpush1.msra.mxu0 %v280
        %456 = vmatprep.subr.mxu0 0.0
        %457 = vmatpush1.msra.mxu0 %v281
        %458 = vmatprep.mubr.f32.mxu0 %v242
        %459 = vmatmul.mubr.f32.gmra.mrb[0].mxu0 %v241
        %v460 = vpop.f32.mrb[0].mxu0
        %v461 = vadd.f32 0.0, %v460
        %v462 = vpop.f32.mrb[0].mxu0
        %463 = vdwg.mxu0
        %464 = vmatprep.subr.mxu0 0.0
        %465 = vmatpush1.msra.mxu0 %v282
        %466 = vmatprep.subr.mxu0 0.0
        %467 = vmatpush1.msra.mxu0 %v283
        %468 = vmatprep.subr.mxu0 0.0
        %469 = vmatpush1.msra.mxu0 %v284
        %470 = vmatprep.subr.mxu0 0.0
        %471 = vmatpush1.msra.mxu0 %v285
        %472 = vmatprep.subr.mxu0 0.0
        %473 = vmatpush1.msra.mxu0 %v286
        %474 = vmatprep.subr.mxu0 0.0
        %475 = vmatpush1.msra.mxu0 %v287
        %476 = vmatprep.subr.mxu0 0.0
        %477 = vmatpush1.msra.mxu0 %v288
        %478 = vmatprep.subr.mxu0 0.0
        %479 = vmatpush1.msra.mxu0 %v289
        %480 = vmatprep.subr.mxu0 0.0
        %481 = vmatpush1.msra.mxu0 %v290
        %482 = vmatprep.subr.mxu0 0.0
        %483 = vmatpush1.msra.mxu0 %v291
        %484 = vmatprep.subr.mxu0 0.0
        %485 = vmatpush1.msra.mxu0 %v292
        %486 = vmatprep.subr.mxu0 0.0
        %487 = vmatpush1.msra.mxu0 %v293
        %488 = vmatprep.subr.mxu0 0.0
        %489 = vmatpush1.msra.mxu0 %v294
        %490 = vmatprep.subr.mxu0 0.0
        %491 = vmatpush1.msra.mxu0 %v295
        %492 = vmatprep.subr.mxu0 0.0
        %493 = vmatpush1.msra.mxu0 %v296
        %494 = vmatprep.subr.mxu0 0.0
        %495 = vmatpush1.msra.mxu0 %v297
        %496 = vmatprep.subr.mxu0 0.0
        %497 = vmatpush1.msra.mxu0 %v298
        %498 = vmatprep.subr.mxu0 0.0
        %499 = vmatpush1.msra.mxu0 %v299
        %500 = vmatprep.subr.mxu0 0.0
        %501 = vmatpush1.msra.mxu0 %v300
        %502 = vmatprep.subr.mxu0 0.0
        %503 = vmatpush1.msra.mxu0 %v301
        %504 = vmatprep.subr.mxu0 0.0
        %505 = vmatpush1.msra.mxu0 %v302
        %506 = vmatprep.subr.mxu0 0.0
        %507 = vmatpush1.msra.mxu0 %v303
        %508 = vmatprep.subr.mxu0 0.0
        %509 = vmatpush1.msra.mxu0 %v304
        %510 = vmatprep.subr.mxu0 0.0
        %511 = vmatpush1.msra.mxu0 %v305
        %512 = vmatprep.subr.mxu0 0.0
        %513 = vmatpush1.msra.mxu0 %v306
        %514 = vmatprep.subr.mxu0 0.0
        %515 = vmatpush1.msra.mxu0 %v307
        %516 = vmatprep.subr.mxu0 0.0
        %517 = vmatpush1.msra.mxu0 %v308
        %518 = vmatprep.subr.mxu0 0.0
        %519 = vmatpush1.msra.mxu0 %v309
        %520 = vmatprep.subr.mxu0 0.0
        %521 = vmatpush1.msra.mxu0 %v310
        %522 = vmatprep.subr.mxu0 0.0
        %523 = vmatpush1.msra.mxu0 %v311
        %524 = vmatprep.subr.mxu0 0.0
        %525 = vmatpush1.msra.mxu0 %v312
        %526 = vmatprep.subr.mxu0 0.0
        %527 = vmatpush1.msra.mxu0 %v313
        %528 = vmatprep.mubr.f32.mxu0 %v244
        %529 = vmatmul.mubr.f32.gmra.mrb[0].mxu0 %v243
        %v530 = vpop.f32.mrb[0].mxu0
        %v531 = vadd.f32 %v461, %v530
        %v532 = vpop.f32.mrb[0].mxu0
        %533 = vdwg.mxu0
        %534 = vmatprep.subr.mxu0 0.0
        %535 = vmatpush1.msra.mxu0 %v314
        %536 = vmatprep.subr.mxu0 0.0
        %537 = vmatpush1.msra.mxu0 %v315
        %538 = vmatprep.subr.mxu0 0.0
        %539 = vmatpush1.msra.mxu0 %v316
        %540 = vmatprep.subr.mxu0 0.0
        %541 = vmatpush1.msra.mxu0 %v317
        %542 = vmatprep.subr.mxu0 0.0
        %543 = vmatpush1.msra.mxu0 %v318
        %544 = vmatprep.subr.mxu0 0.0
        %545 = vmatpush1.msra.mxu0 %v319
        %546 = vmatprep.subr.mxu0 0.0
        %547 = vmatpush1.msra.mxu0 %v320
        %548 = vmatprep.subr.mxu0 0.0
        %549 = vmatpush1.msra.mxu0 %v321
        %550 = vmatprep.subr.mxu0 0.0
        %551 = vmatpush1.msra.mxu0 %v322
        %552 = vmatprep.subr.mxu0 0.0
        %553 = vmatpush1.msra.mxu0 %v323
        %554 = vmatprep.subr.mxu0 0.0
        %555 = vmatpush1.msra.mxu0 %v324
        %556 = vmatprep.subr.mxu0 0.0
        %557 = vmatpush1.msra.mxu0 %v325
        %558 = vmatprep.subr.mxu0 0.0
        %559 = vmatpush1.msra.mxu0 %v326
        %560 = vmatprep.subr.mxu0 0.0
        %561 = vmatpush1.msra.mxu0 %v327
        %562 = vmatprep.subr.mxu0 0.0
        %563 = vmatpush1.msra.mxu0 %v328
        %564 = vmatprep.subr.mxu0 0.0
        %565 = vmatpush1.msra.mxu0 %v329
        %566 = vmatprep.subr.mxu0 0.0
        %567 = vmatpush1.msra.mxu0 %v330
        %568 = vmatprep.subr.mxu0 0.0
        %569 = vmatpush1.msra.mxu0 %v331
        %570 = vmatprep.subr.mxu0 0.0
        %571 = vmatpush1.msra.mxu0 %v332
        %572 = vmatprep.subr.mxu0 0.0
        %573 = vmatpush1.msra.mxu0 %v333
        %574 = vmatprep.subr.mxu0 0.0
        %575 = vmatpush1.msra.mxu0 %v334
        %576 = vmatprep.subr.mxu0 0.0
        %577 = vmatpush1.msra.mxu0 %v335
        %578 = vmatprep.subr.mxu0 0.0
        %579 = vmatpush1.msra.mxu0 %v336
        %580 = vmatprep.subr.mxu0 0.0
        %581 = vmatpush1.msra.mxu0 %v337
        %582 = vmatprep.subr.mxu0 0.0
        %583 = vmatpush1.msra.mxu0 %v338
        %584 = vmatprep.subr.mxu0 0.0
        %585 = vmatpush1.msra.mxu0 %v339
        %586 = vmatprep.subr.mxu0 0.0
        %587 = vmatpush1.msra.mxu0 %v340
        %588 = vmatprep.subr.mxu0 0.0
        %589 = vmatpush1.msra.mxu0 %v341
        %590 = vmatprep.subr.mxu0 0.0
        %591 = vmatpush1.msra.mxu0 %v342
        %592 = vmatprep.subr.mxu0 0.0
        %593 = vmatpush1.msra.mxu0 %v343
        %594 = vmatprep.subr.mxu0 0.0
        %595 = vmatpush1.msra.mxu0 %v344
        %596 = vmatprep.subr.mxu0 0.0
        %597 = vmatpush1.msra.mxu0 %v345
        %598 = vmatprep.mubr.f32.mxu0 %v246
        %599 = vmatmul.mubr.f32.gmra.mrb[0].mxu0 %v245
        %v600 = vpop.f32.mrb[0].mxu0
        %v601 = vadd.f32 %v531, %v600
        %v602 = vpop.f32.mrb[0].mxu0
        %603 = vdwg.mxu0
        %604 = vmatprep.subr.mxu0 0.0
        %605 = vmatpush1.msra.mxu0 %v346
        %606 = vmatprep.subr.mxu0 0.0
        %607 = vmatpush1.msra.mxu0 %v347
        %608 = vmatprep.subr.mxu0 0.0
        %609 = vmatpush1.msra.mxu0 %v348
        %610 = vmatprep.subr.mxu0 0.0
        %611 = vmatpush1.msra.mxu0 %v349
        %612 = vmatprep.subr.mxu0 0.0
        %613 = vmatpush1.msra.mxu0 %v350
        %614 = vmatprep.subr.mxu0 0.0
        %615 = vmatpush1.msra.mxu0 %v351
        %616 = vmatprep.subr.mxu0 0.0
        %617 = vmatpush1.msra.mxu0 %v352
        %618 = vmatprep.subr.mxu0 0.0
        %619 = vmatpush1.msra.mxu0 %v353
        %620 = vmatprep.subr.mxu0 0.0
        %621 = vmatpush1.msra.mxu0 %v354
        %622 = vmatprep.subr.mxu0 0.0
        %623 = vmatpush1.msra.mxu0 %v355
        %624 = vmatprep.subr.mxu0 0.0
        %625 = vmatpush1.msra.mxu0 %v356
        %626 = vmatprep.subr.mxu0 0.0
        %627 = vmatpush1.msra.mxu0 %v357
        %628 = vmatprep.subr.mxu0 0.0
        %629 = vmatpush1.msra.mxu0 %v358
        %630 = vmatprep.subr.mxu0 0.0
        %631 = vmatpush1.msra.mxu0 %v359
        %632 = vmatprep.subr.mxu0 0.0
        %633 = vmatpush1.msra.mxu0 %v360
        %634 = vmatprep.subr.mxu0 0.0
        %635 = vmatpush1.msra.mxu0 %v361
        %636 = vmatprep.subr.mxu0 0.0
        %637 = vmatpush1.msra.mxu0 %v362
        %638 = vmatprep.subr.mxu0 0.0
        %639 = vmatpush1.msra.mxu0 %v363
        %640 = vmatprep.subr.mxu0 0.0
        %641 = vmatpush1.msra.mxu0 %v364
        %642 = vmatprep.subr.mxu0 0.0
        %643 = vmatpush1.msra.mxu0 %v365
        %644 = vmatprep.subr.mxu0 0.0
        %645 = vmatpush1.msra.mxu0 %v366
        %646 = vmatprep.subr.mxu0 0.0
        %647 = vmatpush1.msra.mxu0 %v367
        %648 = vmatprep.subr.mxu0 0.0
        %649 = vmatpush1.msra.mxu0 %v368
        %650 = vmatprep.subr.mxu0 0.0
        %651 = vmatpush1.msra.mxu0 %v369
        %652 = vmatprep.subr.mxu0 0.0
        %653 = vmatpush1.msra.mxu0 %v370
        %654 = vmatprep.subr.mxu0 0.0
        %655 = vmatpush1.msra.mxu0 %v371
        %656 = vmatprep.subr.mxu0 0.0
        %657 = vmatpush1.msra.mxu0 %v372
        %658 = vmatprep.subr.mxu0 0.0
        %659 = vmatpush1.msra.mxu0 %v373
        %660 = vmatprep.subr.mxu0 0.0
        %661 = vmatpush1.msra.mxu0 %v374
        %662 = vmatprep.subr.mxu0 0.0
        %663 = vmatpush1.msra.mxu0 %v375
        %664 = vmatprep.subr.mxu0 0.0
        %665 = vmatpush1.msra.mxu0 %v376
        %666 = vmatprep.subr.mxu0 0.0
        %667 = vmatpush1.msra.mxu0 %v377
        %668 = vmatprep.mubr.f32.mxu0 %v248
        %669 = vmatmul.mubr.f32.gmra.mrb[0].mxu0 %v247
        %v670 = vpop.f32.mrb[0].mxu0
        %v671 = vadd.f32 %v601, %v670
        %v672 = vpop.f32.mrb[0].mxu0
        %673 = vdwg.mxu0
        %674 = vmatprep.subr.mxu0 0.0
        %675 = vmatpush1.msra.mxu0 %v378
        %676 = vmatprep.subr.mxu0 0.0
        %677 = vmatpush1.msra.mxu0 %v379
        %678 = vmatprep.subr.mxu0 0.0
        %679 = vmatpush1.msra.mxu0 %v380
        %680 = vmatprep.subr.mxu0 0.0
        %681 = vmatpush1.msra.mxu0 %v381
        %682 = vmatprep.subr.mxu0 0.0
        %683 = vmatpush1.msra.mxu0 %v382
        %684 = vmatprep.subr.mxu0 0.0
        %685 = vmatpush1.msra.mxu0 %v383
        %686 = vmatprep.subr.mxu0 0.0
        %687 = vmatpush1.msra.mxu0 %v384
        %688 = vmatprep.subr.mxu0 0.0
        %689 = vmatpush1.msra.mxu0 %v385
        %690 = vmatprep.subr.mxu0 0.0
        %691 = vmatpush1.msra.mxu0 %v386
        %692 = vmatprep.subr.mxu0 0.0
        %693 = vmatpush1.msra.mxu0 %v387
        %694 = vmatprep.subr.mxu0 0.0
        %695 = vmatpush1.msra.mxu0 %v388
        %696 = vmatprep.subr.mxu0 0.0
        %697 = vmatpush1.msra.mxu0 %v389
        %698 = vmatprep.subr.mxu0 0.0
        %699 = vmatpush1.msra.mxu0 %v390
        %700 = vmatprep.subr.mxu0 0.0
        %701 = vmatpush1.msra.mxu0 %v391
        %702 = vmatprep.subr.mxu0 0.0
        %703 = vmatpush1.msra.mxu0 %v392
        %704 = vmatprep.subr.mxu0 0.0
        %705 = vmatpush1.msra.mxu0 %v393
        %706 = vmatprep.subr.mxu0 0.0
        %707 = vmatpush1.msra.mxu0 0.0
        %708 = vmatprep.subr.mxu0 0.0
        %709 = vmatpush1.msra.mxu0 0.0
        %710 = vmatprep.subr.mxu0 0.0
        %711 = vmatpush1.msra.mxu0 0.0
        %712 = vmatprep.subr.mxu0 0.0
        %713 = vmatpush1.msra.mxu0 0.0
        %714 = vmatprep.subr.mxu0 0.0
        %715 = vmatpush1.msra.mxu0 0.0
        %716 = vmatprep.subr.mxu0 0.0
        %717 = vmatpush1.msra.mxu0 0.0
        %718 = vmatprep.subr.mxu0 0.0
        %719 = vmatpush1.msra.mxu0 0.0
        %720 = vmatprep.subr.mxu0 0.0
        %721 = vmatpush1.msra.mxu0 0.0
        %722 = vmatprep.subr.mxu0 0.0
        %723 = vmatpush1.msra.mxu0 0.0
        %724 = vmatprep.subr.mxu0 0.0
        %725 = vmatpush1.msra.mxu0 0.0
        %726 = vmatprep.subr.mxu0 0.0
        %727 = vmatpush1.msra.mxu0 0.0
        %728 = vmatprep.subr.mxu0 0.0
        %729 = vmatpush1.msra.mxu0 0.0
        %730 = vmatprep.subr.mxu0 0.0
        %731 = vmatpush1.msra.mxu0 0.0
        %732 = vmatprep.subr.mxu0 0.0
        %733 = vmatpush1.msra.mxu0 0.0
        %734 = vmatprep.subr.mxu0 0.0
        %735 = vmatpush1.msra.mxu0 0.0
        %736 = vmatprep.subr.mxu0 0.0
        %737 = vmatpush1.msra.mxu0 0.0
        %738 = vmatprep.mubr.f32.mxu0 0.0
        %739 = vmatmul.mubr.f32.gmra.mrb[0].mxu0 %v249
        %v740 = vpop.f32.mrb[0].mxu0
        %v741 = vadd.f32 %v671, %v740
        %v742 = vpop.f32.mrb[0].mxu0
        %743 = vdwg.mxu0
        %v744 = vadd.f32 %v240, %v741
        %745 = vst [vmem:[#allocation2] sm:$0xff] %v744
        %p746 = scmp.eq.s32.totalorder %s17, 7
        // Predicated region
        $region45: #{_lambda_.3} parent=39 // pred_check
          %p747 = pneg %p746
        $region46: #{_lambda_.3} parent=39 // pred_check_branch
          %749 = sbr.rel (%p747) target = $region48
        $region47: #{_lambda_.3} parent=39 // pred_region
          %v750 = vld [vmem:[#allocation2] sm:$0xff]
          %v751 = vld [vmem:[%s2] sm:$0x1]
          %v753 = vlaneseq
          %v754 = vshrl.u32 %v753, 7
          %v755 = vsub.s32 0, %v754
          %v756 = vrot.slane %v751, %v755
          %v758 = vadd.f32 %v750, %v756
          %v759 = vmax.f32 %v758, 0.0
          %v760 = vld [vmem:[%s3] sm:$0xff]
          %v761 = vld [vmem:[%s3 + $0x8] sm:$0xff]
          %v762 = vld [vmem:[%s3 + $0x10] sm:$0xff]
          %v763 = vld [vmem:[%s3 + $0x18] sm:$0xff]
          %v764 = vld [vmem:[%s3 + $0x20] sm:$0xff]
          %v765 = vld [vmem:[%s3 + $0x28] sm:$0xff]
          %v766 = vld [vmem:[%s3 + $0x30] sm:$0xff]
          %v767 = vld [vmem:[%s3 + $0x38] sm:$0xff]
          %v768 = vld [vmem:[%s3 + $0x40] sm:$0xff]
          %v769 = vld [vmem:[%s3 + $0x48] sm:$0xff]
          %v770 = vld [vmem:[%s3 + $0x50] sm:$0xff]
          %v771 = vld [vmem:[%s3 + $0x58] sm:$0xff]
          %v772 = vld [vmem:[%s3 + $0x60] sm:$0xff]
          %v773 = vld [vmem:[%s3 + $0x68] sm:$0xff]
          %v774 = vld [vmem:[%s3 + $0x70] sm:$0xff]
          %v775 = vld [vmem:[%s3 + $0x78] sm:$0xff]
          %v776 = vld [vmem:[%s4] sm:$0x1]
          %v778 = vlaneseq
          %v779 = vshrl.u32 %v778, 7
          %v780 = vsub.s32 0, %v779
          %v781 = vrot.slane %v776, %v780
          %783 = vmatprep.subr.mxu0 0.0
          %784 = vmatpush1.msra.mxu0 %v760
          %785 = vmatprep.subr.mxu0 0.0
          %786 = vmatpush1.msra.mxu0 %v761
          %787 = vmatprep.subr.mxu0 0.0
          %788 = vmatpush1.msra.mxu0 %v762
          %789 = vmatprep.subr.mxu0 0.0
          %790 = vmatpush1.msra.mxu0 %v763
          %791 = vmatprep.subr.mxu0 0.0
          %792 = vmatpush1.msra.mxu0 %v764
          %793 = vmatprep.subr.mxu0 0.0
          %794 = vmatpush1.msra.mxu0 %v765
          %795 = vmatprep.subr.mxu0 0.0
          %796 = vmatpush1.msra.mxu0 %v766
          %797 = vmatprep.subr.mxu0 0.0
          %798 = vmatpush1.msra.mxu0 %v767
          %799 = vmatprep.subr.mxu0 0.0
          %800 = vmatpush1.msra.mxu0 %v768
          %801 = vmatprep.subr.mxu0 0.0
          %802 = vmatpush1.msra.mxu0 %v769
          %803 = vmatprep.subr.mxu0 0.0
          %804 = vmatpush1.msra.mxu0 %v770
          %805 = vmatprep.subr.mxu0 0.0
          %806 = vmatpush1.msra.mxu0 %v771
          %807 = vmatprep.subr.mxu0 0.0
          %808 = vmatpush1.msra.mxu0 %v772
          %809 = vmatprep.subr.mxu0 0.0
          %810 = vmatpush1.msra.mxu0 %v773
          %811 = vmatprep.subr.mxu0 0.0
          %812 = vmatpush1.msra.mxu0 %v774
          %813 = vmatprep.subr.mxu0 0.0
          %814 = vmatpush1.msra.mxu0 %v775
          %815 = vmatprep.subr.mxu0 0.0
          %816 = vmatpush1.msra.mxu0 0.0
          %817 = vmatprep.subr.mxu0 0.0
          %818 = vmatpush1.msra.mxu0 0.0
          %819 = vmatprep.subr.mxu0 0.0
          %820 = vmatpush1.msra.mxu0 0.0
          %821 = vmatprep.subr.mxu0 0.0
          %822 = vmatpush1.msra.mxu0 0.0
          %823 = vmatprep.subr.mxu0 0.0
          %824 = vmatpush1.msra.mxu0 0.0
          %825 = vmatprep.subr.mxu0 0.0
          %826 = vmatpush1.msra.mxu0 0.0
          %827 = vmatprep.subr.mxu0 0.0
          %828 = vmatpush1.msra.mxu0 0.0
          %829 = vmatprep.subr.mxu0 0.0
          %830 = vmatpush1.msra.mxu0 0.0
          %831 = vmatprep.subr.mxu0 0.0
          %832 = vmatpush1.msra.mxu0 0.0
          %833 = vmatprep.subr.mxu0 0.0
          %834 = vmatpush1.msra.mxu0 0.0
          %835 = vmatprep.subr.mxu0 0.0
          %836 = vmatpush1.msra.mxu0 0.0
          %837 = vmatprep.subr.mxu0 0.0
          %838 = vmatpush1.msra.mxu0 0.0
          %839 = vmatprep.subr.mxu0 0.0
          %840 = vmatpush1.msra.mxu0 0.0
          %841 = vmatprep.subr.mxu0 0.0
          %842 = vmatpush1.msra.mxu0 0.0
          %843 = vmatprep.subr.mxu0 0.0
          %844 = vmatpush1.msra.mxu0 0.0
          %845 = vmatprep.subr.mxu0 0.0
          %846 = vmatpush1.msra.mxu0 0.0
          %847 = vmatprep.mubr.f32.mxu0 0.0
          %848 = vmatmul.mubr.f32.gmra.mrb[0].mxu0 %v759
          %v849 = vpop.f32.mrb[0].mxu0
          %v850 = vadd.f32 %v781, %v849
          %v851 = vpop.f32.mrb[0].mxu0
          %852 = vdwg.mxu0
          %853 = vst [vmem:[#allocation3] sm:$0xff] %v850
        $region48: #{_lambda_.3} parent=39 // pred_fallthru
          _
        // Predicated region
        $region49: #{_lambda_.3} parent=39 // pred_check
          %p854 = pneg %p145
        $region50: #{_lambda_.3} parent=39 // pred_check_branch
          %856 = sbr.rel (%p854) target = $region52
        $region51: #{_lambda_.3} parent=39 // pred_region
          %s858 = ssub.s32 128, 128
          %859 = vsyncadd [#allocation4], %s858
          %s861 = sshll.u32 [#allocation3], 4
          %s862 = int_to_ptr.vmem [resolvable:$true] %s861
          %864 = dma.vmem_to_hbm [thread:$0]  %s862, 128, %s5, [#allocation4]
        $region52: #{_lambda_.3} parent=39 // pred_fallthru
          _
        // Predicated region
        $region53: #{_lambda_.3} parent=39 // pred_check
          %p865 = pneg %p145
        $region54: #{_lambda_.3} parent=39 // pred_check_branch
          %867 = sbr.rel (%p865) target = $region56
        $region55: #{_lambda_.3} parent=39 // pred_region
          %868 = dma.done [#allocation4], 128
        $region56: #{_lambda_.3} parent=39 // pred_fallthru
          _
      $region40: #{_lambda_.3} parent=5 // pred_fallthru
        _
      %p869 = scmp.le.s32.totalorder 2, %s12
      // Predicated region
      $region57: #{_lambda_.3} parent=5 // pred_check
        %p870 = pneg %p869
      $region58: #{_lambda_.3} parent=5 // pred_check_branch
        %872 = sbr.rel (%p870) target = $region60
      $region59: #{_lambda_.3} parent=5 // pred_region
        %s873 = ssub.s32 %s12, 2
      $region60: #{_lambda_.3} parent=5 // pred_fallthru
        _
    $region6: #{_lambda_.3} parent=1 // loop_footer
      %s16 = sadd.s32 1, %s12
    $region7: #{_lambda_.3} parent=1 // loop_footer_branch
      %11 = sbr.rel target = $region3
    $region8: #{_lambda_.3} parent=1 // loop_exit
      _
    %874 = vsyncpa [#allocation4], 1
    %s875 = scalar_lea.sflag [#allocation4], 1
    %876 = vsyncpa %s875, 1

// kernel: _lambda_.2
$region0: #{_lambda_.2}
  #allocation0 [shape = 'u32[]', space=smem, size = 0x4, offset = 0x4, fixed_abs, tag = 'smem constant byte address 0x4 - core index']
  #allocation1 [shape = 'u32[144,128]{1,0:T(1,128)}', space=vmem, size = 0x12000, scoped, tag = 'internal scratch']
  #allocation2 [shape = 'f32[3584,64]{1,0:T(8,128)}', space=vmem, size = 0x1c0000, scoped, tag = 'scratch operand']
  #allocation3 [shape = 'f32[384,64]{1,0:T(8,128)}', space=vmem, size = 0x30000, scoped, tag = 'scratch operand']
  %s0 = inlined_call_operand.vmem [shape: f32[7168,32], index: 0, kind: input, shape index: {}]
  %s1 = inlined_call_operand.vmem [shape: f32[32,288], index: 1, kind: input, shape index: {}]
  %s2 = inlined_call_operand.vmem [shape: f32[1,288], index: 2, kind: input, shape index: {}]
  %s3 = inlined_call_operand.vmem [shape: f32[288,64], index: 3, kind: input, shape index: {}]
  %s4 = inlined_call_operand.vmem [shape: f32[1,128], index: 4, kind: input, shape index: {}]
  %s5 = inlined_call_operand.vmem [shape: f32[72,384], index: 5, kind: input, shape index: {}]
  %s6 = inlined_call_operand.vmem [shape: f32[72,384], index: 6, kind: input, shape index: {}]
  %s7 = inlined_call_operand.vmem [shape: f32[576,128], index: 7, kind: output, shape index: {}]
  %s8 = sld [smem:[#allocation0]]
  $region82: #{_lambda_.2} parent=0
    _
  %s10 = ssub.s32 1, %s8
  %s11 = scalar_select 0, %s10, %s8
  loop: start=0, step=1, limit=4
  $region2: #{_lambda_.2} parent=0 // loop_pre_header
    _
  $region3: #{_lambda_.2} parent=0 // loop_header
    %s13 = sphi 0, %s17
    %p14 = scmp.ge.s32.totalorder %s13, 4
    %s23 = sphi 0, %s25
    %s26 = sphi 0, %s23
    %s27 = sphi 0, %s26
    %s43 = sphi 0, %s27
    %s47 = sphi 0, %s47
    %s49 = sphi 0, %s47
    %s50 = sphi 0, %s49
    %s64 = sphi 0, %s50
    %s68 = sphi 0, %s68
    %s70 = sphi 0, %s68
    %s71 = sphi 0, %s70
    %s85 = sphi 0, %s71
    %s89 = sphi 0, %s89
    %s91 = sphi 0, %s89
    %s92 = sphi 0, %s91
    %s106 = sphi 0, %s92
    %s110 = sphi 0, %s110
    %s112 = sphi 0, %s110
    %s113 = sphi 0, %s112
    %s127 = sphi 0, %s113
    %s131 = sphi 0, %s131
    %s133 = sphi 0, %s131
    %s134 = sphi 0, %s133
    %s148 = sphi 0, %s134
    %s152 = sphi 0, %s152
    %s154 = sphi 0, %s152
    %s155 = sphi 0, %s154
    %s169 = sphi 0, %s155
    %s175 = sphi 0, %s177
    %s178 = sphi 0, %s175
    %s179 = sphi 0, %s178
    %s195 = sphi 0, %s179
  $region4: #{_lambda_.2} parent=0 // loop_header_branch
    %16 = sbr.rel (%p14) target = $region8
  $region5: #{_lambda_.2} parent=0 // loop_body
    %s18 = ssub.s32 %s13, 1
    %s19 = ssub.s32 %s13, 2
    %s20 = sadd.s32 %s13, 1
    %s21 = ssub.s32 %s13, %s20
    %p22 = scmp.eq.s32.totalorder %s21, 0
    %s24 = sadd.s32 %s23, 1
    %s25 = scalar_select %p22, %s23, %s24
    %p28 = pneg %p22
    %p29 = scmp.eq.s32.totalorder %s13, 1
    %p30 = por %p28, %p29
    %p31 = scmp.ne.s32.totalorder %s23, %s26
    %p32 = scmp.eq.s32.totalorder %s13, 0
    %p33 = por %p31, %p32
    %p34 = scmp.ne.s32.totalorder %s23, %s26
    %p35 = scmp.eq.s32.totalorder %s18, 1
    %p36 = por %p34, %p35
    %p37 = scmp.ne.s32.totalorder %s26, %s27
    %p38 = scmp.eq.s32.totalorder %s18, 0
    %p39 = por %p37, %p38
    %p40 = scmp.ne.s32.totalorder %s26, %s27
    %p41 = scmp.eq.s32.totalorder %s19, 1
    %p42 = por %p40, %p41
    %p44 = scmp.ne.s32.totalorder %s27, %s43
    %p45 = scmp.eq.s32.totalorder %s19, 0
    %p46 = por %p44, %p45
    %s48 = sadd.s32 %s47, 1
    %p51 = scmp.eq.s32.totalorder %s13, 1
    %p52 = scmp.ne.s32.totalorder %s47, %s49
    %p53 = scmp.eq.s32.totalorder %s13, 0
    %p54 = por %p52, %p53
    %p55 = scmp.ne.s32.totalorder %s47, %s49
    %p56 = scmp.eq.s32.totalorder %s18, 1
    %p57 = por %p55, %p56
    %p58 = scmp.ne.s32.totalorder %s49, %s50
    %p59 = scmp.eq.s32.totalorder %s18, 0
    %p60 = por %p58, %p59
    %p61 = scmp.ne.s32.totalorder %s49, %s50
    %p62 = scmp.eq.s32.totalorder %s19, 1
    %p63 = por %p61, %p62
    %p65 = scmp.ne.s32.totalorder %s50, %s64
    %p66 = scmp.eq.s32.totalorder %s19, 0
    %p67 = por %p65, %p66
    %s69 = sadd.s32 %s68, 1
    %p72 = scmp.eq.s32.totalorder %s13, 1
    %p73 = scmp.ne.s32.totalorder %s68, %s70
    %p74 = scmp.eq.s32.totalorder %s13, 0
    %p75 = por %p73, %p74
    %p76 = scmp.ne.s32.totalorder %s68, %s70
    %p77 = scmp.eq.s32.totalorder %s18, 1
    %p78 = por %p76, %p77
    %p79 = scmp.ne.s32.totalorder %s70, %s71
    %p80 = scmp.eq.s32.totalorder %s18, 0
    %p81 = por %p79, %p80
    %p82 = scmp.ne.s32.totalorder %s70, %s71
    %p83 = scmp.eq.s32.totalorder %s19, 1
    %p84 = por %p82, %p83
    %p86 = scmp.ne.s32.totalorder %s71, %s85
    %p87 = scmp.eq.s32.totalorder %s19, 0
    %p88 = por %p86, %p87
    %s90 = sadd.s32 %s89, 1
    %p93 = scmp.eq.s32.totalorder %s13, 1
    %p94 = scmp.ne.s32.totalorder %s89, %s91
    %p95 = scmp.eq.s32.totalorder %s13, 0
    %p96 = por %p94, %p95
    %p97 = scmp.ne.s32.totalorder %s89, %s91
    %p98 = scmp.eq.s32.totalorder %s18, 1
    %p99 = por %p97, %p98
    %p100 = scmp.ne.s32.totalorder %s91, %s92
    %p101 = scmp.eq.s32.totalorder %s18, 0
    %p102 = por %p100, %p101
    %p103 = scmp.ne.s32.totalorder %s91, %s92
    %p104 = scmp.eq.s32.totalorder %s19, 1
    %p105 = por %p103, %p104
    %p107 = scmp.ne.s32.totalorder %s92, %s106
    %p108 = scmp.eq.s32.totalorder %s19, 0
    %p109 = por %p107, %p108
    %s111 = sadd.s32 %s110, 1
    %p114 = scmp.eq.s32.totalorder %s13, 1
    %p115 = scmp.ne.s32.totalorder %s110, %s112
    %p116 = scmp.eq.s32.totalorder %s13, 0
    %p117 = por %p115, %p116
    %p118 = scmp.ne.s32.totalorder %s110, %s112
    %p119 = scmp.eq.s32.totalorder %s18, 1
    %p120 = por %p118, %p119
    %p121 = scmp.ne.s32.totalorder %s112, %s113
    %p122 = scmp.eq.s32.totalorder %s18, 0
    %p123 = por %p121, %p122
    %p124 = scmp.ne.s32.totalorder %s112, %s113
    %p125 = scmp.eq.s32.totalorder %s19, 1
    %p126 = por %p124, %p125
    %p128 = scmp.ne.s32.totalorder %s113, %s127
    %p129 = scmp.eq.s32.totalorder %s19, 0
    %p130 = por %p128, %p129
    %s132 = sadd.s32 %s131, 1
    %p135 = scmp.eq.s32.totalorder %s13, 1
    %p136 = scmp.ne.s32.totalorder %s131, %s133
    %p137 = scmp.eq.s32.totalorder %s13, 0
    %p138 = por %p136, %p137
    %p139 = scmp.ne.s32.totalorder %s131, %s133
    %p140 = scmp.eq.s32.totalorder %s18, 1
    %p141 = por %p139, %p140
    %p142 = scmp.ne.s32.totalorder %s133, %s134
    %p143 = scmp.eq.s32.totalorder %s18, 0
    %p144 = por %p142, %p143
    %p145 = scmp.ne.s32.totalorder %s133, %s134
    %p146 = scmp.eq.s32.totalorder %s19, 1
    %p147 = por %p145, %p146
    %p149 = scmp.ne.s32.totalorder %s134, %s148
    %p150 = scmp.eq.s32.totalorder %s19, 0
    %p151 = por %p149, %p150
    %s153 = sadd.s32 %s152, 1
    %p156 = scmp.eq.s32.totalorder %s13, 1
    %p157 = scmp.ne.s32.totalorder %s152, %s154
    %p158 = scmp.eq.s32.totalorder %s13, 0
    %p159 = por %p157, %p158
    %p160 = scmp.ne.s32.totalorder %s152, %s154
    %p161 = scmp.eq.s32.totalorder %s18, 1
    %p162 = por %p160, %p161
    %p163 = scmp.ne.s32.totalorder %s154, %s155
    %p164 = scmp.eq.s32.totalorder %s18, 0
    %p165 = por %p163, %p164
    %p166 = scmp.ne.s32.totalorder %s154, %s155
    %p167 = scmp.eq.s32.totalorder %s19, 1
    %p168 = por %p166, %p167
    %p170 = scmp.ne.s32.totalorder %s155, %s169
    %p171 = scmp.eq.s32.totalorder %s19, 0
    %p172 = por %p170, %p171
    %s173 = ssub.s32 %s13, %s20
    %p174 = scmp.eq.s32.totalorder %s173, 0
    %s176 = sadd.s32 %s175, 1
    %s177 = scalar_select %p174, %s175, %s176
    %p180 = pneg %p174
    %p181 = scmp.eq.s32.totalorder %s13, 1
    %p182 = por %p180, %p181
    %p183 = scmp.ne.s32.totalorder %s175, %s178
    %p184 = scmp.eq.s32.totalorder %s13, 0
    %p185 = por %p183, %p184
    %p186 = scmp.ne.s32.totalorder %s175, %s178
    %p187 = scmp.eq.s32.totalorder %s18, 1
    %p188 = por %p186, %p187
    %p189 = scmp.ne.s32.totalorder %s178, %s179
    %p190 = scmp.eq.s32.totalorder %s18, 0
    %p191 = por %p189, %p190
    %p192 = scmp.ne.s32.totalorder %s178, %s179
    %p193 = scmp.eq.s32.totalorder %s19, 1
    %p194 = por %p192, %p193
    %p196 = scmp.ne.s32.totalorder %s179, %s195
    %p197 = scmp.eq.s32.totalorder %s19, 0
    %p198 = por %p196, %p197
    %p199 = scmp.le.s32.totalorder 1, %s13
    %p200 = scmp.lt.s32.totalorder %s13, 3
    %p201 = pnand %p199, %p200
    %p202 = pneg %p201
    // Predicated region
    $region9: #{_lambda_.2} parent=5 // pred_check
      _
    $region10: #{_lambda_.2} parent=5 // pred_check_branch
      %204 = sbr.rel (%p201) target = $region12
    $region11: #{_lambda_.2} parent=5 // pred_region
      %s205 = ssub.s32 %s13, 1
      // Predicated region
      $region13: #{_lambda_.2} parent=11 // pred_check
        %p206 = pneg %p60
      $region14: #{_lambda_.2} parent=11 // pred_check_branch
        %208 = sbr.rel (%p206) target = $region16
      $region15: #{_lambda_.2} parent=11 // pred_region
        _
      $region16: #{_lambda_.2} parent=11 // pred_fallthru
        _
      // Predicated region
      $region17: #{_lambda_.2} parent=11 // pred_check
        %p209 = pneg %p81
      $region18: #{_lambda_.2} parent=11 // pred_check_branch
        %211 = sbr.rel (%p209) target = $region20
      $region19: #{_lambda_.2} parent=11 // pred_region
        _
      $region20: #{_lambda_.2} parent=11 // pred_fallthru
        _
      // Predicated region
      $region21: #{_lambda_.2} parent=11 // pred_check
        %p212 = pneg %p102
      $region22: #{_lambda_.2} parent=11 // pred_check_branch
        %214 = sbr.rel (%p212) target = $region24
      $region23: #{_lambda_.2} parent=11 // pred_region
        _
      $region24: #{_lambda_.2} parent=11 // pred_fallthru
        _
      // Predicated region
      $region25: #{_lambda_.2} parent=11 // pred_check
        %p215 = pneg %p123
      $region26: #{_lambda_.2} parent=11 // pred_check_branch
        %217 = sbr.rel (%p215) target = $region28
      $region27: #{_lambda_.2} parent=11 // pred_region
        _
      $region28: #{_lambda_.2} parent=11 // pred_fallthru
        _
      // Predicated region
      $region29: #{_lambda_.2} parent=11 // pred_check
        %p218 = pneg %p144
      $region30: #{_lambda_.2} parent=11 // pred_check_branch
        %220 = sbr.rel (%p218) target = $region32
      $region31: #{_lambda_.2} parent=11 // pred_region
        _
      $region32: #{_lambda_.2} parent=11 // pred_fallthru
        _
      // Predicated region
      $region33: #{_lambda_.2} parent=11 // pred_check
        %p221 = pneg %p165
      $region34: #{_lambda_.2} parent=11 // pred_check_branch
        %223 = sbr.rel (%p221) target = $region36
      $region35: #{_lambda_.2} parent=11 // pred_region
        _
      $region36: #{_lambda_.2} parent=11 // pred_fallthru
        _
    $region12: #{_lambda_.2} parent=5 // pred_fallthru
      _
    %p224 = scmp.lt.s32.totalorder %s13, 2
    // Predicated region
    $region37: #{_lambda_.2} parent=5 // pred_check
      %p225 = pneg %p224
    $region38: #{_lambda_.2} parent=5 // pred_check_branch
      %227 = sbr.rel (%p225) target = $region40
    $region39: #{_lambda_.2} parent=5 // pred_region
      // Predicated region
      $region41: #{_lambda_.2} parent=39 // pred_check
        %p228 = pneg %p33
      $region42: #{_lambda_.2} parent=39 // pred_check_branch
        %230 = sbr.rel (%p228) target = $region44
      $region43: #{_lambda_.2} parent=39 // pred_region
        %s231 = smul.u32 448, %s13
        %p232 = scmp.lt.s32.totalorder %s231, 895
        %s233 = scalar_select %p232, %s231, 895
        %s234 = smul.addr %s233, 8
        %s235 = scalar_lea.vmem %s0, %s234
        %s236 = smul.u32 448, %s13
      $region44: #{_lambda_.2} parent=39 // pred_fallthru
        _
    $region40: #{_lambda_.2} parent=5 // pred_fallthru
      _
    %p237 = scmp.le.s32.totalorder 1, %s13
    %p238 = scmp.lt.s32.totalorder %s13, 3
    %p239 = pnand %p237, %p238
    %p240 = pneg %p239
    // Predicated region
    $region45: #{_lambda_.2} parent=5 // pred_check
      _
    $region46: #{_lambda_.2} parent=5 // pred_check_branch
      %242 = sbr.rel (%p239) target = $region48
    $region47: #{_lambda_.2} parent=5 // pred_region
      %s243 = ssub.s32 %s13, 1
      %s244 = smul.u32 448, %s18
      %p245 = scmp.lt.s32.totalorder %s244, 895
      %s246 = scalar_select %p245, %s244, 895
      %s247 = smul.addr %s246, 8
      %s248 = scalar_lea.vmem %s0, %s247
      %p249 = pneg %p39
      %p250 = pneg %p36
      %p251 = pneg %p60
      %p252 = pneg %p57
      %p253 = pneg %p81
      %p254 = pneg %p78
      %p255 = pneg %p102
      %p256 = pneg %p99
      %p257 = pneg %p123
      %p258 = pneg %p120
      %p259 = pneg %p144
      %p260 = pneg %p141
      %p261 = pneg %p165
      %p262 = pneg %p162
      %p263 = pneg %p191
      %p264 = pneg %p188
      %s265 = smul.u32 36, %s18
      %p266 = scmp.lt.s32.totalorder %s265, 71
      %s267 = scalar_select %p266, %s265, 71
      %s268 = smul.addr %s267, 8
      %s269 = scalar_lea.vmem %s7, %s268
      %s270 = smul.u32 448, %s18
      %p271 = scmp.lt.s32.totalorder %s270, 895
      %s272 = scalar_select %p271, %s270, 895
      %s273 = smul.addr %s272, 8
      %s274 = scalar_lea.vmem %s0, %s273
      %s275 = smul.u32 448, %s18
      %s276 = smul.u32 36, %s18
      %p277 = scmp.lt.s32.totalorder %s276, 71
      %s278 = scalar_select %p277, %s276, 71
      %s279 = smul.addr %s278, 8
      %s280 = scalar_lea.vmem %s7, %s279
      %s281 = smul.u32 36, %s18
      loop: start=0, step=1, limit=28
      $region49: #{_lambda_.2} parent=47 // loop_pre_header
        _
      $region50: #{_lambda_.2} parent=47 // loop_header
        %s283 = sphi 0, %s287
        %p284 = scmp.ge.s32.totalorder %s283, 28
      $region51: #{_lambda_.2} parent=47 // loop_header_branch
        %286 = sbr.rel (%p284) target = $region55
      $region52: #{_lambda_.2} parent=47 // loop_body
        %s288 = smul.u32 %s283, 128
        %s289 = scalar_lea.vmem %s274, %s288
        %v290 = vld [vmem:[%s289] sm:$0xff]
        %v291 = vld [vmem:[%s289 + $0x8] sm:$0xff]
        %v292 = vld [vmem:[%s289 + $0x10] sm:$0xff]
        %v293 = vld [vmem:[%s289 + $0x18] sm:$0xff]
        %v294 = vld [vmem:[%s289 + $0x20] sm:$0xff]
        %v295 = vld [vmem:[%s289 + $0x28] sm:$0xff]
        %v296 = vld [vmem:[%s289 + $0x30] sm:$0xff]
        %v297 = vld [vmem:[%s289 + $0x38] sm:$0xff]
        %v298 = vld [vmem:[%s289 + $0x40] sm:$0xff]
        %v299 = vld [vmem:[%s289 + $0x48] sm:$0xff]
        %v300 = vld [vmem:[%s289 + $0x50] sm:$0xff]
        %v301 = vld [vmem:[%s289 + $0x58] sm:$0xff]
        %v302 = vld [vmem:[%s289 + $0x60] sm:$0xff]
        %v303 = vld [vmem:[%s289 + $0x68] sm:$0xff]
        %v304 = vld [vmem:[%s289 + $0x70] sm:$0xff]
        %v305 = vld [vmem:[%s289 + $0x78] sm:$0xff]
        %v306 = vld [vmem:[%s1] sm:$0xff]
        %v307 = vld [vmem:[%s1 + $0x8] sm:$0xff]
        %v308 = vld [vmem:[%s1 + $0x10] sm:$0xff]
        %v309 = vld [vmem:[%s1 + $0x18] sm:$0xff]
        %v310 = vld [vmem:[%s1 + $0x20] sm:$0xff]
        %v311 = vld [vmem:[%s1 + $0x28] sm:$0xff]
        %v312 = vld [vmem:[%s1 + $0x30] sm:$0xff]
        %v313 = vld [vmem:[%s1 + $0x38] sm:$0xff]
        %v314 = vld [vmem:[%s1 + $0x40] sm:$0xff]
        %v315 = vld [vmem:[%s1 + $0x48] sm:$0xff]
        %v316 = vld [vmem:[%s1 + $0x50] sm:$0xff]
        %v317 = vld [vmem:[%s1 + $0x58] sm:$0xff]
        %v318 = vld [vmem:[%s2] sm:$0x7]
        %v320 = vlaneseq
        %v321 = vshrl.u32 %v320, 7
        %v322 = vsub.s32 0, %v321
        %v323 = vrot.slane %v318, %v322
        %v324 = vlaneseq
        %v325 = vshrl.u32 %v324, 7
        %v326 = vsub.s32 1, %v325
        %v327 = vrot.slane %v318, %v326
        %v328 = vlaneseq
        %v329 = vshrl.u32 %v328, 7
        %v330 = vsub.s32 2, %v329
        %v331 = vrot.slane %v318, %v330
        %vm335 = vcmask 261120
        %v337 = vsel %vm335, %v290, 0
        %v340 = vsel %vm335, %v291, 0
        %v343 = vsel %vm335, %v292, 0
        %v346 = vsel %vm335, %v293, 0
        %v349 = vsel %vm335, %v294, 0
        %v352 = vsel %vm335, %v295, 0
        %v355 = vsel %vm335, %v296, 0
        %v358 = vsel %vm335, %v297, 0
        %v361 = vsel %vm335, %v298, 0
        %v364 = vsel %vm335, %v299, 0
        %v367 = vsel %vm335, %v300, 0
        %v370 = vsel %vm335, %v301, 0
        %v373 = vsel %vm335, %v302, 0
        %v376 = vsel %vm335, %v303, 0
        %v379 = vsel %vm335, %v304, 0
        %v382 = vsel %vm335, %v305, 0
        %384 = vmatprep.subr.mxu0 %v307
        %385 = vmatpush1.msra.mxu0 %v306
        %386 = vmatprep.subr.mxu0 %v310
        %387 = vmatpush1.msra.mxu0 %v309
        %388 = vmatprep.subr.mxu0 %v313
        %389 = vmatpush1.msra.mxu0 %v312
        %390 = vmatprep.subr.mxu0 %v316
        %391 = vmatpush1.msra.mxu0 %v315
        %392 = vmatprep.subr.mxu0 0.0
        %393 = vmatpush1.msra.mxu0 0.0
        %394 = vmatprep.subr.mxu0 0.0
        %395 = vmatpush1.msra.mxu0 0.0
        %396 = vmatprep.subr.mxu0 0.0
        %397 = vmatpush1.msra.mxu0 0.0
        %398 = vmatprep.subr.mxu0 0.0
        %399 = vmatpush1.msra.mxu0 0.0
        %400 = vmatprep.subr.mxu0 0.0
        %401 = vmatpush1.msra.mxu0 0.0
        %402 = vmatprep.subr.mxu0 0.0
        %403 = vmatpush1.msra.mxu0 0.0
        %404 = vmatprep.subr.mxu0 0.0
        %405 = vmatpush1.msra.mxu0 0.0
        %406 = vmatprep.subr.mxu0 0.0
        %407 = vmatpush1.msra.mxu0 0.0
        %408 = vmatprep.subr.mxu0 0.0
        %409 = vmatpush1.msra.mxu0 0.0
        %410 = vmatprep.subr.mxu0 0.0
        %411 = vmatpush1.msra.mxu0 0.0
        %412 = vmatprep.subr.mxu0 0.0
        %413 = vmatpush1.msra.mxu0 0.0
        %414 = vmatprep.subr.mxu0 0.0
        %415 = vmatpush1.msra.mxu0 0.0
        %416 = vmatprep.subr.mxu0 0.0
        %417 = vmatpush1.msra.mxu0 0.0
        %418 = vmatprep.subr.mxu0 0.0
        %419 = vmatpush1.msra.mxu0 0.0
        %420 = vmatprep.subr.mxu0 0.0
        %421 = vmatpush1.msra.mxu0 0.0
        %422 = vmatprep.subr.mxu0 0.0
        %423 = vmatpush1.msra.mxu0 0.0
        %424 = vmatprep.subr.mxu0 0.0
        %425 = vmatpush1.msra.mxu0 0.0
        %426 = vmatprep.subr.mxu0 0.0
        %427 = vmatpush1.msra.mxu0 0.0
        %428 = vmatprep.subr.mxu0 0.0
        %429 = vmatpush1.msra.mxu0 0.0
        %430 = vmatprep.subr.mxu0 0.0
        %431 = vmatpush1.msra.mxu0 0.0
        %432 = vmatprep.subr.mxu0 0.0
        %433 = vmatpush1.msra.mxu0 0.0
        %434 = vmatprep.subr.mxu0 0.0
        %435 = vmatpush1.msra.mxu0 0.0
        %436 = vmatprep.subr.mxu0 0.0
        %437 = vmatpush1.msra.mxu0 0.0
        %438 = vmatprep.subr.mxu0 0.0
        %439 = vmatpush1.msra.mxu0 0.0
        %440 = vmatprep.subr.mxu0 0.0
        %441 = vmatpush1.msra.mxu0 0.0
        %442 = vmatprep.subr.mxu0 0.0
        %443 = vmatpush1.msra.mxu0 0.0
        %444 = vmatprep.subr.mxu0 0.0
        %445 = vmatpush1.msra.mxu0 0.0
        %446 = vmatprep.subr.mxu0 0.0
        %447 = vmatpush1.msra.mxu0 0.0
        %448 = vmatprep.mubr.f32.mxu0 0.0
        %449 = vmatmul.mubr.f32.gmra.mrb[0].mxu0 %v337
        %v450 = vpop.f32.mrb[0].mxu0
        %v451 = vadd.f32 %v323, %v450
        %v452 = vpop.f32.mrb[0].mxu0
        %v453 = vadd.f32 %v327, %v452
        %454 = vmatprep.mubr.f32.mxu0 0.0
        %455 = vmatmul.mubr.f32.gmra.mrb[0].mxu0 %v340
        %v456 = vpop.f32.mrb[0].mxu0
        %v457 = vadd.f32 %v323, %v456
        %v458 = vpop.f32.mrb[0].mxu0
        %v459 = vadd.f32 %v327, %v458
        %460 = vmatprep.mubr.f32.mxu0 0.0
        %461 = vmatmul.mubr.f32.gmra.mrb[0].mxu0 %v343
        %v462 = vpop.f32.mrb[0].mxu0
        %v463 = vadd.f32 %v323, %v462
        %v464 = vpop.f32.mrb[0].mxu0
        %v465 = vadd.f32 %v327, %v464
        %466 = vmatprep.mubr.f32.mxu0 0.0
        %467 = vmatmul.mubr.f32.gmra.mrb[0].mxu0 %v346
        %v468 = vpop.f32.mrb[0].mxu0
        %v469 = vadd.f32 %v323, %v468
        %v470 = vpop.f32.mrb[0].mxu0
        %v471 = vadd.f32 %v327, %v470
        %472 = vmatprep.mubr.f32.mxu0 0.0
        %473 = vmatmul.mubr.f32.gmra.mrb[0].mxu0 %v349
        %v474 = vpop.f32.mrb[0].mxu0
        %v475 = vadd.f32 %v323, %v474
        %v476 = vpop.f32.mrb[0].mxu0
        %v477 = vadd.f32 %v327, %v476
        %478 = vmatprep.mubr.f32.mxu0 0.0
        %479 = vmatmul.mubr.f32.gmra.mrb[0].mxu0 %v352
        %v480 = vpop.f32.mrb[0].mxu0
        %v481 = vadd.f32 %v323, %v480
        %v482 = vpop.f32.mrb[0].mxu0
        %v483 = vadd.f32 %v327, %v482
        %484 = vmatprep.mubr.f32.mxu0 0.0
        %485 = vmatmul.mubr.f32.gmra.mrb[0].mxu0 %v355
        %v486 = vpop.f32.mrb[0].mxu0
        %v487 = vadd.f32 %v323, %v486
        %v488 = vpop.f32.mrb[0].mxu0
        %v489 = vadd.f32 %v327, %v488
        %490 = vmatprep.mubr.f32.mxu0 0.0
        %491 = vmatmul.mubr.f32.gmra.mrb[0].mxu0 %v358
        %v492 = vpop.f32.mrb[0].mxu0
        %v493 = vadd.f32 %v323, %v492
        %v494 = vpop.f32.mrb[0].mxu0
        %v495 = vadd.f32 %v327, %v494
        %496 = vmatprep.mubr.f32.mxu0 0.0
        %497 = vmatmul.mubr.f32.gmra.mrb[0].mxu0 %v361
        %v498 = vpop.f32.mrb[0].mxu0
        %v499 = vadd.f32 %v323, %v498
        %v500 = vpop.f32.mrb[0].mxu0
        %v501 = vadd.f32 %v327, %v500
        %502 = vmatprep.mubr.f32.mxu0 0.0
        %503 = vmatmul.mubr.f32.gmra.mrb[0].mxu0 %v364
        %v504 = vpop.f32.mrb[0].mxu0
        %v505 = vadd.f32 %v323, %v504
        %v506 = vpop.f32.mrb[0].mxu0
        %v507 = vadd.f32 %v327, %v506
        %508 = vmatprep.mubr.f32.mxu0 0.0
        %509 = vmatmul.mubr.f32.gmra.mrb[0].mxu0 %v367
        %v510 = vpop.f32.mrb[0].mxu0
        %v511 = vadd.f32 %v323, %v510
        %v512 = vpop.f32.mrb[0].mxu0
        %v513 = vadd.f32 %v327, %v512
        %514 = vmatprep.mubr.f32.mxu0 0.0
        %515 = vmatmul.mubr.f32.gmra.mrb[0].mxu0 %v370
        %v516 = vpop.f32.mrb[0].mxu0
        %v517 = vadd.f32 %v323, %v516
        %v518 = vpop.f32.mrb[0].mxu0
        %v519 = vadd.f32 %v327, %v518
        %520 = vmatprep.mubr.f32.mxu0 0.0
        %521 = vmatmul.mubr.f32.gmra.mrb[0].mxu0 %v373
        %v522 = vpop.f32.mrb[0].mxu0
        %v523 = vadd.f32 %v323, %v522
        %v524 = vpop.f32.mrb[0].mxu0
        %v525 = vadd.f32 %v327, %v524
        %526 = vmatprep.mubr.f32.mxu0 0.0
        %527 = vmatmul.mubr.f32.gmra.mrb[0].mxu0 %v376
        %v528 = vpop.f32.mrb[0].mxu0
        %v529 = vadd.f32 %v323, %v528
        %v530 = vpop.f32.mrb[0].mxu0
        %v531 = vadd.f32 %v327, %v530
        %532 = vmatprep.mubr.f32.mxu0 0.0
        %533 = vmatmul.mubr.f32.gmra.mrb[0].mxu0 %v379
        %v534 = vpop.f32.mrb[0].mxu0
        %v535 = vadd.f32 %v323, %v534
        %v536 = vpop.f32.mrb[0].mxu0
        %v537 = vadd.f32 %v327, %v536
        %538 = vmatprep.mubr.f32.mxu0 0.0
        %539 = vmatmul.mubr.f32.gmra.mrb[0].mxu0 %v382
        %v540 = vpop.f32.mrb[0].mxu0
        %v541 = vadd.f32 %v323, %v540
        %v542 = vpop.f32.mrb[0].mxu0
        %v543 = vadd.f32 %v327, %v542
        %544 = vdwg.mxu0
        %545 = vmatprep.subr.mxu0 0.0
        %546 = vmatpush1.msra.mxu0 %v308
        %547 = vmatprep.subr.mxu0 0.0
        %548 = vmatpush1.msra.mxu0 %v311
        %549 = vmatprep.subr.mxu0 0.0
        %550 = vmatpush1.msra.mxu0 %v314
        %551 = vmatprep.subr.mxu0 0.0
        %552 = vmatpush1.msra.mxu0 %v317
        %553 = vmatprep.subr.mxu0 0.0
        %554 = vmatpush1.msra.mxu0 0.0
        %555 = vmatprep.subr.mxu0 0.0
        %556 = vmatpush1.msra.mxu0 0.0
        %557 = vmatprep.subr.mxu0 0.0
        %558 = vmatpush1.msra.mxu0 0.0
        %559 = vmatprep.subr.mxu0 0.0
        %560 = vmatpush1.msra.mxu0 0.0
        %561 = vmatprep.subr.mxu0 0.0
        %562 = vmatpush1.msra.mxu0 0.0
        %563 = vmatprep.subr.mxu0 0.0
        %564 = vmatpush1.msra.mxu0 0.0
        %565 = vmatprep.subr.mxu0 0.0
        %566 = vmatpush1.msra.mxu0 0.0
        %567 = vmatprep.subr.mxu0 0.0
        %568 = vmatpush1.msra.mxu0 0.0
        %569 = vmatprep.subr.mxu0 0.0
        %570 = vmatpush1.msra.mxu0 0.0
        %571 = vmatprep.subr.mxu0 0.0
        %572 = vmatpush1.msra.mxu0 0.0
        %573 = vmatprep.subr.mxu0 0.0
        %574 = vmatpush1.msra.mxu0 0.0
        %575 = vmatprep.subr.mxu0 0.0
        %576 = vmatpush1.msra.mxu0 0.0
        %577 = vmatprep.subr.mxu0 0.0
        %578 = vmatpush1.msra.mxu0 0.0
        %579 = vmatprep.subr.mxu0 0.0
        %580 = vmatpush1.msra.mxu0 0.0
        %581 = vmatprep.subr.mxu0 0.0
        %582 = vmatpush1.msra.mxu0 0.0
        %583 = vmatprep.subr.mxu0 0.0
        %584 = vmatpush1.msra.mxu0 0.0
        %585 = vmatprep.subr.mxu0 0.0
        %586 = vmatpush1.msra.mxu0 0.0
        %587 = vmatprep.subr.mxu0 0.0
        %588 = vmatpush1.msra.mxu0 0.0
        %589 = vmatprep.subr.mxu0 0.0
        %590 = vmatpush1.msra.mxu0 0.0
        %591 = vmatprep.subr.mxu0 0.0
        %592 = vmatpush1.msra.mxu0 0.0
        %593 = vmatprep.subr.mxu0 0.0
        %594 = vmatpush1.msra.mxu0 0.0
        %595 = vmatprep.subr.mxu0 0.0
        %596 = vmatpush1.msra.mxu0 0.0
        %597 = vmatprep.subr.mxu0 0.0
        %598 = vmatpush1.msra.mxu0 0.0
        %599 = vmatprep.subr.mxu0 0.0
        %600 = vmatpush1.msra.mxu0 0.0
        %601 = vmatprep.subr.mxu0 0.0
        %602 = vmatpush1.msra.mxu0 0.0
        %603 = vmatprep.subr.mxu0 0.0
        %604 = vmatpush1.msra.mxu0 0.0
        %605 = vmatprep.subr.mxu0 0.0
        %606 = vmatpush1.msra.mxu0 0.0
        %607 = vmatprep.subr.mxu0 0.0
        %608 = vmatpush1.msra.mxu0 0.0
        %609 = vmatprep.mubr.f32.mxu0 0.0
        %610 = vmatmul.mubr.f32.gmra.mrb[0].mxu0 %v337
        %v611 = vpop.f32.mrb[0].mxu0
        %v612 = vadd.f32 %v331, %v611
        %v613 = vpop.f32.mrb[0].mxu0
        %614 = vmatprep.mubr.f32.mxu0 0.0
        %615 = vmatmul.mubr.f32.gmra.mrb[0].mxu0 %v340
        %v616 = vpop.f32.mrb[0].mxu0
        %v617 = vadd.f32 %v331, %v616
        %v618 = vpop.f32.mrb[0].mxu0
        %619 = vmatprep.mubr.f32.mxu0 0.0
        %620 = vmatmul.mubr.f32.gmra.mrb[0].mxu0 %v343
        %v621 = vpop.f32.mrb[0].mxu0
        %v622 = vadd.f32 %v331, %v621
        %v623 = vpop.f32.mrb[0].mxu0
        %624 = vmatprep.mubr.f32.mxu0 0.0
        %625 = vmatmul.mubr.f32.gmra.mrb[0].mxu0 %v346
        %v626 = vpop.f32.mrb[0].mxu0
        %v627 = vadd.f32 %v331, %v626
        %v628 = vpop.f32.mrb[0].mxu0
        %629 = vmatprep.mubr.f32.mxu0 0.0
        %630 = vmatmul.mubr.f32.gmra.mrb[0].mxu0 %v349
        %v631 = vpop.f32.mrb[0].mxu0
        %v632 = vadd.f32 %v331, %v631
        %v633 = vpop.f32.mrb[0].mxu0
        %634 = vmatprep.mubr.f32.mxu0 0.0
        %635 = vmatmul.mubr.f32.gmra.mrb[0].mxu0 %v352
        %v636 = vpop.f32.mrb[0].mxu0
        %v637 = vadd.f32 %v331, %v636
        %v638 = vpop.f32.mrb[0].mxu0
        %639 = vmatprep.mubr.f32.mxu0 0.0
        %640 = vmatmul.mubr.f32.gmra.mrb[0].mxu0 %v355
        %v641 = vpop.f32.mrb[0].mxu0
        %v642 = vadd.f32 %v331, %v641
        %v643 = vpop.f32.mrb[0].mxu0
        %644 = vmatprep.mubr.f32.mxu0 0.0
        %645 = vmatmul.mubr.f32.gmra.mrb[0].mxu0 %v358
        %v646 = vpop.f32.mrb[0].mxu0
        %v647 = vadd.f32 %v331, %v646
        %v648 = vpop.f32.mrb[0].mxu0
        %649 = vmatprep.mubr.f32.mxu0 0.0
        %650 = vmatmul.mubr.f32.gmra.mrb[0].mxu0 %v361
        %v651 = vpop.f32.mrb[0].mxu0
        %v652 = vadd.f32 %v331, %v651
        %v653 = vpop.f32.mrb[0].mxu0
        %654 = vmatprep.mubr.f32.mxu0 0.0
        %655 = vmatmul.mubr.f32.gmra.mrb[0].mxu0 %v364
        %v656 = vpop.f32.mrb[0].mxu0
        %v657 = vadd.f32 %v331, %v656
        %v658 = vpop.f32.mrb[0].mxu0
        %659 = vmatprep.mubr.f32.mxu0 0.0
        %660 = vmatmul.mubr.f32.gmra.mrb[0].mxu0 %v367
        %v661 = vpop.f32.mrb[0].mxu0
        %v662 = vadd.f32 %v331, %v661
        %v663 = vpop.f32.mrb[0].mxu0
        %664 = vmatprep.mubr.f32.mxu0 0.0
        %665 = vmatmul.mubr.f32.gmra.mrb[0].mxu0 %v370
        %v666 = vpop.f32.mrb[0].mxu0
        %v667 = vadd.f32 %v331, %v666
        %v668 = vpop.f32.mrb[0].mxu0
        %669 = vmatprep.mubr.f32.mxu0 0.0
        %670 = vmatmul.mubr.f32.gmra.mrb[0].mxu0 %v373
        %v671 = vpop.f32.mrb[0].mxu0
        %v672 = vadd.f32 %v331, %v671
        %v673 = vpop.f32.mrb[0].mxu0
        %674 = vmatprep.mubr.f32.mxu0 0.0
        %675 = vmatmul.mubr.f32.gmra.mrb[0].mxu0 %v376
        %v676 = vpop.f32.mrb[0].mxu0
        %v677 = vadd.f32 %v331, %v676
        %v678 = vpop.f32.mrb[0].mxu0
        %679 = vmatprep.mubr.f32.mxu0 0.0
        %680 = vmatmul.mubr.f32.gmra.mrb[0].mxu0 %v379
        %v681 = vpop.f32.mrb[0].mxu0
        %v682 = vadd.f32 %v331, %v681
        %v683 = vpop.f32.mrb[0].mxu0
        %684 = vmatprep.mubr.f32.mxu0 0.0
        %685 = vmatmul.mubr.f32.gmra.mrb[0].mxu0 %v382
        %v686 = vpop.f32.mrb[0].mxu0
        %v687 = vadd.f32 %v331, %v686
        %v688 = vpop.f32.mrb[0].mxu0
        %689 = vdwg.mxu0
        %v690 = vmax.f32 %v451, 0.0
        %v691 = vmax.f32 %v453, 0.0
        %v692 = vmax.f32 %v612, 0.0
        %v693 = vmax.f32 %v457, 0.0
        %v694 = vmax.f32 %v459, 0.0
        %v695 = vmax.f32 %v617, 0.0
        %v696 = vmax.f32 %v463, 0.0
        %v697 = vmax.f32 %v465, 0.0
        %v698 = vmax.f32 %v622, 0.0
        %v699 = vmax.f32 %v469, 0.0
        %v700 = vmax.f32 %v471, 0.0
        %v701 = vmax.f32 %v627, 0.0
        %v702 = vmax.f32 %v475, 0.0
        %v703 = vmax.f32 %v477, 0.0
        %v704 = vmax.f32 %v632, 0.0
        %v705 = vmax.f32 %v481, 0.0
        %v706 = vmax.f32 %v483, 0.0
        %v707 = vmax.f32 %v637, 0.0
        %v708 = vmax.f32 %v487, 0.0
        %v709 = vmax.f32 %v489, 0.0
        %v710 = vmax.f32 %v642, 0.0
        %v711 = vmax.f32 %v493, 0.0
        %v712 = vmax.f32 %v495, 0.0
        %v713 = vmax.f32 %v647, 0.0
        %v714 = vmax.f32 %v499, 0.0
        %v715 = vmax.f32 %v501, 0.0
        %v716 = vmax.f32 %v652, 0.0
        %v717 = vmax.f32 %v505, 0.0
        %v718 = vmax.f32 %v507, 0.0
        %v719 = vmax.f32 %v657, 0.0
        %v720 = vmax.f32 %v511, 0.0
        %v721 = vmax.f32 %v513, 0.0
        %v722 = vmax.f32 %v662, 0.0
        %v723 = vmax.f32 %v517, 0.0
        %v724 = vmax.f32 %v519, 0.0
        %v725 = vmax.f32 %v667, 0.0
        %v726 = vmax.f32 %v523, 0.0
        %v727 = vmax.f32 %v525, 0.0
        %v728 = vmax.f32 %v672, 0.0
        %v729 = vmax.f32 %v529, 0.0
        %v730 = vmax.f32 %v531, 0.0
        %v731 = vmax.f32 %v677, 0.0
        %v732 = vmax.f32 %v535, 0.0
        %v733 = vmax.f32 %v537, 0.0
        %v734 = vmax.f32 %v682, 0.0
        %v735 = vmax.f32 %v541, 0.0
        %v736 = vmax.f32 %v543, 0.0
        %v737 = vmax.f32 %v687, 0.0
        %v738 = vld [vmem:[%s3] sm:$0xff]
        %v739 = vld [vmem:[%s3 + $0x8] sm:$0xff]
        %v740 = vld [vmem:[%s3 + $0x10] sm:$0xff]
        %v741 = vld [vmem:[%s3 + $0x18] sm:$0xff]
        %v742 = vld [vmem:[%s3 + $0x20] sm:$0xff]
        %v743 = vld [vmem:[%s3 + $0x28] sm:$0xff]
        %v744 = vld [vmem:[%s3 + $0x30] sm:$0xff]
        %v745 = vld [vmem:[%s3 + $0x38] sm:$0xff]
        %v746 = vld [vmem:[%s3 + $0x40] sm:$0xff]
        %v747 = vld [vmem:[%s3 + $0x48] sm:$0xff]
        %v748 = vld [vmem:[%s3 + $0x50] sm:$0xff]
        %v749 = vld [vmem:[%s3 + $0x58] sm:$0xff]
        %v750 = vld [vmem:[%s3 + $0x60] sm:$0xff]
        %v751 = vld [vmem:[%s3 + $0x68] sm:$0xff]
        %v752 = vld [vmem:[%s3 + $0x70] sm:$0xff]
        %v753 = vld [vmem:[%s3 + $0x78] sm:$0xff]
        %v754 = vld [vmem:[%s3 + $0x80] sm:$0xff]
        %v755 = vld [vmem:[%s3 + $0x88] sm:$0xff]
        %v756 = vld [vmem:[%s3 + $0x90] sm:$0xff]
        %v757 = vld [vmem:[%s3 + $0x98] sm:$0xff]
        %v758 = vld [vmem:[%s3 + $0xa0] sm:$0xff]
        %v759 = vld [vmem:[%s3 + $0xa8] sm:$0xff]
        %v760 = vld [vmem:[%s3 + $0xb0] sm:$0xff]
        %v761 = vld [vmem:[%s3 + $0xb8] sm:$0xff]
        %v762 = vld [vmem:[%s3 + $0xc0] sm:$0xff]
        %v763 = vld [vmem:[%s3 + $0xc8] sm:$0xff]
        %v764 = vld [vmem:[%s3 + $0xd0] sm:$0xff]
        %v765 = vld [vmem:[%s3 + $0xd8] sm:$0xff]
        %v766 = vld [vmem:[%s3 + $0xe0] sm:$0xff]
        %v767 = vld [vmem:[%s3 + $0xe8] sm:$0xff]
        %v768 = vld [vmem:[%s3 + $0xf0] sm:$0xff]
        %v769 = vld [vmem:[%s3 + $0xf8] sm:$0xff]
        %v770 = vld [vmem:[%s3 + $0x100] sm:$0xff]
        %v771 = vld [vmem:[%s3 + $0x108] sm:$0xff]
        %v772 = vld [vmem:[%s3 + $0x110] sm:$0xff]
        %v773 = vld [vmem:[%s3 + $0x118] sm:$0xff]
        %v775 = vsel %vm335, %v692, 0
        %v778 = vsel %vm335, %v695, 0
        %v781 = vsel %vm335, %v698, 0
        %v784 = vsel %vm335, %v701, 0
        %v787 = vsel %vm335, %v704, 0
        %v790 = vsel %vm335, %v707, 0
        %v793 = vsel %vm335, %v710, 0
        %v796 = vsel %vm335, %v713, 0
        %v799 = vsel %vm335, %v716, 0
        %v802 = vsel %vm335, %v719, 0
        %v805 = vsel %vm335, %v722, 0
        %v808 = vsel %vm335, %v725, 0
        %v811 = vsel %vm335, %v728, 0
        %v814 = vsel %vm335, %v731, 0
        %v817 = vsel %vm335, %v734, 0
        %v820 = vsel %vm335, %v737, 0
        %822 = vmatprep.subr.mxu0 0.0
        %823 = vmatpush1.msra.mxu0 %v738
        %824 = vmatprep.subr.mxu0 0.0
        %825 = vmatpush1.msra.mxu0 %v739
        %826 = vmatprep.subr.mxu0 0.0
        %827 = vmatpush1.msra.mxu0 %v740
        %828 = vmatprep.subr.mxu0 0.0
        %829 = vmatpush1.msra.mxu0 %v741
        %830 = vmatprep.subr.mxu0 0.0
        %831 = vmatpush1.msra.mxu0 %v742
        %832 = vmatprep.subr.mxu0 0.0
        %833 = vmatpush1.msra.mxu0 %v743
        %834 = vmatprep.subr.mxu0 0.0
        %835 = vmatpush1.msra.mxu0 %v744
        %836 = vmatprep.subr.mxu0 0.0
        %837 = vmatpush1.msra.mxu0 %v745
        %838 = vmatprep.subr.mxu0 0.0
        %839 = vmatpush1.msra.mxu0 %v746
        %840 = vmatprep.subr.mxu0 0.0
        %841 = vmatpush1.msra.mxu0 %v747
        %842 = vmatprep.subr.mxu0 0.0
        %843 = vmatpush1.msra.mxu0 %v748
        %844 = vmatprep.subr.mxu0 0.0
        %845 = vmatpush1.msra.mxu0 %v749
        %846 = vmatprep.subr.mxu0 0.0
        %847 = vmatpush1.msra.mxu0 %v750
        %848 = vmatprep.subr.mxu0 0.0
        %849 = vmatpush1.msra.mxu0 %v751
        %850 = vmatprep.subr.mxu0 0.0
        %851 = vmatpush1.msra.mxu0 %v752
        %852 = vmatprep.subr.mxu0 0.0
        %853 = vmatpush1.msra.mxu0 %v753
        %854 = vmatprep.subr.mxu0 0.0
        %855 = vmatpush1.msra.mxu0 %v754
        %856 = vmatprep.subr.mxu0 0.0
        %857 = vmatpush1.msra.mxu0 %v755
        %858 = vmatprep.subr.mxu0 0.0
        %859 = vmatpush1.msra.mxu0 %v756
        %860 = vmatprep.subr.mxu0 0.0
        %861 = vmatpush1.msra.mxu0 %v757
        %862 = vmatprep.subr.mxu0 0.0
        %863 = vmatpush1.msra.mxu0 %v758
        %864 = vmatprep.subr.mxu0 0.0
        %865 = vmatpush1.msra.mxu0 %v759
        %866 = vmatprep.subr.mxu0 0.0
        %867 = vmatpush1.msra.mxu0 %v760
        %868 = vmatprep.subr.mxu0 0.0
        %869 = vmatpush1.msra.mxu0 %v761
        %870 = vmatprep.subr.mxu0 0.0
        %871 = vmatpush1.msra.mxu0 %v762
        %872 = vmatprep.subr.mxu0 0.0
        %873 = vmatpush1.msra.mxu0 %v763
        %874 = vmatprep.subr.mxu0 0.0
        %875 = vmatpush1.msra.mxu0 %v764
        %876 = vmatprep.subr.mxu0 0.0
        %877 = vmatpush1.msra.mxu0 %v765
        %878 = vmatprep.subr.mxu0 0.0
        %879 = vmatpush1.msra.mxu0 %v766
        %880 = vmatprep.subr.mxu0 0.0
        %881 = vmatpush1.msra.mxu0 %v767
        %882 = vmatprep.subr.mxu0 0.0
        %883 = vmatpush1.msra.mxu0 %v768
        %884 = vmatprep.subr.mxu0 0.0
        %885 = vmatpush1.msra.mxu0 %v769
        %886 = vmatprep.mubr.f32.mxu0 %v691
        %887 = vmatmul.mubr.f32.gmra.mrb[0].mxu0 %v690
        %v888 = vpop.f32.mrb[0].mxu0
        %v889 = vadd.f32 0.0, %v888
        %v890 = vpop.f32.mrb[0].mxu0
        %891 = vmatprep.mubr.f32.mxu0 %v694
        %892 = vmatmul.mubr.f32.gmra.mrb[0].mxu0 %v693
        %v893 = vpop.f32.mrb[0].mxu0
        %v894 = vadd.f32 0.0, %v893
        %v895 = vpop.f32.mrb[0].mxu0
        %896 = vmatprep.mubr.f32.mxu0 %v697
        %897 = vmatmul.mubr.f32.gmra.mrb[0].mxu0 %v696
        %v898 = vpop.f32.mrb[0].mxu0
        %v899 = vadd.f32 0.0, %v898
        %v900 = vpop.f32.mrb[0].mxu0
        %901 = vmatprep.mubr.f32.mxu0 %v700
        %902 = vmatmul.mubr.f32.gmra.mrb[0].mxu0 %v699
        %v903 = vpop.f32.mrb[0].mxu0
        %v904 = vadd.f32 0.0, %v903
        %v905 = vpop.f32.mrb[0].mxu0
        %906 = vmatprep.mubr.f32.mxu0 %v703
        %907 = vmatmul.mubr.f32.gmra.mrb[0].mxu0 %v702
        %v908 = vpop.f32.mrb[0].mxu0
        %v909 = vadd.f32 0.0, %v908
        %v910 = vpop.f32.mrb[0].mxu0
        %911 = vmatprep.mubr.f32.mxu0 %v706
        %912 = vmatmul.mubr.f32.gmra.mrb[0].mxu0 %v705
        %v913 = vpop.f32.mrb[0].mxu0
        %v914 = vadd.f32 0.0, %v913
        %v915 = vpop.f32.mrb[0].mxu0
        %916 = vmatprep.mubr.f32.mxu0 %v709
        %917 = vmatmul.mubr.f32.gmra.mrb[0].mxu0 %v708
        %v918 = vpop.f32.mrb[0].mxu0
        %v919 = vadd.f32 0.0, %v918
        %v920 = vpop.f32.mrb[0].mxu0
        %921 = vmatprep.mubr.f32.mxu0 %v712
        %922 = vmatmul.mubr.f32.gmra.mrb[0].mxu0 %v711
        %v923 = vpop.f32.mrb[0].mxu0
        %v924 = vadd.f32 0.0, %v923
        %v925 = vpop.f32.mrb[0].mxu0
        %926 = vmatprep.mubr.f32.mxu0 %v715
        %927 = vmatmul.mubr.f32.gmra.mrb[0].mxu0 %v714
        %v928 = vpop.f32.mrb[0].mxu0
        %v929 = vadd.f32 0.0, %v928
        %v930 = vpop.f32.mrb[0].mxu0
        %931 = vmatprep.mubr.f32.mxu0 %v718
        %932 = vmatmul.mubr.f32.gmra.mrb[0].mxu0 %v717
        %v933 = vpop.f32.mrb[0].mxu0
        %v934 = vadd.f32 0.0, %v933
        %v935 = vpop.f32.mrb[0].mxu0
        %936 = vmatprep.mubr.f32.mxu0 %v721
        %937 = vmatmul.mubr.f32.gmra.mrb[0].mxu0 %v720
        %v938 = vpop.f32.mrb[0].mxu0
        %v939 = vadd.f32 0.0, %v938
        %v940 = vpop.f32.mrb[0].mxu0
        %941 = vmatprep.mubr.f32.mxu0 %v724
        %942 = vmatmul.mubr.f32.gmra.mrb[0].mxu0 %v723
        %v943 = vpop.f32.mrb[0].mxu0
        %v944 = vadd.f32 0.0, %v943
        %v945 = vpop.f32.mrb[0].mxu0
        %946 = vmatprep.mubr.f32.mxu0 %v727
        %947 = vmatmul.mubr.f32.gmra.mrb[0].mxu0 %v726
        %v948 = vpop.f32.mrb[0].mxu0
        %v949 = vadd.f32 0.0, %v948
        %v950 = vpop.f32.mrb[0].mxu0
        %951 = vmatprep.mubr.f32.mxu0 %v730
        %952 = vmatmul.mubr.f32.gmra.mrb[0].mxu0 %v729
        %v953 = vpop.f32.mrb[0].mxu0
        %v954 = vadd.f32 0.0, %v953
        %v955 = vpop.f32.mrb[0].mxu0
        %956 = vmatprep.mubr.f32.mxu0 %v733
        %957 = vmatmul.mubr.f32.gmra.mrb[0].mxu0 %v732
        %v958 = vpop.f32.mrb[0].mxu0
        %v959 = vadd.f32 0.0, %v958
        %v960 = vpop.f32.mrb[0].mxu0
        %961 = vmatprep.mubr.f32.mxu0 %v736
        %962 = vmatmul.mubr.f32.gmra.mrb[0].mxu0 %v735
        %v963 = vpop.f32.mrb[0].mxu0
        %v964 = vadd.f32 0.0, %v963
        %v965 = vpop.f32.mrb[0].mxu0
        %966 = vdwg.mxu0
        %967 = vmatprep.subr.mxu0 0.0
        %968 = vmatpush1.msra.mxu0 %v770
        %969 = vmatprep.subr.mxu0 0.0
        %970 = vmatpush1.msra.mxu0 %v771
        %971 = vmatprep.subr.mxu0 0.0
        %972 = vmatpush1.msra.mxu0 %v772
        %973 = vmatprep.subr.mxu0 0.0
        %974 = vmatpush1.msra.mxu0 %v773
        %975 = vmatprep.subr.mxu0 0.0
        %976 = vmatpush1.msra.mxu0 0.0
        %977 = vmatprep.subr.mxu0 0.0
        %978 = vmatpush1.msra.mxu0 0.0
        %979 = vmatprep.subr.mxu0 0.0
        %980 = vmatpush1.msra.mxu0 0.0
        %981 = vmatprep.subr.mxu0 0.0
        %982 = vmatpush1.msra.mxu0 0.0
        %983 = vmatprep.subr.mxu0 0.0
        %984 = vmatpush1.msra.mxu0 0.0
        %985 = vmatprep.subr.mxu0 0.0
        %986 = vmatpush1.msra.mxu0 0.0
        %987 = vmatprep.subr.mxu0 0.0
        %988 = vmatpush1.msra.mxu0 0.0
        %989 = vmatprep.subr.mxu0 0.0
        %990 = vmatpush1.msra.mxu0 0.0
        %991 = vmatprep.subr.mxu0 0.0
        %992 = vmatpush1.msra.mxu0 0.0
        %993 = vmatprep.subr.mxu0 0.0
        %994 = vmatpush1.msra.mxu0 0.0
        %995 = vmatprep.subr.mxu0 0.0
        %996 = vmatpush1.msra.mxu0 0.0
        %997 = vmatprep.subr.mxu0 0.0
        %998 = vmatpush1.msra.mxu0 0.0
        %999 = vmatprep.subr.mxu0 0.0
        %1000 = vmatpush1.msra.mxu0 0.0
        %1001 = vmatprep.subr.mxu0 0.0
        %1002 = vmatpush1.msra.mxu0 0.0
        %1003 = vmatprep.subr.mxu0 0.0
        %1004 = vmatpush1.msra.mxu0 0.0
        %1005 = vmatprep.subr.mxu0 0.0
        %1006 = vmatpush1.msra.mxu0 0.0
        %1007 = vmatprep.subr.mxu0 0.0
        %1008 = vmatpush1.msra.mxu0 0.0
        %1009 = vmatprep.subr.mxu0 0.0
        %1010 = vmatpush1.msra.mxu0 0.0
        %1011 = vmatprep.subr.mxu0 0.0
        %1012 = vmatpush1.msra.mxu0 0.0
        %1013 = vmatprep.subr.mxu0 0.0
        %1014 = vmatpush1.msra.mxu0 0.0
        %1015 = vmatprep.subr.mxu0 0.0
        %1016 = vmatpush1.msra.mxu0 0.0
        %1017 = vmatprep.subr.mxu0 0.0
        %1018 = vmatpush1.msra.mxu0 0.0
        %1019 = vmatprep.subr.mxu0 0.0
        %1020 = vmatpush1.msra.mxu0 0.0
        %1021 = vmatprep.subr.mxu0 0.0
        %1022 = vmatpush1.msra.mxu0 0.0
        %1023 = vmatprep.subr.mxu0 0.0
        %1024 = vmatpush1.msra.mxu0 0.0
        %1025 = vmatprep.subr.mxu0 0.0
        %1026 = vmatpush1.msra.mxu0 0.0
        %1027 = vmatprep.subr.mxu0 0.0
        %1028 = vmatpush1.msra.mxu0 0.0
        %1029 = vmatprep.subr.mxu0 0.0
        %1030 = vmatpush1.msra.mxu0 0.0
        %1031 = vmatprep.mubr.f32.mxu0 0.0
        %1032 = vmatmul.mubr.f32.gmra.mrb[0].mxu0 %v775
        %v1033 = vpop.f32.mrb[0].mxu0
        %v1034 = vadd.f32 %v889, %v1033
        %v1035 = vpop.f32.mrb[0].mxu0
        %1036 = vmatprep.mubr.f32.mxu0 0.0
        %1037 = vmatmul.mubr.f32.gmra.mrb[0].mxu0 %v778
        %v1038 = vpop.f32.mrb[0].mxu0
        %v1039 = vadd.f32 %v894, %v1038
        %v1040 = vpop.f32.mrb[0].mxu0
        %1041 = vmatprep.mubr.f32.mxu0 0.0
        %1042 = vmatmul.mubr.f32.gmra.mrb[0].mxu0 %v781
        %v1043 = vpop.f32.mrb[0].mxu0
        %v1044 = vadd.f32 %v899, %v1043
        %v1045 = vpop.f32.mrb[0].mxu0
        %1046 = vmatprep.mubr.f32.mxu0 0.0
        %1047 = vmatmul.mubr.f32.gmra.mrb[0].mxu0 %v784
        %v1048 = vpop.f32.mrb[0].mxu0
        %v1049 = vadd.f32 %v904, %v1048
        %v1050 = vpop.f32.mrb[0].mxu0
        %1051 = vmatprep.mubr.f32.mxu0 0.0
        %1052 = vmatmul.mubr.f32.gmra.mrb[0].mxu0 %v787
        %v1053 = vpop.f32.mrb[0].mxu0
        %v1054 = vadd.f32 %v909, %v1053
        %v1055 = vpop.f32.mrb[0].mxu0
        %1056 = vmatprep.mubr.f32.mxu0 0.0
        %1057 = vmatmul.mubr.f32.gmra.mrb[0].mxu0 %v790
        %v1058 = vpop.f32.mrb[0].mxu0
        %v1059 = vadd.f32 %v914, %v1058
        %v1060 = vpop.f32.mrb[0].mxu0
        %1061 = vmatprep.mubr.f32.mxu0 0.0
        %1062 = vmatmul.mubr.f32.gmra.mrb[0].mxu0 %v793
        %v1063 = vpop.f32.mrb[0].mxu0
        %v1064 = vadd.f32 %v919, %v1063
        %v1065 = vpop.f32.mrb[0].mxu0
        %1066 = vmatprep.mubr.f32.mxu0 0.0
        %1067 = vmatmul.mubr.f32.gmra.mrb[0].mxu0 %v796
        %v1068 = vpop.f32.mrb[0].mxu0
        %v1069 = vadd.f32 %v924, %v1068
        %v1070 = vpop.f32.mrb[0].mxu0
        %1071 = vmatprep.mubr.f32.mxu0 0.0
        %1072 = vmatmul.mubr.f32.gmra.mrb[0].mxu0 %v799
        %v1073 = vpop.f32.mrb[0].mxu0
        %v1074 = vadd.f32 %v929, %v1073
        %v1075 = vpop.f32.mrb[0].mxu0
        %1076 = vmatprep.mubr.f32.mxu0 0.0
        %1077 = vmatmul.mubr.f32.gmra.mrb[0].mxu0 %v802
        %v1078 = vpop.f32.mrb[0].mxu0
        %v1079 = vadd.f32 %v934, %v1078
        %v1080 = vpop.f32.mrb[0].mxu0
        %1081 = vmatprep.mubr.f32.mxu0 0.0
        %1082 = vmatmul.mubr.f32.gmra.mrb[0].mxu0 %v805
        %v1083 = vpop.f32.mrb[0].mxu0
        %v1084 = vadd.f32 %v939, %v1083
        %v1085 = vpop.f32.mrb[0].mxu0
        %1086 = vmatprep.mubr.f32.mxu0 0.0
        %1087 = vmatmul.mubr.f32.gmra.mrb[0].mxu0 %v808
        %v1088 = vpop.f32.mrb[0].mxu0
        %v1089 = vadd.f32 %v944, %v1088
        %v1090 = vpop.f32.mrb[0].mxu0
        %1091 = vmatprep.mubr.f32.mxu0 0.0
        %1092 = vmatmul.mubr.f32.gmra.mrb[0].mxu0 %v811
        %v1093 = vpop.f32.mrb[0].mxu0
        %v1094 = vadd.f32 %v949, %v1093
        %v1095 = vpop.f32.mrb[0].mxu0
        %1096 = vmatprep.mubr.f32.mxu0 0.0
        %1097 = vmatmul.mubr.f32.gmra.mrb[0].mxu0 %v814
        %v1098 = vpop.f32.mrb[0].mxu0
        %v1099 = vadd.f32 %v954, %v1098
        %v1100 = vpop.f32.mrb[0].mxu0
        %1101 = vmatprep.mubr.f32.mxu0 0.0
        %1102 = vmatmul.mubr.f32.gmra.mrb[0].mxu0 %v817
        %v1103 = vpop.f32.mrb[0].mxu0
        %v1104 = vadd.f32 %v959, %v1103
        %v1105 = vpop.f32.mrb[0].mxu0
        %1106 = vmatprep.mubr.f32.mxu0 0.0
        %1107 = vmatmul.mubr.f32.gmra.mrb[0].mxu0 %v820
        %v1108 = vpop.f32.mrb[0].mxu0
        %v1109 = vadd.f32 %v964, %v1108
        %v1110 = vpop.f32.mrb[0].mxu0
        %1111 = vdwg.mxu0
        %s1112 = scalar_lea.vmem [#allocation2], %s288
        %vm1113 = vcmask 523264
        %1114 = vst.msk [vmem:[%s1112] sm:$0xff] %vm1113, %v1034
        %1115 = vst.msk [vmem:[%s1112 + $0x8] sm:$0xff] %vm1113, %v1039
        %1116 = vst.msk [vmem:[%s1112 + $0x10] sm:$0xff] %vm1113, %v1044
        %1117 = vst.msk [vmem:[%s1112 + $0x18] sm:$0xff] %vm1113, %v1049
        %1118 = vst.msk [vmem:[%s1112 + $0x20] sm:$0xff] %vm1113, %v1054
        %1119 = vst.msk [vmem:[%s1112 + $0x28] sm:$0xff] %vm1113, %v1059
        %1120 = vst.msk [vmem:[%s1112 + $0x30] sm:$0xff] %vm1113, %v1064
        %1121 = vst.msk [vmem:[%s1112 + $0x38] sm:$0xff] %vm1113, %v1069
        %1122 = vst.msk [vmem:[%s1112 + $0x40] sm:$0xff] %vm1113, %v1074
        %1123 = vst.msk [vmem:[%s1112 + $0x48] sm:$0xff] %vm1113, %v1079
        %1124 = vst.msk [vmem:[%s1112 + $0x50] sm:$0xff] %vm1113, %v1084
        %1125 = vst.msk [vmem:[%s1112 + $0x58] sm:$0xff] %vm1113, %v1089
        %1126 = vst.msk [vmem:[%s1112 + $0x60] sm:$0xff] %vm1113, %v1094
        %1127 = vst.msk [vmem:[%s1112 + $0x68] sm:$0xff] %vm1113, %v1099
        %1128 = vst.msk [vmem:[%s1112 + $0x70] sm:$0xff] %vm1113, %v1104
        %1129 = vst.msk [vmem:[%s1112 + $0x78] sm:$0xff] %vm1113, %v1109
      $region53: #{_lambda_.2} parent=47 // loop_footer
        %s287 = sadd.s32 1, %s283
      $region54: #{_lambda_.2} parent=47 // loop_footer_branch
        %282 = sbr.rel target = $region50
      $region55: #{_lambda_.2} parent=47 // loop_exit
        _
      loop: start=0, step=1, limit=4
      $region56: #{_lambda_.2} parent=47 // loop_pre_header
        _
      $region57: #{_lambda_.2} parent=47 // loop_header
        %s1131 = sphi 0, %s1135
        %p1132 = scmp.ge.s32.totalorder %s1131, 4
      $region58: #{_lambda_.2} parent=47 // loop_header_branch
        %1134 = sbr.rel (%p1132) target = $region62
      $region59: #{_lambda_.2} parent=47 // loop_body
        %s1136 = smul.u32 %s1131, 896
        loop: start=0, step=1, limit=12
        $region63: #{_lambda_.2} parent=59 // loop_pre_header
          _
        $region64: #{_lambda_.2} parent=59 // loop_header
          %s1138 = sphi 0, %s1142
          %p1139 = scmp.ge.s32.totalorder %s1138, 12
        $region65: #{_lambda_.2} parent=59 // loop_header_branch
          %1141 = sbr.rel (%p1139) target = $region69
        $region66: #{_lambda_.2} parent=59 // loop_body
          %s1143 = smul.u32 %s1138, 64
          %s1144 = sadd.s32 %s1136, %s1143
          %s1145 = scalar_lea.vmem [#allocation2], %s1144
          %v1146 = vld [vmem:[%s1145] sm:$0xff]
          %v1147 = vld [vmem:[%s1145 + $0x8] sm:$0xff]
          %v1148 = vld [vmem:[%s1145 + $0x10] sm:$0xff]
          %v1149 = vld [vmem:[%s1145 + $0x18] sm:$0xff]
          %s1150 = sadd.s32 %s1144, 1
          %s1151 = scalar_lea.vmem [#allocation2], %s1150
          %v1152 = vld [vmem:[%s1151] sm:$0xff]
          %v1153 = vld [vmem:[%s1151 + $0x8] sm:$0xff]
          %v1154 = vld [vmem:[%s1151 + $0x10] sm:$0xff]
          %v1155 = vld [vmem:[%s1151 + $0x18] sm:$0xff]
          %s1156 = sadd.s32 %s1144, 32
          %s1157 = scalar_lea.vmem [#allocation2], %s1156
          %v1158 = vld [vmem:[%s1157] sm:$0xff]
          %v1159 = vld [vmem:[%s1157 + $0x8] sm:$0xff]
          %v1160 = vld [vmem:[%s1157 + $0x10] sm:$0xff]
          %v1161 = vld [vmem:[%s1157 + $0x18] sm:$0xff]
          %s1162 = sadd.s32 %s1144, 33
          %s1163 = scalar_lea.vmem [#allocation2], %s1162
          %v1164 = vld [vmem:[%s1163] sm:$0xff]
          %v1165 = vld [vmem:[%s1163 + $0x8] sm:$0xff]
          %v1166 = vld [vmem:[%s1163 + $0x10] sm:$0xff]
          %v1167 = vld [vmem:[%s1163 + $0x18] sm:$0xff]
          %s1168 = smul.u32 %s1138, 32
          %v1169 = vmax.f32 %v1146, %v1152
          %v1170 = vmax.f32 %v1147, %v1153
          %v1171 = vmax.f32 %v1148, %v1154
          %v1172 = vmax.f32 %v1149, %v1155
          %v1173 = vmax.f32 %v1158, %v1164
          %v1174 = vmax.f32 %v1159, %v1165
          %v1175 = vmax.f32 %v1160, %v1166
          %v1176 = vmax.f32 %v1161, %v1167
          %v1177 = vmax.f32 %v1169, %v1173
          %v1178 = vmax.f32 %v1170, %v1174
          %v1179 = vmax.f32 %v1171, %v1175
          %v1180 = vmax.f32 %v1172, %v1176
          %s1181 = scalar_lea.vmem [#allocation3], %s1168
          %vm1182 = vcmask 523264
          %1183 = vst.msk [vmem:[%s1181] sm:$0xff] %vm1182, %v1177
          %1184 = vst.msk [vmem:[%s1181 + $0x8] sm:$0xff] %vm1182, %v1178
          %1185 = vst.msk [vmem:[%s1181 + $0x10] sm:$0xff] %vm1182, %v1179
          %1186 = vst.msk [vmem:[%s1181 + $0x18] sm:$0xff] %vm1182, %v1180
        $region67: #{_lambda_.2} parent=59 // loop_footer
          %s1142 = sadd.s32 1, %s1138
        $region68: #{_lambda_.2} parent=59 // loop_footer_branch
          %1137 = sbr.rel target = $region64
        $region69: #{_lambda_.2} parent=59 // loop_exit
          _
        %v1187 = vld [vmem:[#allocation3] sm:$0xff]
        %v1188 = vld [vmem:[#allocation3 + $0x8] sm:$0xff]
        %v1189 = vld [vmem:[#allocation3 + $0x10] sm:$0xff]
        %v1190 = vld [vmem:[#allocation3 + $0x18] sm:$0xff]
        %v1191 = vld [vmem:[#allocation3 + $0x20] sm:$0xff]
        %v1192 = vld [vmem:[#allocation3 + $0x28] sm:$0xff]
        %v1193 = vld [vmem:[#allocation3 + $0x30] sm:$0xff]
        %v1194 = vld [vmem:[#allocation3 + $0x38] sm:$0xff]
        %v1195 = vld [vmem:[#allocation3 + $0x40] sm:$0xff]
        %v1196 = vld [vmem:[#allocation3 + $0x48] sm:$0xff]
        %v1197 = vld [vmem:[#allocation3 + $0x50] sm:$0xff]
        %v1198 = vld [vmem:[#allocation3 + $0x58] sm:$0xff]
        %v1199 = vld [vmem:[#allocation3 + $0x60] sm:$0xff]
        %v1200 = vld [vmem:[#allocation3 + $0x68] sm:$0xff]
        %v1201 = vld [vmem:[#allocation3 + $0x70] sm:$0xff]
        %v1202 = vld [vmem:[#allocation3 + $0x78] sm:$0xff]
        %v1203 = vld [vmem:[#allocation3 + $0x80] sm:$0xff]
        %v1204 = vld [vmem:[#allocation3 + $0x88] sm:$0xff]
        %v1205 = vld [vmem:[#allocation3 + $0x90] sm:$0xff]
        %v1206 = vld [vmem:[#allocation3 + $0x98] sm:$0xff]
        %v1207 = vld [vmem:[#allocation3 + $0xa0] sm:$0xff]
        %v1208 = vld [vmem:[#allocation3 + $0xa8] sm:$0xff]
        %v1209 = vld [vmem:[#allocation3 + $0xb0] sm:$0xff]
        %v1210 = vld [vmem:[#allocation3 + $0xb8] sm:$0xff]
        %v1211 = vld [vmem:[#allocation3 + $0xc0] sm:$0xff]
        %v1212 = vld [vmem:[#allocation3 + $0xc8] sm:$0xff]
        %v1213 = vld [vmem:[#allocation3 + $0xd0] sm:$0xff]
        %v1214 = vld [vmem:[#allocation3 + $0xd8] sm:$0xff]
        %v1215 = vld [vmem:[#allocation3 + $0xe0] sm:$0xff]
        %v1216 = vld [vmem:[#allocation3 + $0xe8] sm:$0xff]
        %v1217 = vld [vmem:[#allocation3 + $0xf0] sm:$0xff]
        %v1218 = vld [vmem:[#allocation3 + $0xf8] sm:$0xff]
        %v1219 = vld [vmem:[#allocation3 + $0x100] sm:$0xff]
        %v1220 = vld [vmem:[#allocation3 + $0x108] sm:$0xff]
        %v1221 = vld [vmem:[#allocation3 + $0x110] sm:$0xff]
        %v1222 = vld [vmem:[#allocation3 + $0x118] sm:$0xff]
        %v1223 = vld [vmem:[#allocation3 + $0x120] sm:$0xff]
        %v1224 = vld [vmem:[#allocation3 + $0x128] sm:$0xff]
        %v1225 = vld [vmem:[#allocation3 + $0x130] sm:$0xff]
        %v1226 = vld [vmem:[#allocation3 + $0x138] sm:$0xff]
        %v1227 = vld [vmem:[#allocation3 + $0x140] sm:$0xff]
        %v1228 = vld [vmem:[#allocation3 + $0x148] sm:$0xff]
        %v1229 = vld [vmem:[#allocation3 + $0x150] sm:$0xff]
        %v1230 = vld [vmem:[#allocation3 + $0x158] sm:$0xff]
        %v1231 = vld [vmem:[#allocation3 + $0x160] sm:$0xff]
        %v1232 = vld [vmem:[#allocation3 + $0x168] sm:$0xff]
        %v1233 = vld [vmem:[#allocation3 + $0x170] sm:$0xff]
        %v1234 = vld [vmem:[#allocation3 + $0x178] sm:$0xff]
        %v1235 = vld [vmem:[%s5] sm:$0xff]
        %v1236 = vld [vmem:[%s5 + $0x8] sm:$0xff]
        %v1237 = vld [vmem:[%s5 + $0x10] sm:$0xff]
        %v1238 = vld [vmem:[%s5 + $0x18] sm:$0xff]
        %v1239 = vld [vmem:[%s5 + $0x20] sm:$0xff]
        %v1240 = vld [vmem:[%s5 + $0x28] sm:$0xff]
        %v1241 = vld [vmem:[%s5 + $0x30] sm:$0xff]
        %v1242 = vld [vmem:[%s5 + $0x38] sm:$0xff]
        %v1243 = vld [vmem:[%s5 + $0x40] sm:$0xff]
        %v1244 = vld [vmem:[%s5 + $0x48] sm:$0xff]
        %v1245 = vld [vmem:[%s5 + $0x50] sm:$0xff]
        %v1246 = vld [vmem:[%s5 + $0x58] sm:$0xff]
        %v1247 = vld [vmem:[%s5 + $0x60] sm:$0xff]
        %v1248 = vld [vmem:[%s5 + $0x68] sm:$0xff]
        %v1249 = vld [vmem:[%s5 + $0x70] sm:$0xff]
        %v1250 = vld [vmem:[%s5 + $0x78] sm:$0xff]
        %v1251 = vld [vmem:[%s5 + $0x80] sm:$0xff]
        %v1252 = vld [vmem:[%s5 + $0x88] sm:$0xff]
        %v1253 = vld [vmem:[%s5 + $0x90] sm:$0xff]
        %v1254 = vld [vmem:[%s5 + $0x98] sm:$0xff]
        %v1255 = vld [vmem:[%s5 + $0xa0] sm:$0xff]
        %v1256 = vld [vmem:[%s5 + $0xa8] sm:$0xff]
        %v1257 = vld [vmem:[%s5 + $0xb0] sm:$0xff]
        %v1258 = vld [vmem:[%s5 + $0xb8] sm:$0xff]
        %v1259 = vld [vmem:[%s5 + $0xc0] sm:$0xff]
        %v1260 = vld [vmem:[%s5 + $0xc8] sm:$0xff]
        %v1261 = vld [vmem:[%s5 + $0xd0] sm:$0xff]
        %1262 = vmatprep.subr.mxu0 0.0
        %1263 = vmatpush1.msra.mxu0 %v1187
        %1264 = vmatprep.subr.mxu0 0.0
        %1265 = vmatpush1.msra.mxu0 %v1188
        %1266 = vmatprep.subr.mxu0 0.0
        %1267 = vmatpush1.msra.mxu0 %v1189
        %1268 = vmatprep.subr.mxu0 0.0
        %1269 = vmatpush1.msra.mxu0 %v1190
        %1270 = vmatprep.subr.mxu0 0.0
        %1271 = vmatpush1.msra.mxu0 %v1191
        %1272 = vmatprep.subr.mxu0 0.0
        %1273 = vmatpush1.msra.mxu0 %v1192
        %1274 = vmatprep.subr.mxu0 0.0
        %1275 = vmatpush1.msra.mxu0 %v1193
        %1276 = vmatprep.subr.mxu0 0.0
        %1277 = vmatpush1.msra.mxu0 %v1194
        %1278 = vmatprep.subr.mxu0 0.0
        %1279 = vmatpush1.msra.mxu0 %v1195
        %1280 = vmatprep.subr.mxu0 0.0
        %1281 = vmatpush1.msra.mxu0 %v1196
        %1282 = vmatprep.subr.mxu0 0.0
        %1283 = vmatpush1.msra.mxu0 %v1197
        %1284 = vmatprep.subr.mxu0 0.0
        %1285 = vmatpush1.msra.mxu0 %v1198
        %1286 = vmatprep.subr.mxu0 0.0
        %1287 = vmatpush1.msra.mxu0 %v1199
        %1288 = vmatprep.subr.mxu0 0.0
        %1289 = vmatpush1.msra.mxu0 %v1200
        %1290 = vmatprep.subr.mxu0 0.0
        %1291 = vmatpush1.msra.mxu0 %v1201
        %1292 = vmatprep.subr.mxu0 0.0
        %1293 = vmatpush1.msra.mxu0 %v1202
        %1294 = vmatprep.subr.mxu0 0.0
        %1295 = vmatpush1.msra.mxu0 %v1203
        %1296 = vmatprep.subr.mxu0 0.0
        %1297 = vmatpush1.msra.mxu0 %v1204
        %1298 = vmatprep.subr.mxu0 0.0
        %1299 = vmatpush1.msra.mxu0 %v1205
        %1300 = vmatprep.subr.mxu0 0.0
        %1301 = vmatpush1.msra.mxu0 %v1206
        %1302 = vmatprep.subr.mxu0 0.0
        %1303 = vmatpush1.msra.mxu0 %v1207
        %1304 = vmatprep.subr.mxu0 0.0
        %1305 = vmatpush1.msra.mxu0 %v1208
        %1306 = vmatprep.subr.mxu0 0.0
        %1307 = vmatpush1.msra.mxu0 %v1209
        %1308 = vmatprep.subr.mxu0 0.0
        %1309 = vmatpush1.msra.mxu0 %v1210
        %1310 = vmatprep.subr.mxu0 0.0
        %1311 = vmatpush1.msra.mxu0 %v1211
        %1312 = vmatprep.subr.mxu0 0.0
        %1313 = vmatpush1.msra.mxu0 %v1212
        %1314 = vmatprep.subr.mxu0 0.0
        %1315 = vmatpush1.msra.mxu0 %v1213
        %1316 = vmatprep.subr.mxu0 0.0
        %1317 = vmatpush1.msra.mxu0 %v1214
        %1318 = vmatprep.subr.mxu0 0.0
        %1319 = vmatpush1.msra.mxu0 %v1215
        %1320 = vmatprep.subr.mxu0 0.0
        %1321 = vmatpush1.msra.mxu0 %v1216
        %1322 = vmatprep.subr.mxu0 0.0
        %1323 = vmatpush1.msra.mxu0 %v1217
        %1324 = vmatprep.subr.mxu0 0.0
        %1325 = vmatpush1.msra.mxu0 %v1218
        %1326 = vmatprep.mubr.f32.mxu0 %v1236
        %1327 = vmatmul.mubr.f32.gmra.mrb[0].mxu0 %v1235
        %v1328 = vpop.f32.mrb[0].mxu0
        %v1329 = vadd.f32 0.0, %v1328
        %v1330 = vpop.f32.mrb[0].mxu0
        %1331 = vmatprep.mubr.f32.mxu0 %v1239
        %1332 = vmatmul.mubr.f32.gmra.mrb[0].mxu0 %v1238
        %v1333 = vpop.f32.mrb[0].mxu0
        %v1334 = vadd.f32 0.0, %v1333
        %v1335 = vpop.f32.mrb[0].mxu0
        %1336 = vmatprep.mubr.f32.mxu0 %v1242
        %1337 = vmatmul.mubr.f32.gmra.mrb[0].mxu0 %v1241
        %v1338 = vpop.f32.mrb[0].mxu0
        %v1339 = vadd.f32 0.0, %v1338
        %v1340 = vpop.f32.mrb[0].mxu0
        %1341 = vmatprep.mubr.f32.mxu0 %v1245
        %1342 = vmatmul.mubr.f32.gmra.mrb[0].mxu0 %v1244
        %v1343 = vpop.f32.mrb[0].mxu0
        %v1344 = vadd.f32 0.0, %v1343
        %v1345 = vpop.f32.mrb[0].mxu0
        %1346 = vmatprep.mubr.f32.mxu0 %v1248
        %1347 = vmatmul.mubr.f32.gmra.mrb[0].mxu0 %v1247
        %v1348 = vpop.f32.mrb[0].mxu0
        %v1349 = vadd.f32 0.0, %v1348
        %v1350 = vpop.f32.mrb[0].mxu0
        %1351 = vmatprep.mubr.f32.mxu0 %v1251
        %1352 = vmatmul.mubr.f32.gmra.mrb[0].mxu0 %v1250
        %v1353 = vpop.f32.mrb[0].mxu0
        %v1354 = vadd.f32 0.0, %v1353
        %v1355 = vpop.f32.mrb[0].mxu0
        %1356 = vmatprep.mubr.f32.mxu0 %v1254
        %1357 = vmatmul.mubr.f32.gmra.mrb[0].mxu0 %v1253
        %v1358 = vpop.f32.mrb[0].mxu0
        %v1359 = vadd.f32 0.0, %v1358
        %v1360 = vpop.f32.mrb[0].mxu0
        %1361 = vmatprep.mubr.f32.mxu0 %v1257
        %1362 = vmatmul.mubr.f32.gmra.mrb[0].mxu0 %v1256
        %v1363 = vpop.f32.mrb[0].mxu0
        %v1364 = vadd.f32 0.0, %v1363
        %v1365 = vpop.f32.mrb[0].mxu0
        %1366 = vmatprep.mubr.f32.mxu0 %v1260
        %1367 = vmatmul.mubr.f32.gmra.mrb[0].mxu0 %v1259
        %v1368 = vpop.f32.mrb[0].mxu0
        %v1369 = vadd.f32 0.0, %v1368
        %v1370 = vpop.f32.mrb[0].mxu0
        %1371 = vdwg.mxu0
        %1372 = vmatprep.subr.mxu0 0.0
        %1373 = vmatpush1.msra.mxu0 %v1219
        %1374 = vmatprep.subr.mxu0 0.0
        %1375 = vmatpush1.msra.mxu0 %v1220
        %1376 = vmatprep.subr.mxu0 0.0
        %1377 = vmatpush1.msra.mxu0 %v1221
        %1378 = vmatprep.subr.mxu0 0.0
        %1379 = vmatpush1.msra.mxu0 %v1222
        %1380 = vmatprep.subr.mxu0 0.0
        %1381 = vmatpush1.msra.mxu0 %v1223
        %1382 = vmatprep.subr.mxu0 0.0
        %1383 = vmatpush1.msra.mxu0 %v1224
        %1384 = vmatprep.subr.mxu0 0.0
        %1385 = vmatpush1.msra.mxu0 %v1225
        %1386 = vmatprep.subr.mxu0 0.0
        %1387 = vmatpush1.msra.mxu0 %v1226
        %1388 = vmatprep.subr.mxu0 0.0
        %1389 = vmatpush1.msra.mxu0 %v1227
        %1390 = vmatprep.subr.mxu0 0.0
        %1391 = vmatpush1.msra.mxu0 %v1228
        %1392 = vmatprep.subr.mxu0 0.0
        %1393 = vmatpush1.msra.mxu0 %v1229
        %1394 = vmatprep.subr.mxu0 0.0
        %1395 = vmatpush1.msra.mxu0 %v1230
        %1396 = vmatprep.subr.mxu0 0.0
        %1397 = vmatpush1.msra.mxu0 %v1231
        %1398 = vmatprep.subr.mxu0 0.0
        %1399 = vmatpush1.msra.mxu0 %v1232
        %1400 = vmatprep.subr.mxu0 0.0
        %1401 = vmatpush1.msra.mxu0 %v1233
        %1402 = vmatprep.subr.mxu0 0.0
        %1403 = vmatpush1.msra.mxu0 %v1234
        %1404 = vmatprep.subr.mxu0 0.0
        %1405 = vmatpush1.msra.mxu0 0.0
        %1406 = vmatprep.subr.mxu0 0.0
        %1407 = vmatpush1.msra.mxu0 0.0
        %1408 = vmatprep.subr.mxu0 0.0
        %1409 = vmatpush1.msra.mxu0 0.0
        %1410 = vmatprep.subr.mxu0 0.0
        %1411 = vmatpush1.msra.mxu0 0.0
        %1412 = vmatprep.subr.mxu0 0.0
        %1413 = vmatpush1.msra.mxu0 0.0
        %1414 = vmatprep.subr.mxu0 0.0
        %1415 = vmatpush1.msra.mxu0 0.0
        %1416 = vmatprep.subr.mxu0 0.0
        %1417 = vmatpush1.msra.mxu0 0.0
        %1418 = vmatprep.subr.mxu0 0.0
        %1419 = vmatpush1.msra.mxu0 0.0
        %1420 = vmatprep.subr.mxu0 0.0
        %1421 = vmatpush1.msra.mxu0 0.0
        %1422 = vmatprep.subr.mxu0 0.0
        %1423 = vmatpush1.msra.mxu0 0.0
        %1424 = vmatprep.subr.mxu0 0.0
        %1425 = vmatpush1.msra.mxu0 0.0
        %1426 = vmatprep.subr.mxu0 0.0
        %1427 = vmatpush1.msra.mxu0 0.0
        %1428 = vmatprep.subr.mxu0 0.0
        %1429 = vmatpush1.msra.mxu0 0.0
        %1430 = vmatprep.subr.mxu0 0.0
        %1431 = vmatpush1.msra.mxu0 0.0
        %1432 = vmatprep.subr.mxu0 0.0
        %1433 = vmatpush1.msra.mxu0 0.0
        %1434 = vmatprep.subr.mxu0 0.0
        %1435 = vmatpush1.msra.mxu0 0.0
        %1436 = vmatprep.mubr.f32.mxu0 0.0
        %1437 = vmatmul.mubr.f32.gmra.mrb[0].mxu0 %v1237
        %v1438 = vpop.f32.mrb[0].mxu0
        %v1439 = vadd.f32 %v1329, %v1438
        %v1440 = vpop.f32.mrb[0].mxu0
        %1441 = vmatprep.mubr.f32.mxu0 0.0
        %1442 = vmatmul.mubr.f32.gmra.mrb[0].mxu0 %v1240
        %v1443 = vpop.f32.mrb[0].mxu0
        %v1444 = vadd.f32 %v1334, %v1443
        %v1445 = vpop.f32.mrb[0].mxu0
        %1446 = vmatprep.mubr.f32.mxu0 0.0
        %1447 = vmatmul.mubr.f32.gmra.mrb[0].mxu0 %v1243
        %v1448 = vpop.f32.mrb[0].mxu0
        %v1449 = vadd.f32 %v1339, %v1448
        %v1450 = vpop.f32.mrb[0].mxu0
        %1451 = vmatprep.mubr.f32.mxu0 0.0
        %1452 = vmatmul.mubr.f32.gmra.mrb[0].mxu0 %v1246
        %v1453 = vpop.f32.mrb[0].mxu0
        %v1454 = vadd.f32 %v1344, %v1453
        %v1455 = vpop.f32.mrb[0].mxu0
        %1456 = vmatprep.mubr.f32.mxu0 0.0
        %1457 = vmatmul.mubr.f32.gmra.mrb[0].mxu0 %v1249
        %v1458 = vpop.f32.mrb[0].mxu0
        %v1459 = vadd.f32 %v1349, %v1458
        %v1460 = vpop.f32.mrb[0].mxu0
        %1461 = vmatprep.mubr.f32.mxu0 0.0
        %1462 = vmatmul.mubr.f32.gmra.mrb[0].mxu0 %v1252
        %v1463 = vpop.f32.mrb[0].mxu0
        %v1464 = vadd.f32 %v1354, %v1463
        %v1465 = vpop.f32.mrb[0].mxu0
        %1466 = vmatprep.mubr.f32.mxu0 0.0
        %1467 = vmatmul.mubr.f32.gmra.mrb[0].mxu0 %v1255
        %v1468 = vpop.f32.mrb[0].mxu0
        %v1469 = vadd.f32 %v1359, %v1468
        %v1470 = vpop.f32.mrb[0].mxu0
        %1471 = vmatprep.mubr.f32.mxu0 0.0
        %1472 = vmatmul.mubr.f32.gmra.mrb[0].mxu0 %v1258
        %v1473 = vpop.f32.mrb[0].mxu0
        %v1474 = vadd.f32 %v1364, %v1473
        %v1475 = vpop.f32.mrb[0].mxu0
        %1476 = vmatprep.mubr.f32.mxu0 0.0
        %1477 = vmatmul.mubr.f32.gmra.mrb[0].mxu0 %v1261
        %v1478 = vpop.f32.mrb[0].mxu0
        %v1479 = vadd.f32 %v1369, %v1478
        %v1480 = vpop.f32.mrb[0].mxu0
        %1481 = vdwg.mxu0
        %v1482 = vld [vmem:[%s6] sm:$0xff]
        %v1483 = vld [vmem:[%s6 + $0x8] sm:$0xff]
        %v1484 = vld [vmem:[%s6 + $0x10] sm:$0xff]
        %v1485 = vld [vmem:[%s6 + $0x18] sm:$0xff]
        %v1486 = vld [vmem:[%s6 + $0x20] sm:$0xff]
        %v1487 = vld [vmem:[%s6 + $0x28] sm:$0xff]
        %v1488 = vld [vmem:[%s6 + $0x30] sm:$0xff]
        %v1489 = vld [vmem:[%s6 + $0x38] sm:$0xff]
        %v1490 = vld [vmem:[%s6 + $0x40] sm:$0xff]
        %v1491 = vld [vmem:[%s6 + $0x48] sm:$0xff]
        %v1492 = vld [vmem:[%s6 + $0x50] sm:$0xff]
        %v1493 = vld [vmem:[%s6 + $0x58] sm:$0xff]
        %v1494 = vld [vmem:[%s6 + $0x60] sm:$0xff]
        %v1495 = vld [vmem:[%s6 + $0x68] sm:$0xff]
        %v1496 = vld [vmem:[%s6 + $0x70] sm:$0xff]
        %v1497 = vld [vmem:[%s6 + $0x78] sm:$0xff]
        %v1498 = vld [vmem:[%s6 + $0x80] sm:$0xff]
        %v1499 = vld [vmem:[%s6 + $0x88] sm:$0xff]
        %v1500 = vld [vmem:[%s6 + $0x90] sm:$0xff]
        %v1501 = vld [vmem:[%s6 + $0x98] sm:$0xff]
        %v1502 = vld [vmem:[%s6 + $0xa0] sm:$0xff]
        %v1503 = vld [vmem:[%s6 + $0xa8] sm:$0xff]
        %v1504 = vld [vmem:[%s6 + $0xb0] sm:$0xff]
        %v1505 = vld [vmem:[%s6 + $0xb8] sm:$0xff]
        %v1506 = vld [vmem:[%s6 + $0xc0] sm:$0xff]
        %v1507 = vld [vmem:[%s6 + $0xc8] sm:$0xff]
        %v1508 = vld [vmem:[%s6 + $0xd0] sm:$0xff]
        %1509 = vmatprep.subr.mxu0 0.0
        %1510 = vmatpush1.msra.mxu0 %v1187
        %1511 = vmatprep.subr.mxu0 0.0
        %1512 = vmatpush1.msra.mxu0 %v1188
        %1513 = vmatprep.subr.mxu0 0.0
        %1514 = vmatpush1.msra.mxu0 %v1189
        %1515 = vmatprep.subr.mxu0 0.0
        %1516 = vmatpush1.msra.mxu0 %v1190
        %1517 = vmatprep.subr.mxu0 0.0
        %1518 = vmatpush1.msra.mxu0 %v1191
        %1519 = vmatprep.subr.mxu0 0.0
        %1520 = vmatpush1.msra.mxu0 %v1192
        %1521 = vmatprep.subr.mxu0 0.0
        %1522 = vmatpush1.msra.mxu0 %v1193
        %1523 = vmatprep.subr.mxu0 0.0
        %1524 = vmatpush1.msra.mxu0 %v1194
        %1525 = vmatprep.subr.mxu0 0.0
        %1526 = vmatpush1.msra.mxu0 %v1195
        %1527 = vmatprep.subr.mxu0 0.0
        %1528 = vmatpush1.msra.mxu0 %v1196
        %1529 = vmatprep.subr.mxu0 0.0
        %1530 = vmatpush1.msra.mxu0 %v1197
        %1531 = vmatprep.subr.mxu0 0.0
        %1532 = vmatpush1.msra.mxu0 %v1198
        %1533 = vmatprep.subr.mxu0 0.0
        %1534 = vmatpush1.msra.mxu0 %v1199
        %1535 = vmatprep.subr.mxu0 0.0
        %1536 = vmatpush1.msra.mxu0 %v1200
        %1537 = vmatprep.subr.mxu0 0.0
        %1538 = vmatpush1.msra.mxu0 %v1201
        %1539 = vmatprep.subr.mxu0 0.0
        %1540 = vmatpush1.msra.mxu0 %v1202
        %1541 = vmatprep.subr.mxu0 0.0
        %1542 = vmatpush1.msra.mxu0 %v1203
        %1543 = vmatprep.subr.mxu0 0.0
        %1544 = vmatpush1.msra.mxu0 %v1204
        %1545 = vmatprep.subr.mxu0 0.0
        %1546 = vmatpush1.msra.mxu0 %v1205
        %1547 = vmatprep.subr.mxu0 0.0
        %1548 = vmatpush1.msra.mxu0 %v1206
        %1549 = vmatprep.subr.mxu0 0.0
        %1550 = vmatpush1.msra.mxu0 %v1207
        %1551 = vmatprep.subr.mxu0 0.0
        %1552 = vmatpush1.msra.mxu0 %v1208
        %1553 = vmatprep.subr.mxu0 0.0
        %1554 = vmatpush1.msra.mxu0 %v1209
        %1555 = vmatprep.subr.mxu0 0.0
        %1556 = vmatpush1.msra.mxu0 %v1210
        %1557 = vmatprep.subr.mxu0 0.0
        %1558 = vmatpush1.msra.mxu0 %v1211
        %1559 = vmatprep.subr.mxu0 0.0
        %1560 = vmatpush1.msra.mxu0 %v1212
        %1561 = vmatprep.subr.mxu0 0.0
        %1562 = vmatpush1.msra.mxu0 %v1213
        %1563 = vmatprep.subr.mxu0 0.0
        %1564 = vmatpush1.msra.mxu0 %v1214
        %1565 = vmatprep.subr.mxu0 0.0
        %1566 = vmatpush1.msra.mxu0 %v1215
        %1567 = vmatprep.subr.mxu0 0.0
        %1568 = vmatpush1.msra.mxu0 %v1216
        %1569 = vmatprep.subr.mxu0 0.0
        %1570 = vmatpush1.msra.mxu0 %v1217
        %1571 = vmatprep.subr.mxu0 0.0
        %1572 = vmatpush1.msra.mxu0 %v1218
        %1573 = vmatprep.mubr.f32.mxu0 %v1483
        %1574 = vmatmul.mubr.f32.gmra.mrb[0].mxu0 %v1482
        %v1575 = vpop.f32.mrb[0].mxu0
        %v1576 = vadd.f32 0.0, %v1575
        %v1577 = vpop.f32.mrb[0].mxu0
        %1578 = vmatprep.mubr.f32.mxu0 %v1486
        %1579 = vmatmul.mubr.f32.gmra.mrb[0].mxu0 %v1485
        %v1580 = vpop.f32.mrb[0].mxu0
        %v1581 = vadd.f32 0.0, %v1580
        %v1582 = vpop.f32.mrb[0].mxu0
        %1583 = vmatprep.mubr.f32.mxu0 %v1489
        %1584 = vmatmul.mubr.f32.gmra.mrb[0].mxu0 %v1488
        %v1585 = vpop.f32.mrb[0].mxu0
        %v1586 = vadd.f32 0.0, %v1585
        %v1587 = vpop.f32.mrb[0].mxu0
        %1588 = vmatprep.mubr.f32.mxu0 %v1492
        %1589 = vmatmul.mubr.f32.gmra.mrb[0].mxu0 %v1491
        %v1590 = vpop.f32.mrb[0].mxu0
        %v1591 = vadd.f32 0.0, %v1590
        %v1592 = vpop.f32.mrb[0].mxu0
        %1593 = vmatprep.mubr.f32.mxu0 %v1495
        %1594 = vmatmul.mubr.f32.gmra.mrb[0].mxu0 %v1494
        %v1595 = vpop.f32.mrb[0].mxu0
        %v1596 = vadd.f32 0.0, %v1595
        %v1597 = vpop.f32.mrb[0].mxu0
        %1598 = vmatprep.mubr.f32.mxu0 %v1498
        %1599 = vmatmul.mubr.f32.gmra.mrb[0].mxu0 %v1497
        %v1600 = vpop.f32.mrb[0].mxu0
        %v1601 = vadd.f32 0.0, %v1600
        %v1602 = vpop.f32.mrb[0].mxu0
        %1603 = vmatprep.mubr.f32.mxu0 %v1501
        %1604 = vmatmul.mubr.f32.gmra.mrb[0].mxu0 %v1500
        %v1605 = vpop.f32.mrb[0].mxu0
        %v1606 = vadd.f32 0.0, %v1605
        %v1607 = vpop.f32.mrb[0].mxu0
        %1608 = vmatprep.mubr.f32.mxu0 %v1504
        %1609 = vmatmul.mubr.f32.gmra.mrb[0].mxu0 %v1503
        %v1610 = vpop.f32.mrb[0].mxu0
        %v1611 = vadd.f32 0.0, %v1610
        %v1612 = vpop.f32.mrb[0].mxu0
        %1613 = vmatprep.mubr.f32.mxu0 %v1507
        %1614 = vmatmul.mubr.f32.gmra.mrb[0].mxu0 %v1506
        %v1615 = vpop.f32.mrb[0].mxu0
        %v1616 = vadd.f32 0.0, %v1615
        %v1617 = vpop.f32.mrb[0].mxu0
        %1618 = vdwg.mxu0
        %1619 = vmatprep.subr.mxu0 0.0
        %1620 = vmatpush1.msra.mxu0 %v1219
        %1621 = vmatprep.subr.mxu0 0.0
        %1622 = vmatpush1.msra.mxu0 %v1220
        %1623 = vmatprep.subr.mxu0 0.0
        %1624 = vmatpush1.msra.mxu0 %v1221
        %1625 = vmatprep.subr.mxu0 0.0
        %1626 = vmatpush1.msra.mxu0 %v1222
        %1627 = vmatprep.subr.mxu0 0.0
        %1628 = vmatpush1.msra.mxu0 %v1223
        %1629 = vmatprep.subr.mxu0 0.0
        %1630 = vmatpush1.msra.mxu0 %v1224
        %1631 = vmatprep.subr.mxu0 0.0
        %1632 = vmatpush1.msra.mxu0 %v1225
        %1633 = vmatprep.subr.mxu0 0.0
        %1634 = vmatpush1.msra.mxu0 %v1226
        %1635 = vmatprep.subr.mxu0 0.0
        %1636 = vmatpush1.msra.mxu0 %v1227
        %1637 = vmatprep.subr.mxu0 0.0
        %1638 = vmatpush1.msra.mxu0 %v1228
        %1639 = vmatprep.subr.mxu0 0.0
        %1640 = vmatpush1.msra.mxu0 %v1229
        %1641 = vmatprep.subr.mxu0 0.0
        %1642 = vmatpush1.msra.mxu0 %v1230
        %1643 = vmatprep.subr.mxu0 0.0
        %1644 = vmatpush1.msra.mxu0 %v1231
        %1645 = vmatprep.subr.mxu0 0.0
        %1646 = vmatpush1.msra.mxu0 %v1232
        %1647 = vmatprep.subr.mxu0 0.0
        %1648 = vmatpush1.msra.mxu0 %v1233
        %1649 = vmatprep.subr.mxu0 0.0
        %1650 = vmatpush1.msra.mxu0 %v1234
        %1651 = vmatprep.subr.mxu0 0.0
        %1652 = vmatpush1.msra.mxu0 0.0
        %1653 = vmatprep.subr.mxu0 0.0
        %1654 = vmatpush1.msra.mxu0 0.0
        %1655 = vmatprep.subr.mxu0 0.0
        %1656 = vmatpush1.msra.mxu0 0.0
        %1657 = vmatprep.subr.mxu0 0.0
        %1658 = vmatpush1.msra.mxu0 0.0
        %1659 = vmatprep.subr.mxu0 0.0
        %1660 = vmatpush1.msra.mxu0 0.0
        %1661 = vmatprep.subr.mxu0 0.0
        %1662 = vmatpush1.msra.mxu0 0.0
        %1663 = vmatprep.subr.mxu0 0.0
        %1664 = vmatpush1.msra.mxu0 0.0
        %1665 = vmatprep.subr.mxu0 0.0
        %1666 = vmatpush1.msra.mxu0 0.0
        %1667 = vmatprep.subr.mxu0 0.0
        %1668 = vmatpush1.msra.mxu0 0.0
        %1669 = vmatprep.subr.mxu0 0.0
        %1670 = vmatpush1.msra.mxu0 0.0
        %1671 = vmatprep.subr.mxu0 0.0
        %1672 = vmatpush1.msra.mxu0 0.0
        %1673 = vmatprep.subr.mxu0 0.0
        %1674 = vmatpush1.msra.mxu0 0.0
        %1675 = vmatprep.subr.mxu0 0.0
        %1676 = vmatpush1.msra.mxu0 0.0
        %1677 = vmatprep.subr.mxu0 0.0
        %1678 = vmatpush1.msra.mxu0 0.0
        %1679 = vmatprep.subr.mxu0 0.0
        %1680 = vmatpush1.msra.mxu0 0.0
        %1681 = vmatprep.subr.mxu0 0.0
        %1682 = vmatpush1.msra.mxu0 0.0
        %1683 = vmatprep.mubr.f32.mxu0 0.0
        %1684 = vmatmul.mubr.f32.gmra.mrb[0].mxu0 %v1484
        %v1685 = vpop.f32.mrb[0].mxu0
        %v1686 = vadd.f32 %v1576, %v1685
        %v1687 = vpop.f32.mrb[0].mxu0
        %1688 = vmatprep.mubr.f32.mxu0 0.0
        %1689 = vmatmul.mubr.f32.gmra.mrb[0].mxu0 %v1487
        %v1690 = vpop.f32.mrb[0].mxu0
        %v1691 = vadd.f32 %v1581, %v1690
        %v1692 = vpop.f32.mrb[0].mxu0
        %1693 = vmatprep.mubr.f32.mxu0 0.0
        %1694 = vmatmul.mubr.f32.gmra.mrb[0].mxu0 %v1490
        %v1695 = vpop.f32.mrb[0].mxu0
        %v1696 = vadd.f32 %v1586, %v1695
        %v1697 = vpop.f32.mrb[0].mxu0
        %1698 = vmatprep.mubr.f32.mxu0 0.0
        %1699 = vmatmul.mubr.f32.gmra.mrb[0].mxu0 %v1493
        %v1700 = vpop.f32.mrb[0].mxu0
        %v1701 = vadd.f32 %v1591, %v1700
        %v1702 = vpop.f32.mrb[0].mxu0
        %1703 = vmatprep.mubr.f32.mxu0 0.0
        %1704 = vmatmul.mubr.f32.gmra.mrb[0].mxu0 %v1496
        %v1705 = vpop.f32.mrb[0].mxu0
        %v1706 = vadd.f32 %v1596, %v1705
        %v1707 = vpop.f32.mrb[0].mxu0
        %1708 = vmatprep.mubr.f32.mxu0 0.0
        %1709 = vmatmul.mubr.f32.gmra.mrb[0].mxu0 %v1499
        %v1710 = vpop.f32.mrb[0].mxu0
        %v1711 = vadd.f32 %v1601, %v1710
        %v1712 = vpop.f32.mrb[0].mxu0
        %1713 = vmatprep.mubr.f32.mxu0 0.0
        %1714 = vmatmul.mubr.f32.gmra.mrb[0].mxu0 %v1502
        %v1715 = vpop.f32.mrb[0].mxu0
        %v1716 = vadd.f32 %v1606, %v1715
        %v1717 = vpop.f32.mrb[0].mxu0
        %1718 = vmatprep.mubr.f32.mxu0 0.0
        %1719 = vmatmul.mubr.f32.gmra.mrb[0].mxu0 %v1505
        %v1720 = vpop.f32.mrb[0].mxu0
        %v1721 = vadd.f32 %v1611, %v1720
        %v1722 = vpop.f32.mrb[0].mxu0
        %1723 = vmatprep.mubr.f32.mxu0 0.0
        %1724 = vmatmul.mubr.f32.gmra.mrb[0].mxu0 %v1508
        %v1725 = vpop.f32.mrb[0].mxu0
        %v1726 = vadd.f32 %v1616, %v1725
        %v1727 = vpop.f32.mrb[0].mxu0
        %1728 = vdwg.mxu0
        %1738 = vrot.lane.b32.xlu0 %v1686, 64
        %v1739 = vpop.permute.xlu0 %1738
        %1740 = vrot.lane.b32.xlu0 %v1691, 64
        %v1741 = vpop.permute.xlu0 %1740
        %1742 = vrot.lane.b32.xlu0 %v1696, 64
        %v1743 = vpop.permute.xlu0 %1742
        %1744 = vrot.lane.b32.xlu0 %v1701, 64
        %v1745 = vpop.permute.xlu0 %1744
        %1746 = vrot.lane.b32.xlu0 %v1706, 64
        %v1747 = vpop.permute.xlu0 %1746
        %1748 = vrot.lane.b32.xlu0 %v1711, 64
        %v1749 = vpop.permute.xlu0 %1748
        %1750 = vrot.lane.b32.xlu0 %v1716, 64
        %v1751 = vpop.permute.xlu0 %1750
        %1752 = vrot.lane.b32.xlu0 %v1721, 64
        %v1753 = vpop.permute.xlu0 %1752
        %1754 = vrot.lane.b32.xlu0 %v1726, 64
        %v1755 = vpop.permute.xlu0 %1754
        %vm1765 = vcmask 523264
        %v1766 = vsel %vm1765, %v1439, %v1739
        %v1767 = vsel %vm1765, %v1444, %v1741
        %v1768 = vsel %vm1765, %v1449, %v1743
        %v1769 = vsel %vm1765, %v1454, %v1745
        %v1770 = vsel %vm1765, %v1459, %v1747
        %v1771 = vsel %vm1765, %v1464, %v1749
        %v1772 = vsel %vm1765, %v1469, %v1751
        %v1773 = vsel %vm1765, %v1474, %v1753
        %v1774 = vsel %vm1765, %v1479, %v1755
        %s1775 = smul.u32 %s1131, 72
        %v1776 = vld [vmem:[%s4] sm:$0x1]
        %v1778 = vlaneseq
        %v1779 = vshrl.u32 %v1778, 7
        %v1780 = vsub.s32 0, %v1779
        %v1781 = vrot.slane %v1776, %v1780
        %v1783 = vadd.f32 %v1766, %v1781
        %v1784 = vadd.f32 %v1767, %v1781
        %v1785 = vadd.f32 %v1768, %v1781
        %v1786 = vadd.f32 %v1769, %v1781
        %v1787 = vadd.f32 %v1770, %v1781
        %v1788 = vadd.f32 %v1771, %v1781
        %v1789 = vadd.f32 %v1772, %v1781
        %v1790 = vadd.f32 %v1773, %v1781
        %v1791 = vadd.f32 %v1774, %v1781
        %v1792 = vmax.f32 %v1783, 0.0
        %v1793 = vmax.f32 %v1784, 0.0
        %v1794 = vmax.f32 %v1785, 0.0
        %v1795 = vmax.f32 %v1786, 0.0
        %v1796 = vmax.f32 %v1787, 0.0
        %v1797 = vmax.f32 %v1788, 0.0
        %v1798 = vmax.f32 %v1789, 0.0
        %v1799 = vmax.f32 %v1790, 0.0
        %v1800 = vmax.f32 %v1791, 0.0
        %s1801 = scalar_lea.vmem %s280, %s1775
        %1802 = vst [vmem:[%s1801] sm:$0xff] %v1792
        %1803 = vst [vmem:[%s1801 + $0x8] sm:$0xff] %v1793
        %1804 = vst [vmem:[%s1801 + $0x10] sm:$0xff] %v1794
        %1805 = vst [vmem:[%s1801 + $0x18] sm:$0xff] %v1795
        %1806 = vst [vmem:[%s1801 + $0x20] sm:$0xff] %v1796
        %1807 = vst [vmem:[%s1801 + $0x28] sm:$0xff] %v1797
        %1808 = vst [vmem:[%s1801 + $0x30] sm:$0xff] %v1798
        %1809 = vst [vmem:[%s1801 + $0x38] sm:$0xff] %v1799
        %1810 = vst [vmem:[%s1801 + $0x40] sm:$0xff] %v1800
      $region60: #{_lambda_.2} parent=47 // loop_footer
        %s1135 = sadd.s32 1, %s1131
      $region61: #{_lambda_.2} parent=47 // loop_footer_branch
        %1130 = sbr.rel target = $region57
      $region62: #{_lambda_.2} parent=47 // loop_exit
        _
      %s1811 = smul.u32 36, %s18
      %p1812 = scmp.lt.s32.totalorder %s1811, 71
      %s1813 = scalar_select %p1812, %s1811, 71
      %s1814 = smul.addr %s1813, 8
      %s1815 = scalar_lea.vmem %s7, %s1814
      // Predicated region
      $region70: #{_lambda_.2} parent=47 // pred_check
        %p1816 = pneg %p188
      $region71: #{_lambda_.2} parent=47 // pred_check_branch
        %1818 = sbr.rel (%p1816) target = $region73
      $region72: #{_lambda_.2} parent=47 // pred_region
        %s1819 = smul.u32 36, %s18
      $region73: #{_lambda_.2} parent=47 // pred_fallthru
        _
    $region48: #{_lambda_.2} parent=5 // pred_fallthru
      _
    %p1820 = scmp.le.s32.totalorder 2, %s13
    // Predicated region
    $region74: #{_lambda_.2} parent=5 // pred_check
      %p1821 = pneg %p1820
    $region75: #{_lambda_.2} parent=5 // pred_check_branch
      %1823 = sbr.rel (%p1821) target = $region77
    $region76: #{_lambda_.2} parent=5 // pred_region
      %s1824 = ssub.s32 %s13, 2
      // Predicated region
      $region78: #{_lambda_.2} parent=76 // pred_check
        %p1825 = pneg %p194
      $region79: #{_lambda_.2} parent=76 // pred_check_branch
        %1827 = sbr.rel (%p1825) target = $region81
      $region80: #{_lambda_.2} parent=76 // pred_region
        %s1828 = smul.u32 36, %s19
        %p1829 = scmp.lt.s32.totalorder %s1828, 71
        %s1830 = scalar_select %p1829, %s1828, 71
        %s1831 = smul.addr %s1830, 8
        %s1832 = scalar_lea.vmem %s7, %s1831
      $region81: #{_lambda_.2} parent=76 // pred_fallthru
        _
    $region77: #{_lambda_.2} parent=5 // pred_fallthru
      _
  $region6: #{_lambda_.2} parent=0 // loop_footer
    %s17 = sadd.s32 1, %s13
  $region7: #{_lambda_.2} parent=0 // loop_footer_branch
    %12 = sbr.rel target = $region3
  $region8: #{_lambda_.2} parent=0 // loop_exit
    _

</llo_original>
